<compile_context>
chip_gen: v6e
topology: v6e:2x2x1
jax: 0.10.0
libtpu: 0.0.40
codegen_flags: <defaults>
</compile_context>

<pallas_src>
import jax
import jax.numpy as jnp
from jax.experimental import pallas as pl
from jax.experimental.pallas import tpu as pltpu

EPS = 1e-5
LANE = 128
VMEM_BUDGET = 8 * 1024 * 1024    # approx per-tile working-set budget (bytes)
VMEM_LIMIT = 32 * 1024 * 1024    # explicit scoped-VMEM limit (safe on v5e/v6e/v7x)


def _round_up(x, m):
    return (x + m - 1) // m * m


def _pick_h_tile(H, W, Cin, Cout_pad):
    """Largest divisor of H whose tile working set fits the VMEM budget."""
    bytes_per_row = 4 * (2 * (W + 2) * Cin      # input tile, double buffered
                         + 2 * W * Cout_pad     # output tile, double buffered
                         + 9 * W * Cin          # im2col transient
                         + W * Cout_pad)        # f32 matmul result
    for d in range(H, 0, -1):
        if H % d == 0 and d * bytes_per_row <= VMEM_BUDGET:
            return d
    return 1


# --------------------------- Pallas kernels ---------------------------------

def _conv_bias_stats_kernel(xw_ref, w_ref, b_ref, y_ref, stat_ref):
    """One (batch, H-tile) step: 3x3 conv as a single im2col MXU matmul + bias.

    xw_ref  : (1, 1, Ht+2, W+2, Cin)  haloed, zero-padded input tile (NHWC)
    w_ref   : (9*Cin, Cout_pad)       weights, rows ordered (dy, dx, cin)
    b_ref   : (1, Cout_pad)           conv bias (zero-padded)
    y_ref   : (1, 1, Ht*W, Cout_pad)  pre-BN activations (conv + bias)
    stat_ref: (1, 1, 2, Cout_pad)     per-tile [channel sum, channel sum-of-squares]
    """
    _, _, Hpt, Wp, Cin = xw_ref.shape
    Ht, W = Hpt - 2, Wp - 2

    x = xw_ref[0, 0]                                    # (Ht+2, W+2, Cin)

    # im2col: K = 9*Cin so the MXU sees one deep contraction per tile
    # instead of 9 shallow K=Cin matmuls.
    cols = []
    for dy in range(3):
        for dx in range(3):
            cols.append(x[dy:dy + Ht, dx:dx + W, :].reshape(Ht * W, Cin))
    patch = jnp.concatenate(cols, axis=-1)              # (Ht*W, 9*Cin)

    acc = jnp.dot(patch, w_ref[...],
                  preferred_element_type=jnp.float32)   # (Ht*W, Cout_pad)
    acc = acc + b_ref[...]

    y_ref[0, 0] = acc                                   # lane-dense store (Cout_pad % 128 == 0)

    s = jnp.sum(acc, axis=0, keepdims=True)             # (1, Cout_pad)
    sq = jnp.sum(acc * acc, axis=0, keepdims=True)      # (1, Cout_pad)
    stat_ref[0, 0] = jnp.concatenate([s, sq], axis=0)   # (2, Cout_pad)


def _bn_relu_kernel(y_ref, scale_ref, shift_ref, o_ref):
    """Folded BatchNorm + ReLU: o = max(y * scale + shift, 0)."""
    o_ref[0] = jnp.maximum(y_ref[0] * scale_ref[...] + shift_ref[...], 0.0)


# --------------------------- layer wrapper ----------------------------------

def conv_bn_relu(x_nhwc, w_hwio, b, gamma, beta):
    """Conv3x3(pad=1) + BatchNorm2d(train) + ReLU.

    x_nhwc: (N, H, W, Cin) f32; Cin may already be lane-padded (extra channels zero).
    Returns (N, H, W, Cout_pad) f32 with Cout zero-padded to a multiple of 128.
    """
    N, H, W, Cin = x_nhwc.shape
    kH, kW, Cin_w, Cout = w_hwio.shape
    assert (kH, kW) == (3, 3) and Cin_w <= Cin
    Cout_pad = _round_up(Cout, LANE)

    # Weights: pad input channels to match x, flatten taps into K, pad Cout to lanes.
    w = jnp.pad(w_hwio, ((0, 0), (0, 0), (0, Cin - Cin_w), (0, Cout_pad - Cout)))
    w_mat = w.reshape(9 * Cin, Cout_pad)
    b_p = jnp.pad(b, (0, Cout_pad - Cout)).reshape(1, Cout_pad)
    g_p = jnp.pad(gamma, (0, Cout_pad - Cout))
    be_p = jnp.pad(beta, (0, Cout_pad - Cout))

    Ht = _pick_h_tile(H, W, Cin, Cout_pad)
    nt = H // Ht
    rows = Ht * W

    # conv padding=1: pad once, bake the 2-row halo into per-tile windows so
    # plain Blocked BlockSpecs (with automatic double-buffering) can be used.
    xpad = jnp.pad(x_nhwc, ((0, 0), (1, 1), (1, 1), (0, 0)))
    xw = jnp.stack([xpad[:, t * Ht: t * Ht + Ht + 2] for t in range(nt)], axis=1)
    # xw: (N, nt, Ht+2, W+2, Cin)

    # ---- pass 1: tiled conv + bias, per-tile channel statistics -------------
    y_pre, stats = pl.pallas_call(
        _conv_bias_stats_kernel,
        out_shape=(
            jax.ShapeDtypeStruct((N, nt, rows, Cout_pad), jnp.float32),
            jax.ShapeDtypeStruct((N, nt, 2, Cout_pad), jnp.float32),
        ),
        grid=(N, nt),
        in_specs=[
            pl.BlockSpec((1, 1, Ht + 2, W + 2, Cin), lambda n, t: (n, t, 0, 0, 0)),
            pl.BlockSpec((9 * Cin, Cout_pad), lambda n, t: (0, 0)),
            pl.BlockSpec((1, Cout_pad), lambda n, t: (0, 0)),
        ],
        out_specs=(
            pl.BlockSpec((1, 1, rows, Cout_pad), lambda n, t: (n, t, 0, 0)),
            pl.BlockSpec((1, 1, 2, Cout_pad), lambda n, t: (n, t, 0, 0)),
        ),
        compiler_params=pltpu.CompilerParams(
            dimension_semantics=("parallel", "parallel"),
            vmem_limit_bytes=VMEM_LIMIT),
    )(xw, w_mat, b_p)

    # ---- tiny JAX glue: batch stats -> folded per-channel scale / shift -----
    count = jnp.float32(N * H * W)
    tot = jnp.sum(stats, axis=(0, 1))                   # (2, Cout_pad)
    mean = tot[0] / count
    var = jnp.maximum(tot[1] / count - mean * mean, 0.0)  # biased variance
    scale = g_p * jax.lax.rsqrt(var + EPS)
    shift = be_p - mean * scale

    # ---- pass 2: lane-dense normalize + ReLU --------------------------------
    y2 = y_pre.reshape(N * nt, rows, Cout_pad)
    out = pl.pallas_call(
        _bn_relu_kernel,
        out_shape=jax.ShapeDtypeStruct((N * nt, rows, Cout_pad), jnp.float32),
        grid=(N * nt,),
        in_specs=[
            pl.BlockSpec((1, rows, Cout_pad), lambda i: (i, 0, 0)),
            pl.BlockSpec((1, Cout_pad), lambda i: (0, 0)),
            pl.BlockSpec((1, Cout_pad), lambda i: (0, 0)),
        ],
        out_specs=pl.BlockSpec((1, rows, Cout_pad), lambda i: (i, 0, 0)),
        compiler_params=pltpu.CompilerParams(
            dimension_semantics=("parallel",),
            vmem_limit_bytes=VMEM_LIMIT),
    )(y2, scale.reshape(1, Cout_pad), shift.reshape(1, Cout_pad))

    return out.reshape(N, H, W, Cout_pad)


# --------------------------- module-level API --------------------------------

def init_double_conv_params(key, in_channels, out_channels):
    """Deterministic parameter init matching DoubleConv shapes."""
    ks = jax.random.split(key, 4)
    # PyTorch Conv2d weight layout (Cout, Cin, 3, 3) -> HWIO (3, 3, Cin, Cout)
    w1_oihw = 0.1 * jax.random.normal(ks[0], (out_channels, in_channels, 3, 3),
                                      jnp.float32)
    w2_oihw = 0.1 * jax.random.normal(ks[1], (out_channels, out_channels, 3, 3),
                                      jnp.float32)
    return {
        "w1": jnp.transpose(w1_oihw, (2, 3, 1, 0)),
        "b1": 0.05 * jax.random.normal(ks[2], (out_channels,), jnp.float32),
        "g1": jnp.ones((out_channels,), jnp.float32),
        "be1": jnp.zeros((out_channels,), jnp.float32),
        "w2": jnp.transpose(w2_oihw, (2, 3, 1, 0)),
        "b2": 0.05 * jax.random.normal(ks[3], (out_channels,), jnp.float32),
        "g2": jnp.ones((out_channels,), jnp.float32),
        "be2": jnp.zeros((out_channels,), jnp.float32),
    }


def double_conv(x_nchw, params):
    """DoubleConv forward. x_nchw: (N, Cin, H, W) -> (N, Cout, H, W)."""
    Cout = params["w1"].shape[-1]
    x = jnp.transpose(x_nchw, (0, 2, 3, 1))  # NCHW -> NHWC
    y = conv_bn_relu(x, params["w1"], params["b1"], params["g1"], params["be1"])
    y = conv_bn_relu(y, params["w2"], params["b2"], params["g2"], params["be2"])
    y = y[..., :Cout]                         # drop lane padding
    return jnp.transpose(y, (0, 3, 1, 2))     # NHWC -> NCHW


# ---- pure-JAX reference for a sanity check (not the hot path) ---------------

def _ref_conv_bn_relu(x_nhwc, w_hwio, b, gamma, beta):
    y = jax.lax.conv_general_dilated(
        x_nhwc, w_hwio, window_strides=(1, 1), padding=((1, 1), (1, 1)),
        dimension_numbers=("NHWC", "HWIO", "NHWC"))
    y = y + b.reshape(1, 1, 1, -1)
    mean = jnp.mean(y, axis=(0, 1, 2), keepdims=True)
    var = jnp.mean((y - mean) ** 2, axis=(0, 1, 2), keepdims=True)
    y = (y - mean) * jax.lax.rsqrt(var + EPS)
    y = y * gamma.reshape(1, 1, 1, -1) + beta.reshape(1, 1, 1, -1)
    return jnp.maximum(y, 0.0)


def _ref_double_conv(x_nchw, p):
    x = jnp.transpose(x_nchw, (0, 2, 3, 1))
    y = _ref_conv_bn_relu(x, p["w1"], p["b1"], p["g1"], p["be1"])
    y = _ref_conv_bn_relu(y, p["w2"], p["b2"], p["g2"], p["be2"])
    return jnp.transpose(y, (0, 3, 1, 2))


if __name__ == "__main__":
    N, Cin, Cout, H, W = 2, 4, 8, 16, 16
    key = jax.random.PRNGKey(0)
    kx, kp = jax.random.split(key)
    x = jax.random.normal(kx, (N, Cin, H, W), jnp.float32)
    params = init_double_conv_params(kp, Cin, Cout)

    out = jax.jit(double_conv)(x, params)
    out = jax.block_until_ready(out)
    assert out.shape == (N, Cout, H, W), out.shape

    ref = jax.block_until_ready(_ref_double_conv(x, params))
    max_err = float(jnp.max(jnp.abs(out - ref)))
    assert jnp.allclose(out, ref, rtol=1e-3, atol=1e-3), max_err

    print("KERNEL_OK")
</pallas_src>

<mosaic_0001>
module attributes {stable_mosaic.version = 11 : i64} {
  func.func @_conv_bias_stats_kernel(%arg0: i32, %arg1: i32, %arg2: memref<1x1x18x18x4xf32, #tpu.memory_space<vmem>>, %arg3: memref<36x128xf32, #tpu.memory_space<vmem>>, %arg4: memref<1x128xf32, #tpu.memory_space<vmem>>, %arg5: memref<1x1x256x128xf32, #tpu.memory_space<vmem>>, %arg6: memref<1x1x2x128xf32, #tpu.memory_space<vmem>>) attributes {dimension_semantics = [#tpu.dimension_semantics<parallel>, #tpu.dimension_semantics<parallel>], iteration_bounds = array<i64: 2, 1>, scalar_prefetch = 0 : i64, scratch_operands = 0 : i64, tpu.core_type = #tpu.core_type<tc>, window_params = [{transform_indices = @transform_0, window_bounds = array<i64: 1, 1, 18, 18, 4>}, {pipeline_mode = #tpu.pipeline_mode<synchronous>, transform_indices = @transform_1, window_bounds = array<i64: 36, 128>}, {pipeline_mode = #tpu.pipeline_mode<synchronous>, transform_indices = @transform_2, window_bounds = array<i64: 1, 128>}, {transform_indices = @transform_3, window_bounds = array<i64: 1, 1, 256, 128>}, {transform_indices = @transform_4, window_bounds = array<i64: 1, 1, 2, 128>}]} {
    %c0 = arith.constant 0 : index
    %c0_0 = arith.constant 0 : index
    %c0_1 = arith.constant 0 : index
    %c0_2 = arith.constant 0 : index
    %c0_3 = arith.constant 0 : index
    %0 = vector.load %arg2[%c0, %c0_0, %c0_1, %c0_2, %c0_3] : memref<1x1x18x18x4xf32, #tpu.memory_space<vmem>>, vector<1x1x18x18x4xf32>
    %1 = vector.shape_cast %0 : vector<1x1x18x18x4xf32> to vector<18x18x4xf32>
    %2 = vector.extract_strided_slice %1 {offsets = [0, 0, 0], sizes = [16, 16, 4], strides = [1, 1, 1]} : vector<18x18x4xf32> to vector<16x16x4xf32>
    %3 = vector.shape_cast %2 : vector<16x16x4xf32> to vector<256x4xf32>
    %4 = vector.extract_strided_slice %1 {offsets = [0, 1, 0], sizes = [16, 16, 4], strides = [1, 1, 1]} : vector<18x18x4xf32> to vector<16x16x4xf32>
    %5 = vector.shape_cast %4 : vector<16x16x4xf32> to vector<256x4xf32>
    %6 = vector.extract_strided_slice %1 {offsets = [0, 2, 0], sizes = [16, 16, 4], strides = [1, 1, 1]} : vector<18x18x4xf32> to vector<16x16x4xf32>
    %7 = vector.shape_cast %6 : vector<16x16x4xf32> to vector<256x4xf32>
    %8 = vector.extract_strided_slice %1 {offsets = [1, 0, 0], sizes = [16, 16, 4], strides = [1, 1, 1]} : vector<18x18x4xf32> to vector<16x16x4xf32>
    %9 = vector.shape_cast %8 : vector<16x16x4xf32> to vector<256x4xf32>
    %10 = vector.extract_strided_slice %1 {offsets = [1, 1, 0], sizes = [16, 16, 4], strides = [1, 1, 1]} : vector<18x18x4xf32> to vector<16x16x4xf32>
    %11 = vector.shape_cast %10 : vector<16x16x4xf32> to vector<256x4xf32>
    %12 = vector.extract_strided_slice %1 {offsets = [1, 2, 0], sizes = [16, 16, 4], strides = [1, 1, 1]} : vector<18x18x4xf32> to vector<16x16x4xf32>
    %13 = vector.shape_cast %12 : vector<16x16x4xf32> to vector<256x4xf32>
    %14 = vector.extract_strided_slice %1 {offsets = [2, 0, 0], sizes = [16, 16, 4], strides = [1, 1, 1]} : vector<18x18x4xf32> to vector<16x16x4xf32>
    %15 = vector.shape_cast %14 : vector<16x16x4xf32> to vector<256x4xf32>
    %16 = vector.extract_strided_slice %1 {offsets = [2, 1, 0], sizes = [16, 16, 4], strides = [1, 1, 1]} : vector<18x18x4xf32> to vector<16x16x4xf32>
    %17 = vector.shape_cast %16 : vector<16x16x4xf32> to vector<256x4xf32>
    %18 = vector.extract_strided_slice %1 {offsets = [2, 2, 0], sizes = [16, 16, 4], strides = [1, 1, 1]} : vector<18x18x4xf32> to vector<16x16x4xf32>
    %19 = vector.shape_cast %18 : vector<16x16x4xf32> to vector<256x4xf32>
    %20 = tpu.concatenate %3, %5, %7, %9, %11, %13, %15, %17, %19 in 1 : vector<256x4xf32>, vector<256x4xf32>, vector<256x4xf32>, vector<256x4xf32>, vector<256x4xf32>, vector<256x4xf32>, vector<256x4xf32>, vector<256x4xf32>, vector<256x4xf32> -> vector<256x36xf32>
    %c0_4 = arith.constant 0 : index
    %c0_5 = arith.constant 0 : index
    %21 = vector.load %arg3[%c0_4, %c0_5] : memref<36x128xf32, #tpu.memory_space<vmem>>, vector<36x128xf32>
    %cst = arith.constant dense<0.000000e+00> : vector<256x128xf32>
    %22 = tpu.matmul %20, %21, %cst {dimension_numbers = #tpu.dot_dimension_numbers<[1], [0], [0], [1], [0, 0, 1, 1], [], []>} : vector<256x36xf32>, vector<36x128xf32>, vector<256x128xf32> -> vector<256x128xf32>
    %c0_6 = arith.constant 0 : index
    %c0_7 = arith.constant 0 : index
    %23 = vector.load %arg4[%c0_6, %c0_7] : memref<1x128xf32, #tpu.memory_space<vmem>>, vector<1x128xf32>
    %24 = vector.broadcast %23 : vector<1x128xf32> to vector<256x128xf32>
    %25 = arith.addf %22, %24 : vector<256x128xf32>
    %c0_8 = arith.constant 0 : index
    %c0_9 = arith.constant 0 : index
    %c0_10 = arith.constant 0 : index
    %c0_11 = arith.constant 0 : index
    %26 = vector.load %arg5[%c0_8, %c0_9, %c0_10, %c0_11] : memref<1x1x256x128xf32, #tpu.memory_space<vmem>>, vector<1x1x256x128xf32>
    %27 = vector.shape_cast %26 : vector<1x1x256x128xf32> to vector<256x128xf32>
    %28 = vector.shape_cast %25 : vector<256x128xf32> to vector<1x1x256x128xf32>
    tpu.vector_store %arg5[%c0_8, %c0_9, %c0_10, %c0_11], %28 {strides = array<i32>} : memref<1x1x256x128xf32, #tpu.memory_space<vmem>>, vector<1x1x256x128xf32>,
    %cst_12 = arith.constant dense<0.000000e+00> : vector<128xf32>
    %29 = vector.multi_reduction <add>, %25, %cst_12 [0] : vector<256x128xf32> to vector<128xf32>
    %30 = vector.shape_cast %29 : vector<128xf32> to vector<1x128xf32>
    %31 = arith.mulf %25, %25 : vector<256x128xf32>
    %cst_13 = arith.constant dense<0.000000e+00> : vector<128xf32>
    %32 = vector.multi_reduction <add>, %31, %cst_13 [0] : vector<256x128xf32> to vector<128xf32>
    %33 = vector.shape_cast %32 : vector<128xf32> to vector<1x128xf32>
    %34 = tpu.concatenate %30, %33 in 0 : vector<1x128xf32>, vector<1x128xf32> -> vector<2x128xf32>
    %c0_14 = arith.constant 0 : index
    %c0_15 = arith.constant 0 : index
    %c0_16 = arith.constant 0 : index
    %c0_17 = arith.constant 0 : index
    %35 = vector.load %arg6[%c0_14, %c0_15, %c0_16, %c0_17] : memref<1x1x2x128xf32, #tpu.memory_space<vmem>>, vector<1x1x2x128xf32>
    %36 = vector.shape_cast %35 : vector<1x1x2x128xf32> to vector<2x128xf32>
    %37 = vector.shape_cast %34 : vector<2x128xf32> to vector<1x1x2x128xf32>
    tpu.vector_store %arg6[%c0_14, %c0_15, %c0_16, %c0_17], %37 {strides = array<i32>} : memref<1x1x2x128xf32, #tpu.memory_space<vmem>>, vector<1x1x2x128xf32>,
    return
  }
  func.func @transform_0(%arg0: i32, %arg1: i32) -> (i32, i32, i32, i32, i32) {
    %c0_i32 = arith.constant 0 : i32
    %c0_i32_0 = arith.constant 0 : i32
    %c0_i32_1 = arith.constant 0 : i32
    %c0_i32_2 = arith.constant 0 : i32
    return %arg0, %arg1, %c0_i32, %c0_i32_0, %c0_i32_1 : i32, i32, i32, i32, i32
  }
  func.func @transform_1(%arg0: i32, %arg1: i32) -> (i32, i32) {
    %c0_i32 = arith.constant 0 : i32
    %c0_i32_0 = arith.constant 0 : i32
    %c0_i32_1 = arith.constant 0 : i32
    return %c0_i32, %c0_i32_0 : i32, i32
  }
  func.func @transform_2(%arg0: i32, %arg1: i32) -> (i32, i32) {
    %c0_i32 = arith.constant 0 : i32
    %c0_i32_0 = arith.constant 0 : i32
    %c0_i32_1 = arith.constant 0 : i32
    return %c0_i32, %c0_i32_0 : i32, i32
  }
  func.func @transform_3(%arg0: i32, %arg1: i32) -> (i32, i32, i32, i32) {
    %c0_i32 = arith.constant 0 : i32
    %c0_i32_0 = arith.constant 0 : i32
    %c0_i32_1 = arith.constant 0 : i32
    return %arg0, %arg1, %c0_i32, %c0_i32_0 : i32, i32, i32, i32
  }
  func.func @transform_4(%arg0: i32, %arg1: i32) -> (i32, i32, i32, i32) {
    %c0_i32 = arith.constant 0 : i32
    %c0_i32_0 = arith.constant 0 : i32
    %c0_i32_1 = arith.constant 0 : i32
    return %arg0, %arg1, %c0_i32, %c0_i32_0 : i32, i32, i32, i32
  }
}

module attributes {stable_mosaic.version = 11 : i64} {
  func.func @_bn_relu_kernel(%arg0: i32, %arg1: memref<1x256x128xf32, #tpu.memory_space<vmem>>, %arg2: memref<1x128xf32, #tpu.memory_space<vmem>>, %arg3: memref<1x128xf32, #tpu.memory_space<vmem>>, %arg4: memref<1x256x128xf32, #tpu.memory_space<vmem>>) attributes {dimension_semantics = [#tpu.dimension_semantics<parallel>], iteration_bounds = array<i64: 2>, scalar_prefetch = 0 : i64, scratch_operands = 0 : i64, tpu.core_type = #tpu.core_type<tc>, window_params = [{transform_indices = @transform_0, window_bounds = array<i64: 1, 256, 128>}, {pipeline_mode = #tpu.pipeline_mode<synchronous>, transform_indices = @transform_1, window_bounds = array<i64: 1, 128>}, {pipeline_mode = #tpu.pipeline_mode<synchronous>, transform_indices = @transform_2, window_bounds = array<i64: 1, 128>}, {transform_indices = @transform_3, window_bounds = array<i64: 1, 256, 128>}]} {
    %c0 = arith.constant 0 : index
    %c0_0 = arith.constant 0 : index
    %c0_1 = arith.constant 0 : index
    %0 = vector.load %arg1[%c0, %c0_0, %c0_1] : memref<1x256x128xf32, #tpu.memory_space<vmem>>, vector<1x256x128xf32>
    %1 = vector.shape_cast %0 : vector<1x256x128xf32> to vector<256x128xf32>
    %c0_2 = arith.constant 0 : index
    %c0_3 = arith.constant 0 : index
    %2 = vector.load %arg2[%c0_2, %c0_3] : memref<1x128xf32, #tpu.memory_space<vmem>>, vector<1x128xf32>
    %3 = vector.broadcast %2 : vector<1x128xf32> to vector<256x128xf32>
    %4 = arith.mulf %1, %3 : vector<256x128xf32>
    %c0_4 = arith.constant 0 : index
    %c0_5 = arith.constant 0 : index
    %5 = vector.load %arg3[%c0_4, %c0_5] : memref<1x128xf32, #tpu.memory_space<vmem>>, vector<1x128xf32>
    %6 = vector.broadcast %5 : vector<1x128xf32> to vector<256x128xf32>
    %7 = arith.addf %4, %6 : vector<256x128xf32>
    %cst = arith.constant 0.000000e+00 : f32
    %8 = vector.broadcast %cst : f32 to vector<256x128xf32>
    %9 = arith.maximumf %7, %8 : vector<256x128xf32>
    %c0_6 = arith.constant 0 : index
    %c0_7 = arith.constant 0 : index
    %c0_8 = arith.constant 0 : index
    %10 = vector.load %arg4[%c0_6, %c0_7, %c0_8] : memref<1x256x128xf32, #tpu.memory_space<vmem>>, vector<1x256x128xf32>
    %11 = vector.shape_cast %10 : vector<1x256x128xf32> to vector<256x128xf32>
    %12 = vector.shape_cast %9 : vector<256x128xf32> to vector<1x256x128xf32>
    tpu.vector_store %arg4[%c0_6, %c0_7, %c0_8], %12 {strides = array<i32>} : memref<1x256x128xf32, #tpu.memory_space<vmem>>, vector<1x256x128xf32>,
    return
  }
  func.func @transform_0(%arg0: i32) -> (i32, i32, i32) {
    %c0_i32 = arith.constant 0 : i32
    %c0_i32_0 = arith.constant 0 : i32
    %c0_i32_1 = arith.constant 0 : i32
    return %arg0, %c0_i32, %c0_i32_0 : i32, i32, i32
  }
  func.func @transform_1(%arg0: i32) -> (i32, i32) {
    %c0_i32 = arith.constant 0 : i32
    %c0_i32_0 = arith.constant 0 : i32
    %c0_i32_1 = arith.constant 0 : i32
    return %c0_i32, %c0_i32_0 : i32, i32
  }
  func.func @transform_2(%arg0: i32) -> (i32, i32) {
    %c0_i32 = arith.constant 0 : i32
    %c0_i32_0 = arith.constant 0 : i32
    %c0_i32_1 = arith.constant 0 : i32
    return %c0_i32, %c0_i32_0 : i32, i32
  }
  func.func @transform_3(%arg0: i32) -> (i32, i32, i32) {
    %c0_i32 = arith.constant 0 : i32
    %c0_i32_0 = arith.constant 0 : i32
    %c0_i32_1 = arith.constant 0 : i32
    return %arg0, %c0_i32, %c0_i32_0 : i32, i32, i32
  }
}

module attributes {stable_mosaic.version = 11 : i64} {
  func.func @_conv_bias_stats_kernel(%arg0: i32, %arg1: i32, %arg2: memref<1x1x18x18x128xf32, #tpu.memory_space<vmem>>, %arg3: memref<1152x128xf32, #tpu.memory_space<vmem>>, %arg4: memref<1x128xf32, #tpu.memory_space<vmem>>, %arg5: memref<1x1x256x128xf32, #tpu.memory_space<vmem>>, %arg6: memref<1x1x2x128xf32, #tpu.memory_space<vmem>>) attributes {dimension_semantics = [#tpu.dimension_semantics<parallel>, #tpu.dimension_semantics<parallel>], iteration_bounds = array<i64: 2, 1>, scalar_prefetch = 0 : i64, scratch_operands = 0 : i64, tpu.core_type = #tpu.core_type<tc>, window_params = [{transform_indices = @transform_0, window_bounds = array<i64: 1, 1, 18, 18, 128>}, {pipeline_mode = #tpu.pipeline_mode<synchronous>, transform_indices = @transform_1, window_bounds = array<i64: 1152, 128>}, {pipeline_mode = #tpu.pipeline_mode<synchronous>, transform_indices = @transform_2, window_bounds = array<i64: 1, 128>}, {transform_indices = @transform_3, window_bounds = array<i64: 1, 1, 256, 128>}, {transform_indices = @transform_4, window_bounds = array<i64: 1, 1, 2, 128>}]} {
    %c0 = arith.constant 0 : index
    %c0_0 = arith.constant 0 : index
    %c0_1 = arith.constant 0 : index
    %c0_2 = arith.constant 0 : index
    %c0_3 = arith.constant 0 : index
    %0 = vector.load %arg2[%c0, %c0_0, %c0_1, %c0_2, %c0_3] : memref<1x1x18x18x128xf32, #tpu.memory_space<vmem>>, vector<1x1x18x18x128xf32>
    %1 = vector.shape_cast %0 : vector<1x1x18x18x128xf32> to vector<18x18x128xf32>
    %2 = vector.extract_strided_slice %1 {offsets = [0, 0, 0], sizes = [16, 16, 128], strides = [1, 1, 1]} : vector<18x18x128xf32> to vector<16x16x128xf32>
    %3 = vector.shape_cast %2 : vector<16x16x128xf32> to vector<256x128xf32>
    %4 = vector.extract_strided_slice %1 {offsets = [0, 1, 0], sizes = [16, 16, 128], strides = [1, 1, 1]} : vector<18x18x128xf32> to vector<16x16x128xf32>
    %5 = vector.shape_cast %4 : vector<16x16x128xf32> to vector<256x128xf32>
    %6 = vector.extract_strided_slice %1 {offsets = [0, 2, 0], sizes = [16, 16, 128], strides = [1, 1, 1]} : vector<18x18x128xf32> to vector<16x16x128xf32>
    %7 = vector.shape_cast %6 : vector<16x16x128xf32> to vector<256x128xf32>
    %8 = vector.extract_strided_slice %1 {offsets = [1, 0, 0], sizes = [16, 16, 128], strides = [1, 1, 1]} : vector<18x18x128xf32> to vector<16x16x128xf32>
    %9 = vector.shape_cast %8 : vector<16x16x128xf32> to vector<256x128xf32>
    %10 = vector.extract_strided_slice %1 {offsets = [1, 1, 0], sizes = [16, 16, 128], strides = [1, 1, 1]} : vector<18x18x128xf32> to vector<16x16x128xf32>
    %11 = vector.shape_cast %10 : vector<16x16x128xf32> to vector<256x128xf32>
    %12 = vector.extract_strided_slice %1 {offsets = [1, 2, 0], sizes = [16, 16, 128], strides = [1, 1, 1]} : vector<18x18x128xf32> to vector<16x16x128xf32>
    %13 = vector.shape_cast %12 : vector<16x16x128xf32> to vector<256x128xf32>
    %14 = vector.extract_strided_slice %1 {offsets = [2, 0, 0], sizes = [16, 16, 128], strides = [1, 1, 1]} : vector<18x18x128xf32> to vector<16x16x128xf32>
    %15 = vector.shape_cast %14 : vector<16x16x128xf32> to vector<256x128xf32>
    %16 = vector.extract_strided_slice %1 {offsets = [2, 1, 0], sizes = [16, 16, 128], strides = [1, 1, 1]} : vector<18x18x128xf32> to vector<16x16x128xf32>
    %17 = vector.shape_cast %16 : vector<16x16x128xf32> to vector<256x128xf32>
    %18 = vector.extract_strided_slice %1 {offsets = [2, 2, 0], sizes = [16, 16, 128], strides = [1, 1, 1]} : vector<18x18x128xf32> to vector<16x16x128xf32>
    %19 = vector.shape_cast %18 : vector<16x16x128xf32> to vector<256x128xf32>
    %20 = tpu.concatenate %3, %5, %7, %9, %11, %13, %15, %17, %19 in 1 : vector<256x128xf32>, vector<256x128xf32>, vector<256x128xf32>, vector<256x128xf32>, vector<256x128xf32>, vector<256x128xf32>, vector<256x128xf32>, vector<256x128xf32>, vector<256x128xf32> -> vector<256x1152xf32>
    %c0_4 = arith.constant 0 : index
    %c0_5 = arith.constant 0 : index
    %21 = vector.load %arg3[%c0_4, %c0_5] : memref<1152x128xf32, #tpu.memory_space<vmem>>, vector<1152x128xf32>
    %cst = arith.constant dense<0.000000e+00> : vector<256x128xf32>
    %22 = tpu.matmul %20, %21, %cst {dimension_numbers = #tpu.dot_dimension_numbers<[1], [0], [0], [1], [0, 0, 1, 1], [], []>} : vector<256x1152xf32>, vector<1152x128xf32>, vector<256x128xf32> -> vector<256x128xf32>
    %c0_6 = arith.constant 0 : index
    %c0_7 = arith.constant 0 : index
    %23 = vector.load %arg4[%c0_6, %c0_7] : memref<1x128xf32, #tpu.memory_space<vmem>>, vector<1x128xf32>
    %24 = vector.broadcast %23 : vector<1x128xf32> to vector<256x128xf32>
    %25 = arith.addf %22, %24 : vector<256x128xf32>
    %c0_8 = arith.constant 0 : index
    %c0_9 = arith.constant 0 : index
    %c0_10 = arith.constant 0 : index
    %c0_11 = arith.constant 0 : index
    %26 = vector.load %arg5[%c0_8, %c0_9, %c0_10, %c0_11] : memref<1x1x256x128xf32, #tpu.memory_space<vmem>>, vector<1x1x256x128xf32>
    %27 = vector.shape_cast %26 : vector<1x1x256x128xf32> to vector<256x128xf32>
    %28 = vector.shape_cast %25 : vector<256x128xf32> to vector<1x1x256x128xf32>
    tpu.vector_store %arg5[%c0_8, %c0_9, %c0_10, %c0_11], %28 {strides = array<i32>} : memref<1x1x256x128xf32, #tpu.memory_space<vmem>>, vector<1x1x256x128xf32>,
    %cst_12 = arith.constant dense<0.000000e+00> : vector<128xf32>
    %29 = vector.multi_reduction <add>, %25, %cst_12 [0] : vector<256x128xf32> to vector<128xf32>
    %30 = vector.shape_cast %29 : vector<128xf32> to vector<1x128xf32>
    %31 = arith.mulf %25, %25 : vector<256x128xf32>
    %cst_13 = arith.constant dense<0.000000e+00> : vector<128xf32>
    %32 = vector.multi_reduction <add>, %31, %cst_13 [0] : vector<256x128xf32> to vector<128xf32>
    %33 = vector.shape_cast %32 : vector<128xf32> to vector<1x128xf32>
    %34 = tpu.concatenate %30, %33 in 0 : vector<1x128xf32>, vector<1x128xf32> -> vector<2x128xf32>
    %c0_14 = arith.constant 0 : index
    %c0_15 = arith.constant 0 : index
    %c0_16 = arith.constant 0 : index
    %c0_17 = arith.constant 0 : index
    %35 = vector.load %arg6[%c0_14, %c0_15, %c0_16, %c0_17] : memref<1x1x2x128xf32, #tpu.memory_space<vmem>>, vector<1x1x2x128xf32>
    %36 = vector.shape_cast %35 : vector<1x1x2x128xf32> to vector<2x128xf32>
    %37 = vector.shape_cast %34 : vector<2x128xf32> to vector<1x1x2x128xf32>
    tpu.vector_store %arg6[%c0_14, %c0_15, %c0_16, %c0_17], %37 {strides = array<i32>} : memref<1x1x2x128xf32, #tpu.memory_space<vmem>>, vector<1x1x2x128xf32>,
    return
  }
  func.func @transform_0(%arg0: i32, %arg1: i32) -> (i32, i32, i32, i32, i32) {
    %c0_i32 = arith.constant 0 : i32
    %c0_i32_0 = arith.constant 0 : i32
    %c0_i32_1 = arith.constant 0 : i32
    %c0_i32_2 = arith.constant 0 : i32
    return %arg0, %arg1, %c0_i32, %c0_i32_0, %c0_i32_1 : i32, i32, i32, i32, i32
  }
  func.func @transform_1(%arg0: i32, %arg1: i32) -> (i32, i32) {
    %c0_i32 = arith.constant 0 : i32
    %c0_i32_0 = arith.constant 0 : i32
    %c0_i32_1 = arith.constant 0 : i32
    return %c0_i32, %c0_i32_0 : i32, i32
  }
  func.func @transform_2(%arg0: i32, %arg1: i32) -> (i32, i32) {
    %c0_i32 = arith.constant 0 : i32
    %c0_i32_0 = arith.constant 0 : i32
    %c0_i32_1 = arith.constant 0 : i32
    return %c0_i32, %c0_i32_0 : i32, i32
  }
  func.func @transform_3(%arg0: i32, %arg1: i32) -> (i32, i32, i32, i32) {
    %c0_i32 = arith.constant 0 : i32
    %c0_i32_0 = arith.constant 0 : i32
    %c0_i32_1 = arith.constant 0 : i32
    return %arg0, %arg1, %c0_i32, %c0_i32_0 : i32, i32, i32, i32
  }
  func.func @transform_4(%arg0: i32, %arg1: i32) -> (i32, i32, i32, i32) {
    %c0_i32 = arith.constant 0 : i32
    %c0_i32_0 = arith.constant 0 : i32
    %c0_i32_1 = arith.constant 0 : i32
    return %arg0, %arg1, %c0_i32, %c0_i32_0 : i32, i32, i32, i32
  }
}

</mosaic_0001>

<llo_original>
// kernel: double_conv.5
$region0: #{double_conv.5}
  #allocation0 [shape = 'u32[]', space=smem, size = 0x4, offset = 0x4, fixed_abs, tag = 'smem constant byte address 0x4 - core index']
  #allocation1 [shape = 'u32[144,128]{1,0:T(1,128)}', space=vmem, size = 0x12000, scoped, tag = 'internal scratch']
  %s0 = inlined_call_operand.vmem [shape: f32[2,256,128], index: 0, kind: input, shape index: {}]
  %s1 = inlined_call_operand.vmem [shape: f32[1,128], index: 1, kind: input, shape index: {}]
  %s2 = inlined_call_operand.vmem [shape: f32[1,128], index: 2, kind: input, shape index: {}]
  %s3 = inlined_call_operand.vmem [shape: f32[2,256,128], index: 3, kind: output, shape index: {}]
  %s4 = sld [smem:[#allocation0]]
  $region45: #{double_conv.5} parent=0
    _
  %s6 = ssub.s32 1, %s4
  %s7 = scalar_select 0, %s6, %s4
  loop: start=0, step=1, limit=4
  $region2: #{double_conv.5} parent=0 // loop_pre_header
    _
  $region3: #{double_conv.5} parent=0 // loop_header
    %s9 = sphi 0, %s13
    %p10 = scmp.ge.s32.totalorder %s9, 4
    %s19 = sphi 0, %s21
    %s22 = sphi 0, %s19
    %s23 = sphi 0, %s22
    %s39 = sphi 0, %s23
    %s43 = sphi 0, %s43
    %s45 = sphi 0, %s43
    %s46 = sphi 0, %s45
    %s60 = sphi 0, %s46
    %s64 = sphi 0, %s64
    %s66 = sphi 0, %s64
    %s67 = sphi 0, %s66
    %s81 = sphi 0, %s67
    %s87 = sphi 0, %s89
    %s90 = sphi 0, %s87
    %s91 = sphi 0, %s90
    %s107 = sphi 0, %s91
  $region4: #{double_conv.5} parent=0 // loop_header_branch
    %12 = sbr.rel (%p10) target = $region8
  $region5: #{double_conv.5} parent=0 // loop_body
    %s14 = ssub.s32 %s9, 1
    %s15 = ssub.s32 %s9, 2
    %s16 = sadd.s32 %s9, 1
    %s17 = ssub.s32 %s9, %s16
    %p18 = scmp.eq.s32.totalorder %s17, 0
    %s20 = sadd.s32 %s19, 1
    %s21 = scalar_select %p18, %s19, %s20
    %p24 = pneg %p18
    %p25 = scmp.eq.s32.totalorder %s9, 1
    %p26 = por %p24, %p25
    %p27 = scmp.ne.s32.totalorder %s19, %s22
    %p28 = scmp.eq.s32.totalorder %s9, 0
    %p29 = por %p27, %p28
    %p30 = scmp.ne.s32.totalorder %s19, %s22
    %p31 = scmp.eq.s32.totalorder %s14, 1
    %p32 = por %p30, %p31
    %p33 = scmp.ne.s32.totalorder %s22, %s23
    %p34 = scmp.eq.s32.totalorder %s14, 0
    %p35 = por %p33, %p34
    %p36 = scmp.ne.s32.totalorder %s22, %s23
    %p37 = scmp.eq.s32.totalorder %s15, 1
    %p38 = por %p36, %p37
    %p40 = scmp.ne.s32.totalorder %s23, %s39
    %p41 = scmp.eq.s32.totalorder %s15, 0
    %p42 = por %p40, %p41
    %s44 = sadd.s32 %s43, 1
    %p47 = scmp.eq.s32.totalorder %s9, 1
    %p48 = scmp.ne.s32.totalorder %s43, %s45
    %p49 = scmp.eq.s32.totalorder %s9, 0
    %p50 = por %p48, %p49
    %p51 = scmp.ne.s32.totalorder %s43, %s45
    %p52 = scmp.eq.s32.totalorder %s14, 1
    %p53 = por %p51, %p52
    %p54 = scmp.ne.s32.totalorder %s45, %s46
    %p55 = scmp.eq.s32.totalorder %s14, 0
    %p56 = por %p54, %p55
    %p57 = scmp.ne.s32.totalorder %s45, %s46
    %p58 = scmp.eq.s32.totalorder %s15, 1
    %p59 = por %p57, %p58
    %p61 = scmp.ne.s32.totalorder %s46, %s60
    %p62 = scmp.eq.s32.totalorder %s15, 0
    %p63 = por %p61, %p62
    %s65 = sadd.s32 %s64, 1
    %p68 = scmp.eq.s32.totalorder %s9, 1
    %p69 = scmp.ne.s32.totalorder %s64, %s66
    %p70 = scmp.eq.s32.totalorder %s9, 0
    %p71 = por %p69, %p70
    %p72 = scmp.ne.s32.totalorder %s64, %s66
    %p73 = scmp.eq.s32.totalorder %s14, 1
    %p74 = por %p72, %p73
    %p75 = scmp.ne.s32.totalorder %s66, %s67
    %p76 = scmp.eq.s32.totalorder %s14, 0
    %p77 = por %p75, %p76
    %p78 = scmp.ne.s32.totalorder %s66, %s67
    %p79 = scmp.eq.s32.totalorder %s15, 1
    %p80 = por %p78, %p79
    %p82 = scmp.ne.s32.totalorder %s67, %s81
    %p83 = scmp.eq.s32.totalorder %s15, 0
    %p84 = por %p82, %p83
    %s85 = ssub.s32 %s9, %s16
    %p86 = scmp.eq.s32.totalorder %s85, 0
    %s88 = sadd.s32 %s87, 1
    %s89 = scalar_select %p86, %s87, %s88
    %p92 = pneg %p86
    %p93 = scmp.eq.s32.totalorder %s9, 1
    %p94 = por %p92, %p93
    %p95 = scmp.ne.s32.totalorder %s87, %s90
    %p96 = scmp.eq.s32.totalorder %s9, 0
    %p97 = por %p95, %p96
    %p98 = scmp.ne.s32.totalorder %s87, %s90
    %p99 = scmp.eq.s32.totalorder %s14, 1
    %p100 = por %p98, %p99
    %p101 = scmp.ne.s32.totalorder %s90, %s91
    %p102 = scmp.eq.s32.totalorder %s14, 0
    %p103 = por %p101, %p102
    %p104 = scmp.ne.s32.totalorder %s90, %s91
    %p105 = scmp.eq.s32.totalorder %s15, 1
    %p106 = por %p104, %p105
    %p108 = scmp.ne.s32.totalorder %s91, %s107
    %p109 = scmp.eq.s32.totalorder %s15, 0
    %p110 = por %p108, %p109
    %p111 = scmp.le.s32.totalorder 1, %s9
    %p112 = scmp.lt.s32.totalorder %s9, 3
    %p113 = pnand %p111, %p112
    %p114 = pneg %p113
    // Predicated region
    $region9: #{double_conv.5} parent=5 // pred_check
      _
    $region10: #{double_conv.5} parent=5 // pred_check_branch
      %116 = sbr.rel (%p113) target = $region12
    $region11: #{double_conv.5} parent=5 // pred_region
      %s117 = ssub.s32 %s9, 1
      // Predicated region
      $region13: #{double_conv.5} parent=11 // pred_check
        %p118 = pneg %p56
      $region14: #{double_conv.5} parent=11 // pred_check_branch
        %120 = sbr.rel (%p118) target = $region16
      $region15: #{double_conv.5} parent=11 // pred_region
        _
      $region16: #{double_conv.5} parent=11 // pred_fallthru
        _
      // Predicated region
      $region17: #{double_conv.5} parent=11 // pred_check
        %p121 = pneg %p77
      $region18: #{double_conv.5} parent=11 // pred_check_branch
        %123 = sbr.rel (%p121) target = $region20
      $region19: #{double_conv.5} parent=11 // pred_region
        _
      $region20: #{double_conv.5} parent=11 // pred_fallthru
        _
    $region12: #{double_conv.5} parent=5 // pred_fallthru
      _
    %p124 = scmp.lt.s32.totalorder %s9, 2
    // Predicated region
    $region21: #{double_conv.5} parent=5 // pred_check
      %p125 = pneg %p124
    $region22: #{double_conv.5} parent=5 // pred_check_branch
      %127 = sbr.rel (%p125) target = $region24
    $region23: #{double_conv.5} parent=5 // pred_region
      // Predicated region
      $region25: #{double_conv.5} parent=23 // pred_check
        %p128 = pneg %p29
      $region26: #{double_conv.5} parent=23 // pred_check_branch
        %130 = sbr.rel (%p128) target = $region28
      $region27: #{double_conv.5} parent=23 // pred_region
        %p131 = scmp.lt.s32.totalorder %s9, 1
        %s132 = scalar_select %p131, %s9, 1
        %s133 = smul.addr %s132, 32
        %s134 = smul.addr %s133, 8
        %s135 = scalar_lea.vmem %s0, %s134
      $region28: #{double_conv.5} parent=23 // pred_fallthru
        _
    $region24: #{double_conv.5} parent=5 // pred_fallthru
      _
    %p136 = scmp.le.s32.totalorder 1, %s9
    %p137 = scmp.lt.s32.totalorder %s9, 3
    %p138 = pnand %p136, %p137
    %p139 = pneg %p138
    // Predicated region
    $region29: #{double_conv.5} parent=5 // pred_check
      _
    $region30: #{double_conv.5} parent=5 // pred_check_branch
      %141 = sbr.rel (%p138) target = $region32
    $region31: #{double_conv.5} parent=5 // pred_region
      %s142 = ssub.s32 %s9, 1
      %p143 = scmp.lt.s32.totalorder %s14, 1
      %s144 = scalar_select %p143, %s14, 1
      %s145 = smul.addr %s144, 32
      %s146 = smul.addr %s145, 8
      %s147 = scalar_lea.vmem %s0, %s146
      %p148 = pneg %p35
      %p149 = pneg %p32
      %p150 = pneg %p56
      %p151 = pneg %p53
      %p152 = pneg %p77
      %p153 = pneg %p74
      %p154 = pneg %p103
      %p155 = pneg %p100
      %p156 = scmp.lt.s32.totalorder %s14, 1
      %s157 = scalar_select %p156, %s14, 1
      %s158 = smul.addr %s157, 32
      %s159 = smul.addr %s158, 8
      %s160 = scalar_lea.vmem %s3, %s159
      %p161 = scmp.lt.s32.totalorder %s14, 1
      %s162 = scalar_select %p161, %s14, 1
      %s163 = smul.addr %s162, 32
      %s164 = smul.addr %s163, 8
      %s165 = scalar_lea.vmem %s0, %s164
      %p166 = scmp.lt.s32.totalorder %s14, 1
      %s167 = scalar_select %p166, %s14, 1
      %s168 = smul.addr %s167, 32
      %s169 = smul.addr %s168, 8
      %s170 = scalar_lea.vmem %s3, %s169
      %v171 = vld [vmem:[%s165] sm:$0xff]
      %v172 = vld [vmem:[%s165 + $0x8] sm:$0xff]
      %v173 = vld [vmem:[%s165 + $0x10] sm:$0xff]
      %v174 = vld [vmem:[%s165 + $0x18] sm:$0xff]
      %v175 = vld [vmem:[%s165 + $0x20] sm:$0xff]
      %v176 = vld [vmem:[%s165 + $0x28] sm:$0xff]
      %v177 = vld [vmem:[%s165 + $0x30] sm:$0xff]
      %v178 = vld [vmem:[%s165 + $0x38] sm:$0xff]
      %v179 = vld [vmem:[%s165 + $0x40] sm:$0xff]
      %v180 = vld [vmem:[%s165 + $0x48] sm:$0xff]
      %v181 = vld [vmem:[%s165 + $0x50] sm:$0xff]
      %v182 = vld [vmem:[%s165 + $0x58] sm:$0xff]
      %v183 = vld [vmem:[%s165 + $0x60] sm:$0xff]
      %v184 = vld [vmem:[%s165 + $0x68] sm:$0xff]
      %v185 = vld [vmem:[%s165 + $0x70] sm:$0xff]
      %v186 = vld [vmem:[%s165 + $0x78] sm:$0xff]
      %v187 = vld [vmem:[%s165 + $0x80] sm:$0xff]
      %v188 = vld [vmem:[%s165 + $0x88] sm:$0xff]
      %v189 = vld [vmem:[%s165 + $0x90] sm:$0xff]
      %v190 = vld [vmem:[%s165 + $0x98] sm:$0xff]
      %v191 = vld [vmem:[%s165 + $0xa0] sm:$0xff]
      %v192 = vld [vmem:[%s165 + $0xa8] sm:$0xff]
      %v193 = vld [vmem:[%s165 + $0xb0] sm:$0xff]
      %v194 = vld [vmem:[%s165 + $0xb8] sm:$0xff]
      %v195 = vld [vmem:[%s165 + $0xc0] sm:$0xff]
      %v196 = vld [vmem:[%s165 + $0xc8] sm:$0xff]
      %v197 = vld [vmem:[%s165 + $0xd0] sm:$0xff]
      %v198 = vld [vmem:[%s165 + $0xd8] sm:$0xff]
      %v199 = vld [vmem:[%s165 + $0xe0] sm:$0xff]
      %v200 = vld [vmem:[%s165 + $0xe8] sm:$0xff]
      %v201 = vld [vmem:[%s165 + $0xf0] sm:$0xff]
      %v202 = vld [vmem:[%s165 + $0xf8] sm:$0xff]
      %v203 = vld [vmem:[%s1] sm:$0x1]
      %v205 = vlaneseq
      %v206 = vshrl.u32 %v205, 7
      %v207 = vsub.s32 0, %v206
      %v208 = vrot.slane %v203, %v207
      %v210 = vmul.f32 %v171, %v208
      %v211 = vmul.f32 %v172, %v208
      %v212 = vmul.f32 %v173, %v208
      %v213 = vmul.f32 %v174, %v208
      %v214 = vmul.f32 %v175, %v208
      %v215 = vmul.f32 %v176, %v208
      %v216 = vmul.f32 %v177, %v208
      %v217 = vmul.f32 %v178, %v208
      %v218 = vmul.f32 %v179, %v208
      %v219 = vmul.f32 %v180, %v208
      %v220 = vmul.f32 %v181, %v208
      %v221 = vmul.f32 %v182, %v208
      %v222 = vmul.f32 %v183, %v208
      %v223 = vmul.f32 %v184, %v208
      %v224 = vmul.f32 %v185, %v208
      %v225 = vmul.f32 %v186, %v208
      %v226 = vmul.f32 %v187, %v208
      %v227 = vmul.f32 %v188, %v208
      %v228 = vmul.f32 %v189, %v208
      %v229 = vmul.f32 %v190, %v208
      %v230 = vmul.f32 %v191, %v208
      %v231 = vmul.f32 %v192, %v208
      %v232 = vmul.f32 %v193, %v208
      %v233 = vmul.f32 %v194, %v208
      %v234 = vmul.f32 %v195, %v208
      %v235 = vmul.f32 %v196, %v208
      %v236 = vmul.f32 %v197, %v208
      %v237 = vmul.f32 %v198, %v208
      %v238 = vmul.f32 %v199, %v208
      %v239 = vmul.f32 %v200, %v208
      %v240 = vmul.f32 %v201, %v208
      %v241 = vmul.f32 %v202, %v208
      %v242 = vld [vmem:[%s2] sm:$0x1]
      %v244 = vlaneseq
      %v245 = vshrl.u32 %v244, 7
      %v246 = vsub.s32 0, %v245
      %v247 = vrot.slane %v242, %v246
      %v249 = vadd.f32 %v210, %v247
      %v250 = vadd.f32 %v211, %v247
      %v251 = vadd.f32 %v212, %v247
      %v252 = vadd.f32 %v213, %v247
      %v253 = vadd.f32 %v214, %v247
      %v254 = vadd.f32 %v215, %v247
      %v255 = vadd.f32 %v216, %v247
      %v256 = vadd.f32 %v217, %v247
      %v257 = vadd.f32 %v218, %v247
      %v258 = vadd.f32 %v219, %v247
      %v259 = vadd.f32 %v220, %v247
      %v260 = vadd.f32 %v221, %v247
      %v261 = vadd.f32 %v222, %v247
      %v262 = vadd.f32 %v223, %v247
      %v263 = vadd.f32 %v224, %v247
      %v264 = vadd.f32 %v225, %v247
      %v265 = vadd.f32 %v226, %v247
      %v266 = vadd.f32 %v227, %v247
      %v267 = vadd.f32 %v228, %v247
      %v268 = vadd.f32 %v229, %v247
      %v269 = vadd.f32 %v230, %v247
      %v270 = vadd.f32 %v231, %v247
      %v271 = vadd.f32 %v232, %v247
      %v272 = vadd.f32 %v233, %v247
      %v273 = vadd.f32 %v234, %v247
      %v274 = vadd.f32 %v235, %v247
      %v275 = vadd.f32 %v236, %v247
      %v276 = vadd.f32 %v237, %v247
      %v277 = vadd.f32 %v238, %v247
      %v278 = vadd.f32 %v239, %v247
      %v279 = vadd.f32 %v240, %v247
      %v280 = vadd.f32 %v241, %v247
      %v281 = vmax.f32 %v249, 0.0
      %v282 = vmax.f32 %v250, 0.0
      %v283 = vmax.f32 %v251, 0.0
      %v284 = vmax.f32 %v252, 0.0
      %v285 = vmax.f32 %v253, 0.0
      %v286 = vmax.f32 %v254, 0.0
      %v287 = vmax.f32 %v255, 0.0
      %v288 = vmax.f32 %v256, 0.0
      %v289 = vmax.f32 %v257, 0.0
      %v290 = vmax.f32 %v258, 0.0
      %v291 = vmax.f32 %v259, 0.0
      %v292 = vmax.f32 %v260, 0.0
      %v293 = vmax.f32 %v261, 0.0
      %v294 = vmax.f32 %v262, 0.0
      %v295 = vmax.f32 %v263, 0.0
      %v296 = vmax.f32 %v264, 0.0
      %v297 = vmax.f32 %v265, 0.0
      %v298 = vmax.f32 %v266, 0.0
      %v299 = vmax.f32 %v267, 0.0
      %v300 = vmax.f32 %v268, 0.0
      %v301 = vmax.f32 %v269, 0.0
      %v302 = vmax.f32 %v270, 0.0
      %v303 = vmax.f32 %v271, 0.0
      %v304 = vmax.f32 %v272, 0.0
      %v305 = vmax.f32 %v273, 0.0
      %v306 = vmax.f32 %v274, 0.0
      %v307 = vmax.f32 %v275, 0.0
      %v308 = vmax.f32 %v276, 0.0
      %v309 = vmax.f32 %v277, 0.0
      %v310 = vmax.f32 %v278, 0.0
      %v311 = vmax.f32 %v279, 0.0
      %v312 = vmax.f32 %v280, 0.0
      %313 = vst [vmem:[%s170] sm:$0xff] %v281
      %314 = vst [vmem:[%s170 + $0x8] sm:$0xff] %v282
      %315 = vst [vmem:[%s170 + $0x10] sm:$0xff] %v283
      %316 = vst [vmem:[%s170 + $0x18] sm:$0xff] %v284
      %317 = vst [vmem:[%s170 + $0x20] sm:$0xff] %v285
      %318 = vst [vmem:[%s170 + $0x28] sm:$0xff] %v286
      %319 = vst [vmem:[%s170 + $0x30] sm:$0xff] %v287
      %320 = vst [vmem:[%s170 + $0x38] sm:$0xff] %v288
      %321 = vst [vmem:[%s170 + $0x40] sm:$0xff] %v289
      %322 = vst [vmem:[%s170 + $0x48] sm:$0xff] %v290
      %323 = vst [vmem:[%s170 + $0x50] sm:$0xff] %v291
      %324 = vst [vmem:[%s170 + $0x58] sm:$0xff] %v292
      %325 = vst [vmem:[%s170 + $0x60] sm:$0xff] %v293
      %326 = vst [vmem:[%s170 + $0x68] sm:$0xff] %v294
      %327 = vst [vmem:[%s170 + $0x70] sm:$0xff] %v295
      %328 = vst [vmem:[%s170 + $0x78] sm:$0xff] %v296
      %329 = vst [vmem:[%s170 + $0x80] sm:$0xff] %v297
      %330 = vst [vmem:[%s170 + $0x88] sm:$0xff] %v298
      %331 = vst [vmem:[%s170 + $0x90] sm:$0xff] %v299
      %332 = vst [vmem:[%s170 + $0x98] sm:$0xff] %v300
      %333 = vst [vmem:[%s170 + $0xa0] sm:$0xff] %v301
      %334 = vst [vmem:[%s170 + $0xa8] sm:$0xff] %v302
      %335 = vst [vmem:[%s170 + $0xb0] sm:$0xff] %v303
      %336 = vst [vmem:[%s170 + $0xb8] sm:$0xff] %v304
      %337 = vst [vmem:[%s170 + $0xc0] sm:$0xff] %v305
      %338 = vst [vmem:[%s170 + $0xc8] sm:$0xff] %v306
      %339 = vst [vmem:[%s170 + $0xd0] sm:$0xff] %v307
      %340 = vst [vmem:[%s170 + $0xd8] sm:$0xff] %v308
      %341 = vst [vmem:[%s170 + $0xe0] sm:$0xff] %v309
      %342 = vst [vmem:[%s170 + $0xe8] sm:$0xff] %v310
      %343 = vst [vmem:[%s170 + $0xf0] sm:$0xff] %v311
      %344 = vst [vmem:[%s170 + $0xf8] sm:$0xff] %v312
      %p345 = scmp.lt.s32.totalorder %s14, 1
      %s346 = scalar_select %p345, %s14, 1
      %s347 = smul.addr %s346, 32
      %s348 = smul.addr %s347, 8
      %s349 = scalar_lea.vmem %s3, %s348
      // Predicated region
      $region33: #{double_conv.5} parent=31 // pred_check
        %p350 = pneg %p100
      $region34: #{double_conv.5} parent=31 // pred_check_branch
        %352 = sbr.rel (%p350) target = $region36
      $region35: #{double_conv.5} parent=31 // pred_region
        _
      $region36: #{double_conv.5} parent=31 // pred_fallthru
        _
    $region32: #{double_conv.5} parent=5 // pred_fallthru
      _
    %p353 = scmp.le.s32.totalorder 2, %s9
    // Predicated region
    $region37: #{double_conv.5} parent=5 // pred_check
      %p354 = pneg %p353
    $region38: #{double_conv.5} parent=5 // pred_check_branch
      %356 = sbr.rel (%p354) target = $region40
    $region39: #{double_conv.5} parent=5 // pred_region
      %s357 = ssub.s32 %s9, 2
      // Predicated region
      $region41: #{double_conv.5} parent=39 // pred_check
        %p358 = pneg %p106
      $region42: #{double_conv.5} parent=39 // pred_check_branch
        %360 = sbr.rel (%p358) target = $region44
      $region43: #{double_conv.5} parent=39 // pred_region
        %p361 = scmp.lt.s32.totalorder %s15, 1
        %s362 = scalar_select %p361, %s15, 1
        %s363 = smul.addr %s362, 32
        %s364 = smul.addr %s363, 8
        %s365 = scalar_lea.vmem %s3, %s364
      $region44: #{double_conv.5} parent=39 // pred_fallthru
        _
    $region40: #{double_conv.5} parent=5 // pred_fallthru
      _
  $region6: #{double_conv.5} parent=0 // loop_footer
    %s13 = sadd.s32 1, %s9
  $region7: #{double_conv.5} parent=0 // loop_footer_branch
    %8 = sbr.rel target = $region3
  $region8: #{double_conv.5} parent=0 // loop_exit
    _

// kernel: double_conv.4
$region0: #{double_conv.4}
  #allocation0 [shape = 'u32[]', space=smem, size = 0x4, offset = 0x4, fixed_abs, tag = 'smem constant byte address 0x4 - core index']
  #allocation1 [shape = 'u32[144,128]{1,0:T(1,128)}', space=vmem, size = 0x12000, scoped, tag = 'internal scratch']
  %s0 = inlined_call_operand.vmem [shape: f32[2,1,18,18,4], index: 0, kind: input, shape index: {}]
  %s1 = inlined_call_operand.vmem [shape: f32[36,128], index: 1, kind: input, shape index: {}]
  %s2 = inlined_call_operand.vmem [shape: f32[1,128], index: 2, kind: input, shape index: {}]
  %s3 = inlined_call_operand.vmem [shape: f32[2,1,256,128], index: 3, kind: output, shape index: {0}]
  %s4 = inlined_call_operand.vmem [shape: f32[2,1,2,128], index: 4, kind: output, shape index: {1}]
  %5 = xla_tuple %s3, %s4
  %s6 = sld [smem:[#allocation0]]
  $region53: #{double_conv.4} parent=0
    _
  %s8 = ssub.s32 1, %s6
  %s9 = scalar_select 0, %s8, %s6
  loop: start=0, step=1, limit=4
  $region2: #{double_conv.4} parent=0 // loop_pre_header
    _
  $region3: #{double_conv.4} parent=0 // loop_header
    %s11 = sphi 0, %s15
    %p12 = scmp.ge.s32.totalorder %s11, 4
    %s18 = sphi 0, %s30
    %s19 = sphi 0, %s26
    %s20 = sphi 0, %s18
    %s21 = sphi 0, %s19
    %s22 = sphi 0, %s20
    %s23 = sphi 0, %s21
    %s35 = sphi 0, %s37
    %s38 = sphi 0, %s35
    %s39 = sphi 0, %s38
    %s55 = sphi 0, %s39
    %s59 = sphi 0, %s59
    %s61 = sphi 0, %s59
    %s62 = sphi 0, %s61
    %s76 = sphi 0, %s62
    %s80 = sphi 0, %s80
    %s82 = sphi 0, %s80
    %s83 = sphi 0, %s82
    %s97 = sphi 0, %s83
    %s105 = sphi 0, %s107
    %s108 = sphi 0, %s105
    %s109 = sphi 0, %s108
    %s125 = sphi 0, %s109
    %s133 = sphi 0, %s135
    %s136 = sphi 0, %s133
    %s137 = sphi 0, %s136
    %s153 = sphi 0, %s137
  $region4: #{double_conv.4} parent=0 // loop_header_branch
    %14 = sbr.rel (%p12) target = $region8
  $region5: #{double_conv.4} parent=0 // loop_body
    %s16 = ssub.s32 %s11, 1
    %s17 = ssub.s32 %s11, 2
    %s24 = sadd.s32 1, %s19
    %p25 = scmp.ge.s32.totalorder %s24, 1
    %s26 = scalar_select %p25, 0, %s24
    %s27 = sadd.s32 1, %s18
    %s28 = scalar_select %p25, %s27, %s18
    %p29 = scmp.ge.s32.totalorder %s28, 2
    %s30 = scalar_select %p29, 0, %s28
    %s31 = ssub.s32 %s18, %s30
    %s32 = ssub.s32 %s19, %s26
    %s33 = sor.u32 %s31, %s32
    %p34 = scmp.eq.s32.totalorder %s33, 0
    %s36 = sadd.s32 %s35, 1
    %s37 = scalar_select %p34, %s35, %s36
    %p40 = pneg %p34
    %p41 = scmp.eq.s32.totalorder %s11, 1
    %p42 = por %p40, %p41
    %p43 = scmp.ne.s32.totalorder %s35, %s38
    %p44 = scmp.eq.s32.totalorder %s11, 0
    %p45 = por %p43, %p44
    %p46 = scmp.ne.s32.totalorder %s35, %s38
    %p47 = scmp.eq.s32.totalorder %s16, 1
    %p48 = por %p46, %p47
    %p49 = scmp.ne.s32.totalorder %s38, %s39
    %p50 = scmp.eq.s32.totalorder %s16, 0
    %p51 = por %p49, %p50
    %p52 = scmp.ne.s32.totalorder %s38, %s39
    %p53 = scmp.eq.s32.totalorder %s17, 1
    %p54 = por %p52, %p53
    %p56 = scmp.ne.s32.totalorder %s39, %s55
    %p57 = scmp.eq.s32.totalorder %s17, 0
    %p58 = por %p56, %p57
    %s60 = sadd.s32 %s59, 1
    %p63 = scmp.eq.s32.totalorder %s11, 1
    %p64 = scmp.ne.s32.totalorder %s59, %s61
    %p65 = scmp.eq.s32.totalorder %s11, 0
    %p66 = por %p64, %p65
    %p67 = scmp.ne.s32.totalorder %s59, %s61
    %p68 = scmp.eq.s32.totalorder %s16, 1
    %p69 = por %p67, %p68
    %p70 = scmp.ne.s32.totalorder %s61, %s62
    %p71 = scmp.eq.s32.totalorder %s16, 0
    %p72 = por %p70, %p71
    %p73 = scmp.ne.s32.totalorder %s61, %s62
    %p74 = scmp.eq.s32.totalorder %s17, 1
    %p75 = por %p73, %p74
    %p77 = scmp.ne.s32.totalorder %s62, %s76
    %p78 = scmp.eq.s32.totalorder %s17, 0
    %p79 = por %p77, %p78
    %s81 = sadd.s32 %s80, 1
    %p84 = scmp.eq.s32.totalorder %s11, 1
    %p85 = scmp.ne.s32.totalorder %s80, %s82
    %p86 = scmp.eq.s32.totalorder %s11, 0
    %p87 = por %p85, %p86
    %p88 = scmp.ne.s32.totalorder %s80, %s82
    %p89 = scmp.eq.s32.totalorder %s16, 1
    %p90 = por %p88, %p89
    %p91 = scmp.ne.s32.totalorder %s82, %s83
    %p92 = scmp.eq.s32.totalorder %s16, 0
    %p93 = por %p91, %p92
    %p94 = scmp.ne.s32.totalorder %s82, %s83
    %p95 = scmp.eq.s32.totalorder %s17, 1
    %p96 = por %p94, %p95
    %p98 = scmp.ne.s32.totalorder %s83, %s97
    %p99 = scmp.eq.s32.totalorder %s17, 0
    %p100 = por %p98, %p99
    %s101 = ssub.s32 %s18, %s30
    %s102 = ssub.s32 %s19, %s26
    %s103 = sor.u32 %s101, %s102
    %p104 = scmp.eq.s32.totalorder %s103, 0
    %s106 = sadd.s32 %s105, 1
    %s107 = scalar_select %p104, %s105, %s106
    %p110 = pneg %p104
    %p111 = scmp.eq.s32.totalorder %s11, 1
    %p112 = por %p110, %p111
    %p113 = scmp.ne.s32.totalorder %s105, %s108
    %p114 = scmp.eq.s32.totalorder %s11, 0
    %p115 = por %p113, %p114
    %p116 = scmp.ne.s32.totalorder %s105, %s108
    %p117 = scmp.eq.s32.totalorder %s16, 1
    %p118 = por %p116, %p117
    %p119 = scmp.ne.s32.totalorder %s108, %s109
    %p120 = scmp.eq.s32.totalorder %s16, 0
    %p121 = por %p119, %p120
    %p122 = scmp.ne.s32.totalorder %s108, %s109
    %p123 = scmp.eq.s32.totalorder %s17, 1
    %p124 = por %p122, %p123
    %p126 = scmp.ne.s32.totalorder %s109, %s125
    %p127 = scmp.eq.s32.totalorder %s17, 0
    %p128 = por %p126, %p127
    %s129 = ssub.s32 %s18, %s30
    %s130 = ssub.s32 %s19, %s26
    %s131 = sor.u32 %s129, %s130
    %p132 = scmp.eq.s32.totalorder %s131, 0
    %s134 = sadd.s32 %s133, 1
    %s135 = scalar_select %p132, %s133, %s134
    %p138 = pneg %p132
    %p139 = scmp.eq.s32.totalorder %s11, 1
    %p140 = por %p138, %p139
    %p141 = scmp.ne.s32.totalorder %s133, %s136
    %p142 = scmp.eq.s32.totalorder %s11, 0
    %p143 = por %p141, %p142
    %p144 = scmp.ne.s32.totalorder %s133, %s136
    %p145 = scmp.eq.s32.totalorder %s16, 1
    %p146 = por %p144, %p145
    %p147 = scmp.ne.s32.totalorder %s136, %s137
    %p148 = scmp.eq.s32.totalorder %s16, 0
    %p149 = por %p147, %p148
    %p150 = scmp.ne.s32.totalorder %s136, %s137
    %p151 = scmp.eq.s32.totalorder %s17, 1
    %p152 = por %p150, %p151
    %p154 = scmp.ne.s32.totalorder %s137, %s153
    %p155 = scmp.eq.s32.totalorder %s17, 0
    %p156 = por %p154, %p155
    %p157 = scmp.le.s32.totalorder 1, %s11
    %p158 = scmp.lt.s32.totalorder %s11, 3
    %p159 = pnand %p157, %p158
    %p160 = pneg %p159
    // Predicated region
    $region9: #{double_conv.4} parent=5 // pred_check
      _
    $region10: #{double_conv.4} parent=5 // pred_check_branch
      %162 = sbr.rel (%p159) target = $region12
    $region11: #{double_conv.4} parent=5 // pred_region
      %s163 = ssub.s32 %s11, 1
      // Predicated region
      $region13: #{double_conv.4} parent=11 // pred_check
        %p164 = pneg %p72
      $region14: #{double_conv.4} parent=11 // pred_check_branch
        %166 = sbr.rel (%p164) target = $region16
      $region15: #{double_conv.4} parent=11 // pred_region
        _
      $region16: #{double_conv.4} parent=11 // pred_fallthru
        _
      // Predicated region
      $region17: #{double_conv.4} parent=11 // pred_check
        %p167 = pneg %p93
      $region18: #{double_conv.4} parent=11 // pred_check_branch
        %169 = sbr.rel (%p167) target = $region20
      $region19: #{double_conv.4} parent=11 // pred_region
        _
      $region20: #{double_conv.4} parent=11 // pred_fallthru
        _
    $region12: #{double_conv.4} parent=5 // pred_fallthru
      _
    %p170 = scmp.lt.s32.totalorder %s11, 2
    // Predicated region
    $region21: #{double_conv.4} parent=5 // pred_check
      %p171 = pneg %p170
    $region22: #{double_conv.4} parent=5 // pred_check_branch
      %173 = sbr.rel (%p171) target = $region24
    $region23: #{double_conv.4} parent=5 // pred_region
      // Predicated region
      $region25: #{double_conv.4} parent=23 // pred_check
        %p174 = pneg %p45
      $region26: #{double_conv.4} parent=23 // pred_check_branch
        %176 = sbr.rel (%p174) target = $region28
      $region27: #{double_conv.4} parent=23 // pred_region
        %p177 = scmp.lt.s32.totalorder %s18, 1
        %s178 = scalar_select %p177, %s18, 1
        %p179 = scmp.lt.s32.totalorder %s19, 0
        %s180 = scalar_select %p179, %s19, 0
        %s181 = smul.addr %s180, 54
        %s182 = smul.addr %s178, 54
        %s183 = sadd.s32 %s181, %s182
        %s184 = smul.addr %s183, 8
        %s185 = scalar_lea.vmem %s0, %s184
      $region28: #{double_conv.4} parent=23 // pred_fallthru
        _
    $region24: #{double_conv.4} parent=5 // pred_fallthru
      _
    %p186 = scmp.le.s32.totalorder 1, %s11
    %p187 = scmp.lt.s32.totalorder %s11, 3
    %p188 = pnand %p186, %p187
    %p189 = pneg %p188
    // Predicated region
    $region29: #{double_conv.4} parent=5 // pred_check
      _
    $region30: #{double_conv.4} parent=5 // pred_check_branch
      %191 = sbr.rel (%p188) target = $region32
    $region31: #{double_conv.4} parent=5 // pred_region
      %s192 = ssub.s32 %s11, 1
      %p193 = scmp.lt.s32.totalorder %s20, 1
      %s194 = scalar_select %p193, %s20, 1
      %p195 = scmp.lt.s32.totalorder %s21, 0
      %s196 = scalar_select %p195, %s21, 0
      %s197 = smul.addr %s196, 54
      %s198 = smul.addr %s194, 54
      %s199 = sadd.s32 %s197, %s198
      %s200 = smul.addr %s199, 8
      %s201 = scalar_lea.vmem %s0, %s200
      %p202 = pneg %p51
      %p203 = pneg %p48
      %p204 = pneg %p72
      %p205 = pneg %p69
      %p206 = pneg %p93
      %p207 = pneg %p90
      %p208 = pneg %p121
      %p209 = pneg %p118
      %p210 = scmp.lt.s32.totalorder %s20, 1
      %s211 = scalar_select %p210, %s20, 1
      %p212 = scmp.lt.s32.totalorder %s21, 0
      %s213 = scalar_select %p212, %s21, 0
      %s214 = smul.addr %s213, 32
      %s215 = smul.addr %s211, 32
      %s216 = sadd.s32 %s214, %s215
      %s217 = smul.addr %s216, 8
      %s218 = scalar_lea.vmem %s3, %s217
      %p219 = pneg %p149
      %p220 = pneg %p146
      %p221 = scmp.lt.s32.totalorder %s20, 1
      %s222 = scalar_select %p221, %s20, 1
      %p223 = scmp.lt.s32.totalorder %s21, 0
      %s224 = scalar_select %p223, %s21, 0
      %s225 = sadd.s32 %s224, %s222
      %s226 = smul.addr %s225, 2
      %s227 = scalar_lea.vmem %s4, %s226
      %p228 = scmp.lt.s32.totalorder %s20, 1
      %s229 = scalar_select %p228, %s20, 1
      %p230 = scmp.lt.s32.totalorder %s21, 0
      %s231 = scalar_select %p230, %s21, 0
      %s232 = smul.addr %s231, 54
      %s233 = smul.addr %s229, 54
      %s234 = sadd.s32 %s232, %s233
      %s235 = smul.addr %s234, 8
      %s236 = scalar_lea.vmem %s0, %s235
      %p237 = scmp.lt.s32.totalorder %s20, 1
      %s238 = scalar_select %p237, %s20, 1
      %p239 = scmp.lt.s32.totalorder %s21, 0
      %s240 = scalar_select %p239, %s21, 0
      %s241 = smul.addr %s240, 32
      %s242 = smul.addr %s238, 32
      %s243 = sadd.s32 %s241, %s242
      %s244 = smul.addr %s243, 8
      %s245 = scalar_lea.vmem %s3, %s244
      %p246 = scmp.lt.s32.totalorder %s20, 1
      %s247 = scalar_select %p246, %s20, 1
      %p248 = scmp.lt.s32.totalorder %s21, 0
      %s249 = scalar_select %p248, %s21, 0
      %s250 = sadd.s32 %s249, %s247
      %s251 = smul.addr %s250, 2
      %s252 = scalar_lea.vmem %s4, %s251
      %v253 = vld [vmem:[%s236] sm:$0xff]
      %v254 = vld [vmem:[%s236 + $0x8] sm:$0xff]
      %v255 = vld [vmem:[%s236 + $0x10] sm:$0x3]
      %v256 = vld [vmem:[%s236 + $0x18] sm:$0xff]
      %v257 = vld [vmem:[%s236 + $0x20] sm:$0xff]
      %v258 = vld [vmem:[%s236 + $0x28] sm:$0x3]
      %v259 = vld [vmem:[%s236 + $0x30] sm:$0xff]
      %v260 = vld [vmem:[%s236 + $0x38] sm:$0xff]
      %v261 = vld [vmem:[%s236 + $0x40] sm:$0x3]
      %v262 = vld [vmem:[%s236 + $0x48] sm:$0xff]
      %v263 = vld [vmem:[%s236 + $0x50] sm:$0xff]
      %v264 = vld [vmem:[%s236 + $0x58] sm:$0x3]
      %v265 = vld [vmem:[%s236 + $0x60] sm:$0xff]
      %v266 = vld [vmem:[%s236 + $0x68] sm:$0xff]
      %v267 = vld [vmem:[%s236 + $0x70] sm:$0x3]
      %v268 = vld [vmem:[%s236 + $0x78] sm:$0xff]
      %v269 = vld [vmem:[%s236 + $0x80] sm:$0xff]
      %v270 = vld [vmem:[%s236 + $0x88] sm:$0x3]
      %v271 = vld [vmem:[%s236 + $0x90] sm:$0xff]
      %v272 = vld [vmem:[%s236 + $0x98] sm:$0xff]
      %v273 = vld [vmem:[%s236 + $0xa0] sm:$0x3]
      %v274 = vld [vmem:[%s236 + $0xa8] sm:$0xff]
      %v275 = vld [vmem:[%s236 + $0xb0] sm:$0xff]
      %v276 = vld [vmem:[%s236 + $0xb8] sm:$0x3]
      %v277 = vld [vmem:[%s236 + $0xc0] sm:$0xff]
      %v278 = vld [vmem:[%s236 + $0xc8] sm:$0xff]
      %v279 = vld [vmem:[%s236 + $0xd0] sm:$0x3]
      %v280 = vld [vmem:[%s236 + $0xd8] sm:$0xff]
      %v281 = vld [vmem:[%s236 + $0xe0] sm:$0xff]
      %v282 = vld [vmem:[%s236 + $0xe8] sm:$0x3]
      %v283 = vld [vmem:[%s236 + $0xf0] sm:$0xff]
      %v284 = vld [vmem:[%s236 + $0xf8] sm:$0xff]
      %v285 = vld [vmem:[%s236 + $0x100] sm:$0x3]
      %v286 = vld [vmem:[%s236 + $0x108] sm:$0xff]
      %v287 = vld [vmem:[%s236 + $0x110] sm:$0xff]
      %v288 = vld [vmem:[%s236 + $0x118] sm:$0x3]
      %v289 = vld [vmem:[%s236 + $0x120] sm:$0xff]
      %v290 = vld [vmem:[%s236 + $0x128] sm:$0xff]
      %v291 = vld [vmem:[%s236 + $0x130] sm:$0x3]
      %v292 = vld [vmem:[%s236 + $0x138] sm:$0xff]
      %v293 = vld [vmem:[%s236 + $0x140] sm:$0xff]
      %v294 = vld [vmem:[%s236 + $0x148] sm:$0x3]
      %v295 = vld [vmem:[%s236 + $0x150] sm:$0xff]
      %v296 = vld [vmem:[%s236 + $0x158] sm:$0xff]
      %v297 = vld [vmem:[%s236 + $0x160] sm:$0x3]
      %v298 = vld [vmem:[%s236 + $0x168] sm:$0xff]
      %v299 = vld [vmem:[%s236 + $0x170] sm:$0xff]
      %v300 = vld [vmem:[%s236 + $0x178] sm:$0x3]
      %v301 = vld [vmem:[%s236 + $0x180] sm:$0xff]
      %v302 = vld [vmem:[%s236 + $0x188] sm:$0xff]
      %v303 = vld [vmem:[%s236 + $0x190] sm:$0x3]
      %v304 = vld [vmem:[%s236 + $0x198] sm:$0xff]
      %v305 = vld [vmem:[%s236 + $0x1a0] sm:$0xff]
      %v306 = vld [vmem:[%s236 + $0x1a8] sm:$0x3]
      %vm355 = vcmask 1046528
      %v356 = vrot.slane %v253, 1
      %v357 = vrot.slane %v254, 1
      %v358 = vsel %vm355, %v356, %v357
      %v359 = vrot.slane %v255, 1
      %v360 = vsel %vm355, %v357, %v359
      %v361 = vrot.slane %v256, 1
      %v362 = vrot.slane %v257, 1
      %v363 = vsel %vm355, %v361, %v362
      %v364 = vrot.slane %v258, 1
      %v365 = vsel %vm355, %v362, %v364
      %v366 = vrot.slane %v259, 1
      %v367 = vrot.slane %v260, 1
      %v368 = vsel %vm355, %v366, %v367
      %v369 = vrot.slane %v261, 1
      %v370 = vsel %vm355, %v367, %v369
      %v371 = vrot.slane %v262, 1
      %v372 = vrot.slane %v263, 1
      %v373 = vsel %vm355, %v371, %v372
      %v374 = vrot.slane %v264, 1
      %v375 = vsel %vm355, %v372, %v374
      %v376 = vrot.slane %v265, 1
      %v377 = vrot.slane %v266, 1
      %v378 = vsel %vm355, %v376, %v377
      %v379 = vrot.slane %v267, 1
      %v380 = vsel %vm355, %v377, %v379
      %v381 = vrot.slane %v268, 1
      %v382 = vrot.slane %v269, 1
      %v383 = vsel %vm355, %v381, %v382
      %v384 = vrot.slane %v270, 1
      %v385 = vsel %vm355, %v382, %v384
      %v386 = vrot.slane %v271, 1
      %v387 = vrot.slane %v272, 1
      %v388 = vsel %vm355, %v386, %v387
      %v389 = vrot.slane %v273, 1
      %v390 = vsel %vm355, %v387, %v389
      %v391 = vrot.slane %v274, 1
      %v392 = vrot.slane %v275, 1
      %v393 = vsel %vm355, %v391, %v392
      %v394 = vrot.slane %v276, 1
      %v395 = vsel %vm355, %v392, %v394
      %v396 = vrot.slane %v277, 1
      %v397 = vrot.slane %v278, 1
      %v398 = vsel %vm355, %v396, %v397
      %v399 = vrot.slane %v279, 1
      %v400 = vsel %vm355, %v397, %v399
      %v401 = vrot.slane %v280, 1
      %v402 = vrot.slane %v281, 1
      %v403 = vsel %vm355, %v401, %v402
      %v404 = vrot.slane %v282, 1
      %v405 = vsel %vm355, %v402, %v404
      %v406 = vrot.slane %v283, 1
      %v407 = vrot.slane %v284, 1
      %v408 = vsel %vm355, %v406, %v407
      %v409 = vrot.slane %v285, 1
      %v410 = vsel %vm355, %v407, %v409
      %v411 = vrot.slane %v286, 1
      %v412 = vrot.slane %v287, 1
      %v413 = vsel %vm355, %v411, %v412
      %v414 = vrot.slane %v288, 1
      %v415 = vsel %vm355, %v412, %v414
      %v416 = vrot.slane %v289, 1
      %v417 = vrot.slane %v290, 1
      %v418 = vsel %vm355, %v416, %v417
      %v419 = vrot.slane %v291, 1
      %v420 = vsel %vm355, %v417, %v419
      %v421 = vrot.slane %v292, 1
      %v422 = vrot.slane %v293, 1
      %v423 = vsel %vm355, %v421, %v422
      %v424 = vrot.slane %v294, 1
      %v425 = vsel %vm355, %v422, %v424
      %v426 = vrot.slane %v295, 1
      %v427 = vrot.slane %v296, 1
      %v428 = vsel %vm355, %v426, %v427
      %v429 = vrot.slane %v297, 1
      %v430 = vsel %vm355, %v427, %v429
      %v431 = vrot.slane %v298, 1
      %v432 = vrot.slane %v299, 1
      %v433 = vsel %vm355, %v431, %v432
      %v434 = vrot.slane %v300, 1
      %v435 = vsel %vm355, %v432, %v434
      %vm436 = vcmask 1045504
      %v437 = vrot.slane %v253, 2
      %v438 = vrot.slane %v254, 2
      %v439 = vsel %vm436, %v437, %v438
      %v440 = vrot.slane %v255, 2
      %v441 = vsel %vm436, %v438, %v440
      %v442 = vrot.slane %v256, 2
      %v443 = vrot.slane %v257, 2
      %v444 = vsel %vm436, %v442, %v443
      %v445 = vrot.slane %v258, 2
      %v446 = vsel %vm436, %v443, %v445
      %v447 = vrot.slane %v259, 2
      %v448 = vrot.slane %v260, 2
      %v449 = vsel %vm436, %v447, %v448
      %v450 = vrot.slane %v261, 2
      %v451 = vsel %vm436, %v448, %v450
      %v452 = vrot.slane %v262, 2
      %v453 = vrot.slane %v263, 2
      %v454 = vsel %vm436, %v452, %v453
      %v455 = vrot.slane %v264, 2
      %v456 = vsel %vm436, %v453, %v455
      %v457 = vrot.slane %v265, 2
      %v458 = vrot.slane %v266, 2
      %v459 = vsel %vm436, %v457, %v458
      %v460 = vrot.slane %v267, 2
      %v461 = vsel %vm436, %v458, %v460
      %v462 = vrot.slane %v268, 2
      %v463 = vrot.slane %v269, 2
      %v464 = vsel %vm436, %v462, %v463
      %v465 = vrot.slane %v270, 2
      %v466 = vsel %vm436, %v463, %v465
      %v467 = vrot.slane %v271, 2
      %v468 = vrot.slane %v272, 2
      %v469 = vsel %vm436, %v467, %v468
      %v470 = vrot.slane %v273, 2
      %v471 = vsel %vm436, %v468, %v470
      %v472 = vrot.slane %v274, 2
      %v473 = vrot.slane %v275, 2
      %v474 = vsel %vm436, %v472, %v473
      %v475 = vrot.slane %v276, 2
      %v476 = vsel %vm436, %v473, %v475
      %v477 = vrot.slane %v277, 2
      %v478 = vrot.slane %v278, 2
      %v479 = vsel %vm436, %v477, %v478
      %v480 = vrot.slane %v279, 2
      %v481 = vsel %vm436, %v478, %v480
      %v482 = vrot.slane %v280, 2
      %v483 = vrot.slane %v281, 2
      %v484 = vsel %vm436, %v482, %v483
      %v485 = vrot.slane %v282, 2
      %v486 = vsel %vm436, %v483, %v485
      %v487 = vrot.slane %v283, 2
      %v488 = vrot.slane %v284, 2
      %v489 = vsel %vm436, %v487, %v488
      %v490 = vrot.slane %v285, 2
      %v491 = vsel %vm436, %v488, %v490
      %v492 = vrot.slane %v286, 2
      %v493 = vrot.slane %v287, 2
      %v494 = vsel %vm436, %v492, %v493
      %v495 = vrot.slane %v288, 2
      %v496 = vsel %vm436, %v493, %v495
      %v497 = vrot.slane %v289, 2
      %v498 = vrot.slane %v290, 2
      %v499 = vsel %vm436, %v497, %v498
      %v500 = vrot.slane %v291, 2
      %v501 = vsel %vm436, %v498, %v500
      %v502 = vrot.slane %v292, 2
      %v503 = vrot.slane %v293, 2
      %v504 = vsel %vm436, %v502, %v503
      %v505 = vrot.slane %v294, 2
      %v506 = vsel %vm436, %v503, %v505
      %v507 = vrot.slane %v295, 2
      %v508 = vrot.slane %v296, 2
      %v509 = vsel %vm436, %v507, %v508
      %v510 = vrot.slane %v297, 2
      %v511 = vsel %vm436, %v508, %v510
      %v512 = vrot.slane %v298, 2
      %v513 = vrot.slane %v299, 2
      %v514 = vsel %vm436, %v512, %v513
      %v515 = vrot.slane %v300, 2
      %v516 = vsel %vm436, %v513, %v515
      %v520 = vrot.slane %v301, 1
      %v521 = vrot.slane %v302, 1
      %v522 = vsel %vm355, %v520, %v521
      %v523 = vrot.slane %v303, 1
      %v524 = vsel %vm355, %v521, %v523
      %v525 = vrot.slane %v301, 2
      %v526 = vrot.slane %v302, 2
      %v527 = vsel %vm436, %v525, %v526
      %v528 = vrot.slane %v303, 2
      %v529 = vsel %vm436, %v526, %v528
      %v533 = vrot.slane %v304, 1
      %v534 = vrot.slane %v305, 1
      %v535 = vsel %vm355, %v533, %v534
      %v536 = vrot.slane %v306, 1
      %v537 = vsel %vm355, %v534, %v536
      %v538 = vrot.slane %v304, 2
      %v539 = vrot.slane %v305, 2
      %v540 = vsel %vm436, %v538, %v539
      %v541 = vrot.slane %v306, 2
      %v542 = vsel %vm436, %v539, %v541
      %543 = vrot.lane.b32.xlu0 %v358, 4
      %v544 = vpop.permute.xlu0 %543
      %545 = vrot.lane.b32.xlu0 %v360, 4
      %v546 = vpop.permute.xlu0 %545
      %547 = vrot.lane.b32.xlu0 %v363, 4
      %v548 = vpop.permute.xlu0 %547
      %549 = vrot.lane.b32.xlu0 %v365, 4
      %v550 = vpop.permute.xlu0 %549
      %551 = vrot.lane.b32.xlu0 %v368, 4
      %v552 = vpop.permute.xlu0 %551
      %553 = vrot.lane.b32.xlu0 %v370, 4
      %v554 = vpop.permute.xlu0 %553
      %555 = vrot.lane.b32.xlu0 %v373, 4
      %v556 = vpop.permute.xlu0 %555
      %557 = vrot.lane.b32.xlu0 %v375, 4
      %v558 = vpop.permute.xlu0 %557
      %559 = vrot.lane.b32.xlu0 %v378, 4
      %v560 = vpop.permute.xlu0 %559
      %561 = vrot.lane.b32.xlu0 %v380, 4
      %v562 = vpop.permute.xlu0 %561
      %563 = vrot.lane.b32.xlu0 %v383, 4
      %v564 = vpop.permute.xlu0 %563
      %565 = vrot.lane.b32.xlu0 %v385, 4
      %v566 = vpop.permute.xlu0 %565
      %567 = vrot.lane.b32.xlu0 %v388, 4
      %v568 = vpop.permute.xlu0 %567
      %569 = vrot.lane.b32.xlu0 %v390, 4
      %v570 = vpop.permute.xlu0 %569
      %571 = vrot.lane.b32.xlu0 %v393, 4
      %v572 = vpop.permute.xlu0 %571
      %573 = vrot.lane.b32.xlu0 %v395, 4
      %v574 = vpop.permute.xlu0 %573
      %575 = vrot.lane.b32.xlu0 %v398, 4
      %v576 = vpop.permute.xlu0 %575
      %577 = vrot.lane.b32.xlu0 %v400, 4
      %v578 = vpop.permute.xlu0 %577
      %579 = vrot.lane.b32.xlu0 %v403, 4
      %v580 = vpop.permute.xlu0 %579
      %581 = vrot.lane.b32.xlu0 %v405, 4
      %v582 = vpop.permute.xlu0 %581
      %583 = vrot.lane.b32.xlu0 %v408, 4
      %v584 = vpop.permute.xlu0 %583
      %585 = vrot.lane.b32.xlu0 %v410, 4
      %v586 = vpop.permute.xlu0 %585
      %587 = vrot.lane.b32.xlu0 %v413, 4
      %v588 = vpop.permute.xlu0 %587
      %589 = vrot.lane.b32.xlu0 %v415, 4
      %v590 = vpop.permute.xlu0 %589
      %591 = vrot.lane.b32.xlu0 %v418, 4
      %v592 = vpop.permute.xlu0 %591
      %593 = vrot.lane.b32.xlu0 %v420, 4
      %v594 = vpop.permute.xlu0 %593
      %595 = vrot.lane.b32.xlu0 %v423, 4
      %v596 = vpop.permute.xlu0 %595
      %597 = vrot.lane.b32.xlu0 %v425, 4
      %v598 = vpop.permute.xlu0 %597
      %599 = vrot.lane.b32.xlu0 %v428, 4
      %v600 = vpop.permute.xlu0 %599
      %601 = vrot.lane.b32.xlu0 %v430, 4
      %v602 = vpop.permute.xlu0 %601
      %603 = vrot.lane.b32.xlu0 %v433, 4
      %v604 = vpop.permute.xlu0 %603
      %605 = vrot.lane.b32.xlu0 %v435, 4
      %v606 = vpop.permute.xlu0 %605
      %639 = vrot.lane.b32.xlu0 %v439, 8
      %v640 = vpop.permute.xlu0 %639
      %641 = vrot.lane.b32.xlu0 %v441, 8
      %v642 = vpop.permute.xlu0 %641
      %643 = vrot.lane.b32.xlu0 %v444, 8
      %v644 = vpop.permute.xlu0 %643
      %645 = vrot.lane.b32.xlu0 %v446, 8
      %v646 = vpop.permute.xlu0 %645
      %647 = vrot.lane.b32.xlu0 %v449, 8
      %v648 = vpop.permute.xlu0 %647
      %649 = vrot.lane.b32.xlu0 %v451, 8
      %v650 = vpop.permute.xlu0 %649
      %651 = vrot.lane.b32.xlu0 %v454, 8
      %v652 = vpop.permute.xlu0 %651
      %653 = vrot.lane.b32.xlu0 %v456, 8
      %v654 = vpop.permute.xlu0 %653
      %655 = vrot.lane.b32.xlu0 %v459, 8
      %v656 = vpop.permute.xlu0 %655
      %657 = vrot.lane.b32.xlu0 %v461, 8
      %v658 = vpop.permute.xlu0 %657
      %659 = vrot.lane.b32.xlu0 %v464, 8
      %v660 = vpop.permute.xlu0 %659
      %661 = vrot.lane.b32.xlu0 %v466, 8
      %v662 = vpop.permute.xlu0 %661
      %663 = vrot.lane.b32.xlu0 %v469, 8
      %v664 = vpop.permute.xlu0 %663
      %665 = vrot.lane.b32.xlu0 %v471, 8
      %v666 = vpop.permute.xlu0 %665
      %667 = vrot.lane.b32.xlu0 %v474, 8
      %v668 = vpop.permute.xlu0 %667
      %669 = vrot.lane.b32.xlu0 %v476, 8
      %v670 = vpop.permute.xlu0 %669
      %671 = vrot.lane.b32.xlu0 %v479, 8
      %v672 = vpop.permute.xlu0 %671
      %673 = vrot.lane.b32.xlu0 %v481, 8
      %v674 = vpop.permute.xlu0 %673
      %675 = vrot.lane.b32.xlu0 %v484, 8
      %v676 = vpop.permute.xlu0 %675
      %677 = vrot.lane.b32.xlu0 %v486, 8
      %v678 = vpop.permute.xlu0 %677
      %679 = vrot.lane.b32.xlu0 %v489, 8
      %v680 = vpop.permute.xlu0 %679
      %681 = vrot.lane.b32.xlu0 %v491, 8
      %v682 = vpop.permute.xlu0 %681
      %683 = vrot.lane.b32.xlu0 %v494, 8
      %v684 = vpop.permute.xlu0 %683
      %685 = vrot.lane.b32.xlu0 %v496, 8
      %v686 = vpop.permute.xlu0 %685
      %687 = vrot.lane.b32.xlu0 %v499, 8
      %v688 = vpop.permute.xlu0 %687
      %689 = vrot.lane.b32.xlu0 %v501, 8
      %v690 = vpop.permute.xlu0 %689
      %691 = vrot.lane.b32.xlu0 %v504, 8
      %v692 = vpop.permute.xlu0 %691
      %693 = vrot.lane.b32.xlu0 %v506, 8
      %v694 = vpop.permute.xlu0 %693
      %695 = vrot.lane.b32.xlu0 %v509, 8
      %v696 = vpop.permute.xlu0 %695
      %697 = vrot.lane.b32.xlu0 %v511, 8
      %v698 = vpop.permute.xlu0 %697
      %699 = vrot.lane.b32.xlu0 %v514, 8
      %v700 = vpop.permute.xlu0 %699
      %701 = vrot.lane.b32.xlu0 %v516, 8
      %v702 = vpop.permute.xlu0 %701
      %735 = vrot.lane.b32.xlu0 %v256, 12
      %v736 = vpop.permute.xlu0 %735
      %737 = vrot.lane.b32.xlu0 %v257, 12
      %v738 = vpop.permute.xlu0 %737
      %739 = vrot.lane.b32.xlu0 %v259, 12
      %v740 = vpop.permute.xlu0 %739
      %741 = vrot.lane.b32.xlu0 %v260, 12
      %v742 = vpop.permute.xlu0 %741
      %743 = vrot.lane.b32.xlu0 %v262, 12
      %v744 = vpop.permute.xlu0 %743
      %745 = vrot.lane.b32.xlu0 %v263, 12
      %v746 = vpop.permute.xlu0 %745
      %747 = vrot.lane.b32.xlu0 %v265, 12
      %v748 = vpop.permute.xlu0 %747
      %749 = vrot.lane.b32.xlu0 %v266, 12
      %v750 = vpop.permute.xlu0 %749
      %751 = vrot.lane.b32.xlu0 %v268, 12
      %v752 = vpop.permute.xlu0 %751
      %753 = vrot.lane.b32.xlu0 %v269, 12
      %v754 = vpop.permute.xlu0 %753
      %755 = vrot.lane.b32.xlu0 %v271, 12
      %v756 = vpop.permute.xlu0 %755
      %757 = vrot.lane.b32.xlu0 %v272, 12
      %v758 = vpop.permute.xlu0 %757
      %759 = vrot.lane.b32.xlu0 %v274, 12
      %v760 = vpop.permute.xlu0 %759
      %761 = vrot.lane.b32.xlu0 %v275, 12
      %v762 = vpop.permute.xlu0 %761
      %763 = vrot.lane.b32.xlu0 %v277, 12
      %v764 = vpop.permute.xlu0 %763
      %765 = vrot.lane.b32.xlu0 %v278, 12
      %v766 = vpop.permute.xlu0 %765
      %767 = vrot.lane.b32.xlu0 %v280, 12
      %v768 = vpop.permute.xlu0 %767
      %769 = vrot.lane.b32.xlu0 %v281, 12
      %v770 = vpop.permute.xlu0 %769
      %771 = vrot.lane.b32.xlu0 %v283, 12
      %v772 = vpop.permute.xlu0 %771
      %773 = vrot.lane.b32.xlu0 %v284, 12
      %v774 = vpop.permute.xlu0 %773
      %775 = vrot.lane.b32.xlu0 %v286, 12
      %v776 = vpop.permute.xlu0 %775
      %777 = vrot.lane.b32.xlu0 %v287, 12
      %v778 = vpop.permute.xlu0 %777
      %779 = vrot.lane.b32.xlu0 %v289, 12
      %v780 = vpop.permute.xlu0 %779
      %781 = vrot.lane.b32.xlu0 %v290, 12
      %v782 = vpop.permute.xlu0 %781
      %783 = vrot.lane.b32.xlu0 %v292, 12
      %v784 = vpop.permute.xlu0 %783
      %785 = vrot.lane.b32.xlu0 %v293, 12
      %v786 = vpop.permute.xlu0 %785
      %787 = vrot.lane.b32.xlu0 %v295, 12
      %v788 = vpop.permute.xlu0 %787
      %789 = vrot.lane.b32.xlu0 %v296, 12
      %v790 = vpop.permute.xlu0 %789
      %791 = vrot.lane.b32.xlu0 %v298, 12
      %v792 = vpop.permute.xlu0 %791
      %793 = vrot.lane.b32.xlu0 %v299, 12
      %v794 = vpop.permute.xlu0 %793
      %795 = vrot.lane.b32.xlu0 %v301, 12
      %v796 = vpop.permute.xlu0 %795
      %797 = vrot.lane.b32.xlu0 %v302, 12
      %v798 = vpop.permute.xlu0 %797
      %831 = vrot.lane.b32.xlu0 %v363, 16
      %v832 = vpop.permute.xlu0 %831
      %833 = vrot.lane.b32.xlu0 %v365, 16
      %v834 = vpop.permute.xlu0 %833
      %835 = vrot.lane.b32.xlu0 %v368, 16
      %v836 = vpop.permute.xlu0 %835
      %837 = vrot.lane.b32.xlu0 %v370, 16
      %v838 = vpop.permute.xlu0 %837
      %839 = vrot.lane.b32.xlu0 %v373, 16
      %v840 = vpop.permute.xlu0 %839
      %841 = vrot.lane.b32.xlu0 %v375, 16
      %v842 = vpop.permute.xlu0 %841
      %843 = vrot.lane.b32.xlu0 %v378, 16
      %v844 = vpop.permute.xlu0 %843
      %845 = vrot.lane.b32.xlu0 %v380, 16
      %v846 = vpop.permute.xlu0 %845
      %847 = vrot.lane.b32.xlu0 %v383, 16
      %v848 = vpop.permute.xlu0 %847
      %849 = vrot.lane.b32.xlu0 %v385, 16
      %v850 = vpop.permute.xlu0 %849
      %851 = vrot.lane.b32.xlu0 %v388, 16
      %v852 = vpop.permute.xlu0 %851
      %853 = vrot.lane.b32.xlu0 %v390, 16
      %v854 = vpop.permute.xlu0 %853
      %855 = vrot.lane.b32.xlu0 %v393, 16
      %v856 = vpop.permute.xlu0 %855
      %857 = vrot.lane.b32.xlu0 %v395, 16
      %v858 = vpop.permute.xlu0 %857
      %859 = vrot.lane.b32.xlu0 %v398, 16
      %v860 = vpop.permute.xlu0 %859
      %861 = vrot.lane.b32.xlu0 %v400, 16
      %v862 = vpop.permute.xlu0 %861
      %863 = vrot.lane.b32.xlu0 %v403, 16
      %v864 = vpop.permute.xlu0 %863
      %865 = vrot.lane.b32.xlu0 %v405, 16
      %v866 = vpop.permute.xlu0 %865
      %867 = vrot.lane.b32.xlu0 %v408, 16
      %v868 = vpop.permute.xlu0 %867
      %869 = vrot.lane.b32.xlu0 %v410, 16
      %v870 = vpop.permute.xlu0 %869
      %871 = vrot.lane.b32.xlu0 %v413, 16
      %v872 = vpop.permute.xlu0 %871
      %873 = vrot.lane.b32.xlu0 %v415, 16
      %v874 = vpop.permute.xlu0 %873
      %875 = vrot.lane.b32.xlu0 %v418, 16
      %v876 = vpop.permute.xlu0 %875
      %877 = vrot.lane.b32.xlu0 %v420, 16
      %v878 = vpop.permute.xlu0 %877
      %879 = vrot.lane.b32.xlu0 %v423, 16
      %v880 = vpop.permute.xlu0 %879
      %881 = vrot.lane.b32.xlu0 %v425, 16
      %v882 = vpop.permute.xlu0 %881
      %883 = vrot.lane.b32.xlu0 %v428, 16
      %v884 = vpop.permute.xlu0 %883
      %885 = vrot.lane.b32.xlu0 %v430, 16
      %v886 = vpop.permute.xlu0 %885
      %887 = vrot.lane.b32.xlu0 %v433, 16
      %v888 = vpop.permute.xlu0 %887
      %889 = vrot.lane.b32.xlu0 %v435, 16
      %v890 = vpop.permute.xlu0 %889
      %891 = vrot.lane.b32.xlu0 %v522, 16
      %v892 = vpop.permute.xlu0 %891
      %893 = vrot.lane.b32.xlu0 %v524, 16
      %v894 = vpop.permute.xlu0 %893
      %927 = vrot.lane.b32.xlu0 %v444, 20
      %v928 = vpop.permute.xlu0 %927
      %929 = vrot.lane.b32.xlu0 %v446, 20
      %v930 = vpop.permute.xlu0 %929
      %931 = vrot.lane.b32.xlu0 %v449, 20
      %v932 = vpop.permute.xlu0 %931
      %933 = vrot.lane.b32.xlu0 %v451, 20
      %v934 = vpop.permute.xlu0 %933
      %935 = vrot.lane.b32.xlu0 %v454, 20
      %v936 = vpop.permute.xlu0 %935
      %937 = vrot.lane.b32.xlu0 %v456, 20
      %v938 = vpop.permute.xlu0 %937
      %939 = vrot.lane.b32.xlu0 %v459, 20
      %v940 = vpop.permute.xlu0 %939
      %941 = vrot.lane.b32.xlu0 %v461, 20
      %v942 = vpop.permute.xlu0 %941
      %943 = vrot.lane.b32.xlu0 %v464, 20
      %v944 = vpop.permute.xlu0 %943
      %945 = vrot.lane.b32.xlu0 %v466, 20
      %v946 = vpop.permute.xlu0 %945
      %947 = vrot.lane.b32.xlu0 %v469, 20
      %v948 = vpop.permute.xlu0 %947
      %949 = vrot.lane.b32.xlu0 %v471, 20
      %v950 = vpop.permute.xlu0 %949
      %951 = vrot.lane.b32.xlu0 %v474, 20
      %v952 = vpop.permute.xlu0 %951
      %953 = vrot.lane.b32.xlu0 %v476, 20
      %v954 = vpop.permute.xlu0 %953
      %955 = vrot.lane.b32.xlu0 %v479, 20
      %v956 = vpop.permute.xlu0 %955
      %957 = vrot.lane.b32.xlu0 %v481, 20
      %v958 = vpop.permute.xlu0 %957
      %959 = vrot.lane.b32.xlu0 %v484, 20
      %v960 = vpop.permute.xlu0 %959
      %961 = vrot.lane.b32.xlu0 %v486, 20
      %v962 = vpop.permute.xlu0 %961
      %963 = vrot.lane.b32.xlu0 %v489, 20
      %v964 = vpop.permute.xlu0 %963
      %965 = vrot.lane.b32.xlu0 %v491, 20
      %v966 = vpop.permute.xlu0 %965
      %967 = vrot.lane.b32.xlu0 %v494, 20
      %v968 = vpop.permute.xlu0 %967
      %969 = vrot.lane.b32.xlu0 %v496, 20
      %v970 = vpop.permute.xlu0 %969
      %971 = vrot.lane.b32.xlu0 %v499, 20
      %v972 = vpop.permute.xlu0 %971
      %973 = vrot.lane.b32.xlu0 %v501, 20
      %v974 = vpop.permute.xlu0 %973
      %975 = vrot.lane.b32.xlu0 %v504, 20
      %v976 = vpop.permute.xlu0 %975
      %977 = vrot.lane.b32.xlu0 %v506, 20
      %v978 = vpop.permute.xlu0 %977
      %979 = vrot.lane.b32.xlu0 %v509, 20
      %v980 = vpop.permute.xlu0 %979
      %981 = vrot.lane.b32.xlu0 %v511, 20
      %v982 = vpop.permute.xlu0 %981
      %983 = vrot.lane.b32.xlu0 %v514, 20
      %v984 = vpop.permute.xlu0 %983
      %985 = vrot.lane.b32.xlu0 %v516, 20
      %v986 = vpop.permute.xlu0 %985
      %987 = vrot.lane.b32.xlu0 %v527, 20
      %v988 = vpop.permute.xlu0 %987
      %989 = vrot.lane.b32.xlu0 %v529, 20
      %v990 = vpop.permute.xlu0 %989
      %1023 = vrot.lane.b32.xlu0 %v259, 24
      %v1024 = vpop.permute.xlu0 %1023
      %1025 = vrot.lane.b32.xlu0 %v260, 24
      %v1026 = vpop.permute.xlu0 %1025
      %1027 = vrot.lane.b32.xlu0 %v262, 24
      %v1028 = vpop.permute.xlu0 %1027
      %1029 = vrot.lane.b32.xlu0 %v263, 24
      %v1030 = vpop.permute.xlu0 %1029
      %1031 = vrot.lane.b32.xlu0 %v265, 24
      %v1032 = vpop.permute.xlu0 %1031
      %1033 = vrot.lane.b32.xlu0 %v266, 24
      %v1034 = vpop.permute.xlu0 %1033
      %1035 = vrot.lane.b32.xlu0 %v268, 24
      %v1036 = vpop.permute.xlu0 %1035
      %1037 = vrot.lane.b32.xlu0 %v269, 24
      %v1038 = vpop.permute.xlu0 %1037
      %1039 = vrot.lane.b32.xlu0 %v271, 24
      %v1040 = vpop.permute.xlu0 %1039
      %1041 = vrot.lane.b32.xlu0 %v272, 24
      %v1042 = vpop.permute.xlu0 %1041
      %1043 = vrot.lane.b32.xlu0 %v274, 24
      %v1044 = vpop.permute.xlu0 %1043
      %1045 = vrot.lane.b32.xlu0 %v275, 24
      %v1046 = vpop.permute.xlu0 %1045
      %1047 = vrot.lane.b32.xlu0 %v277, 24
      %v1048 = vpop.permute.xlu0 %1047
      %1049 = vrot.lane.b32.xlu0 %v278, 24
      %v1050 = vpop.permute.xlu0 %1049
      %1051 = vrot.lane.b32.xlu0 %v280, 24
      %v1052 = vpop.permute.xlu0 %1051
      %1053 = vrot.lane.b32.xlu0 %v281, 24
      %v1054 = vpop.permute.xlu0 %1053
      %1055 = vrot.lane.b32.xlu0 %v283, 24
      %v1056 = vpop.permute.xlu0 %1055
      %1057 = vrot.lane.b32.xlu0 %v284, 24
      %v1058 = vpop.permute.xlu0 %1057
      %1059 = vrot.lane.b32.xlu0 %v286, 24
      %v1060 = vpop.permute.xlu0 %1059
      %1061 = vrot.lane.b32.xlu0 %v287, 24
      %v1062 = vpop.permute.xlu0 %1061
      %1063 = vrot.lane.b32.xlu0 %v289, 24
      %v1064 = vpop.permute.xlu0 %1063
      %1065 = vrot.lane.b32.xlu0 %v290, 24
      %v1066 = vpop.permute.xlu0 %1065
      %1067 = vrot.lane.b32.xlu0 %v292, 24
      %v1068 = vpop.permute.xlu0 %1067
      %1069 = vrot.lane.b32.xlu0 %v293, 24
      %v1070 = vpop.permute.xlu0 %1069
      %1071 = vrot.lane.b32.xlu0 %v295, 24
      %v1072 = vpop.permute.xlu0 %1071
      %1073 = vrot.lane.b32.xlu0 %v296, 24
      %v1074 = vpop.permute.xlu0 %1073
      %1075 = vrot.lane.b32.xlu0 %v298, 24
      %v1076 = vpop.permute.xlu0 %1075
      %1077 = vrot.lane.b32.xlu0 %v299, 24
      %v1078 = vpop.permute.xlu0 %1077
      %1079 = vrot.lane.b32.xlu0 %v301, 24
      %v1080 = vpop.permute.xlu0 %1079
      %1081 = vrot.lane.b32.xlu0 %v302, 24
      %v1082 = vpop.permute.xlu0 %1081
      %1083 = vrot.lane.b32.xlu0 %v304, 24
      %v1084 = vpop.permute.xlu0 %1083
      %1085 = vrot.lane.b32.xlu0 %v305, 24
      %v1086 = vpop.permute.xlu0 %1085
      %1119 = vrot.lane.b32.xlu0 %v368, 28
      %v1120 = vpop.permute.xlu0 %1119
      %1121 = vrot.lane.b32.xlu0 %v370, 28
      %v1122 = vpop.permute.xlu0 %1121
      %1123 = vrot.lane.b32.xlu0 %v373, 28
      %v1124 = vpop.permute.xlu0 %1123
      %1125 = vrot.lane.b32.xlu0 %v375, 28
      %v1126 = vpop.permute.xlu0 %1125
      %1127 = vrot.lane.b32.xlu0 %v378, 28
      %v1128 = vpop.permute.xlu0 %1127
      %1129 = vrot.lane.b32.xlu0 %v380, 28
      %v1130 = vpop.permute.xlu0 %1129
      %1131 = vrot.lane.b32.xlu0 %v383, 28
      %v1132 = vpop.permute.xlu0 %1131
      %1133 = vrot.lane.b32.xlu0 %v385, 28
      %v1134 = vpop.permute.xlu0 %1133
      %1135 = vrot.lane.b32.xlu0 %v388, 28
      %v1136 = vpop.permute.xlu0 %1135
      %1137 = vrot.lane.b32.xlu0 %v390, 28
      %v1138 = vpop.permute.xlu0 %1137
      %1139 = vrot.lane.b32.xlu0 %v393, 28
      %v1140 = vpop.permute.xlu0 %1139
      %1141 = vrot.lane.b32.xlu0 %v395, 28
      %v1142 = vpop.permute.xlu0 %1141
      %1143 = vrot.lane.b32.xlu0 %v398, 28
      %v1144 = vpop.permute.xlu0 %1143
      %1145 = vrot.lane.b32.xlu0 %v400, 28
      %v1146 = vpop.permute.xlu0 %1145
      %1147 = vrot.lane.b32.xlu0 %v403, 28
      %v1148 = vpop.permute.xlu0 %1147
      %1149 = vrot.lane.b32.xlu0 %v405, 28
      %v1150 = vpop.permute.xlu0 %1149
      %1151 = vrot.lane.b32.xlu0 %v408, 28
      %v1152 = vpop.permute.xlu0 %1151
      %1153 = vrot.lane.b32.xlu0 %v410, 28
      %v1154 = vpop.permute.xlu0 %1153
      %1155 = vrot.lane.b32.xlu0 %v413, 28
      %v1156 = vpop.permute.xlu0 %1155
      %1157 = vrot.lane.b32.xlu0 %v415, 28
      %v1158 = vpop.permute.xlu0 %1157
      %1159 = vrot.lane.b32.xlu0 %v418, 28
      %v1160 = vpop.permute.xlu0 %1159
      %1161 = vrot.lane.b32.xlu0 %v420, 28
      %v1162 = vpop.permute.xlu0 %1161
      %1163 = vrot.lane.b32.xlu0 %v423, 28
      %v1164 = vpop.permute.xlu0 %1163
      %1165 = vrot.lane.b32.xlu0 %v425, 28
      %v1166 = vpop.permute.xlu0 %1165
      %1167 = vrot.lane.b32.xlu0 %v428, 28
      %v1168 = vpop.permute.xlu0 %1167
      %1169 = vrot.lane.b32.xlu0 %v430, 28
      %v1170 = vpop.permute.xlu0 %1169
      %1171 = vrot.lane.b32.xlu0 %v433, 28
      %v1172 = vpop.permute.xlu0 %1171
      %1173 = vrot.lane.b32.xlu0 %v435, 28
      %v1174 = vpop.permute.xlu0 %1173
      %1175 = vrot.lane.b32.xlu0 %v522, 28
      %v1176 = vpop.permute.xlu0 %1175
      %1177 = vrot.lane.b32.xlu0 %v524, 28
      %v1178 = vpop.permute.xlu0 %1177
      %1179 = vrot.lane.b32.xlu0 %v535, 28
      %v1180 = vpop.permute.xlu0 %1179
      %1181 = vrot.lane.b32.xlu0 %v537, 28
      %v1182 = vpop.permute.xlu0 %1181
      %1215 = vrot.lane.b32.xlu0 %v449, 32
      %v1216 = vpop.permute.xlu0 %1215
      %1217 = vrot.lane.b32.xlu0 %v451, 32
      %v1218 = vpop.permute.xlu0 %1217
      %1219 = vrot.lane.b32.xlu0 %v454, 32
      %v1220 = vpop.permute.xlu0 %1219
      %1221 = vrot.lane.b32.xlu0 %v456, 32
      %v1222 = vpop.permute.xlu0 %1221
      %1223 = vrot.lane.b32.xlu0 %v459, 32
      %v1224 = vpop.permute.xlu0 %1223
      %1225 = vrot.lane.b32.xlu0 %v461, 32
      %v1226 = vpop.permute.xlu0 %1225
      %1227 = vrot.lane.b32.xlu0 %v464, 32
      %v1228 = vpop.permute.xlu0 %1227
      %1229 = vrot.lane.b32.xlu0 %v466, 32
      %v1230 = vpop.permute.xlu0 %1229
      %1231 = vrot.lane.b32.xlu0 %v469, 32
      %v1232 = vpop.permute.xlu0 %1231
      %1233 = vrot.lane.b32.xlu0 %v471, 32
      %v1234 = vpop.permute.xlu0 %1233
      %1235 = vrot.lane.b32.xlu0 %v474, 32
      %v1236 = vpop.permute.xlu0 %1235
      %1237 = vrot.lane.b32.xlu0 %v476, 32
      %v1238 = vpop.permute.xlu0 %1237
      %1239 = vrot.lane.b32.xlu0 %v479, 32
      %v1240 = vpop.permute.xlu0 %1239
      %1241 = vrot.lane.b32.xlu0 %v481, 32
      %v1242 = vpop.permute.xlu0 %1241
      %1243 = vrot.lane.b32.xlu0 %v484, 32
      %v1244 = vpop.permute.xlu0 %1243
      %1245 = vrot.lane.b32.xlu0 %v486, 32
      %v1246 = vpop.permute.xlu0 %1245
      %1247 = vrot.lane.b32.xlu0 %v489, 32
      %v1248 = vpop.permute.xlu0 %1247
      %1249 = vrot.lane.b32.xlu0 %v491, 32
      %v1250 = vpop.permute.xlu0 %1249
      %1251 = vrot.lane.b32.xlu0 %v494, 32
      %v1252 = vpop.permute.xlu0 %1251
      %1253 = vrot.lane.b32.xlu0 %v496, 32
      %v1254 = vpop.permute.xlu0 %1253
      %1255 = vrot.lane.b32.xlu0 %v499, 32
      %v1256 = vpop.permute.xlu0 %1255
      %1257 = vrot.lane.b32.xlu0 %v501, 32
      %v1258 = vpop.permute.xlu0 %1257
      %1259 = vrot.lane.b32.xlu0 %v504, 32
      %v1260 = vpop.permute.xlu0 %1259
      %1261 = vrot.lane.b32.xlu0 %v506, 32
      %v1262 = vpop.permute.xlu0 %1261
      %1263 = vrot.lane.b32.xlu0 %v509, 32
      %v1264 = vpop.permute.xlu0 %1263
      %1265 = vrot.lane.b32.xlu0 %v511, 32
      %v1266 = vpop.permute.xlu0 %1265
      %1267 = vrot.lane.b32.xlu0 %v514, 32
      %v1268 = vpop.permute.xlu0 %1267
      %1269 = vrot.lane.b32.xlu0 %v516, 32
      %v1270 = vpop.permute.xlu0 %1269
      %1271 = vrot.lane.b32.xlu0 %v527, 32
      %v1272 = vpop.permute.xlu0 %1271
      %1273 = vrot.lane.b32.xlu0 %v529, 32
      %v1274 = vpop.permute.xlu0 %1273
      %1275 = vrot.lane.b32.xlu0 %v540, 32
      %v1276 = vpop.permute.xlu0 %1275
      %1277 = vrot.lane.b32.xlu0 %v542, 32
      %v1278 = vpop.permute.xlu0 %1277
      %vm1311 = vcmask 31744
      %v1312 = vsel %vm1311, %v253, %v544
      %v1313 = vsel %vm1311, %v254, %v546
      %v1314 = vsel %vm1311, %v256, %v548
      %v1315 = vsel %vm1311, %v257, %v550
      %v1316 = vsel %vm1311, %v259, %v552
      %v1317 = vsel %vm1311, %v260, %v554
      %v1318 = vsel %vm1311, %v262, %v556
      %v1319 = vsel %vm1311, %v263, %v558
      %v1320 = vsel %vm1311, %v265, %v560
      %v1321 = vsel %vm1311, %v266, %v562
      %v1322 = vsel %vm1311, %v268, %v564
      %v1323 = vsel %vm1311, %v269, %v566
      %v1324 = vsel %vm1311, %v271, %v568
      %v1325 = vsel %vm1311, %v272, %v570
      %v1326 = vsel %vm1311, %v274, %v572
      %v1327 = vsel %vm1311, %v275, %v574
      %v1328 = vsel %vm1311, %v277, %v576
      %v1329 = vsel %vm1311, %v278, %v578
      %v1330 = vsel %vm1311, %v280, %v580
      %v1331 = vsel %vm1311, %v281, %v582
      %v1332 = vsel %vm1311, %v283, %v584
      %v1333 = vsel %vm1311, %v284, %v586
      %v1334 = vsel %vm1311, %v286, %v588
      %v1335 = vsel %vm1311, %v287, %v590
      %v1336 = vsel %vm1311, %v289, %v592
      %v1337 = vsel %vm1311, %v290, %v594
      %v1338 = vsel %vm1311, %v292, %v596
      %v1339 = vsel %vm1311, %v293, %v598
      %v1340 = vsel %vm1311, %v295, %v600
      %v1341 = vsel %vm1311, %v296, %v602
      %v1342 = vsel %vm1311, %v298, %v604
      %v1343 = vsel %vm1311, %v299, %v606
      %vm1344 = vcmask 64512
      %v1345 = vsel %vm1344, %v1312, %v640
      %v1346 = vsel %vm1344, %v1313, %v642
      %v1347 = vsel %vm1344, %v1314, %v644
      %v1348 = vsel %vm1344, %v1315, %v646
      %v1349 = vsel %vm1344, %v1316, %v648
      %v1350 = vsel %vm1344, %v1317, %v650
      %v1351 = vsel %vm1344, %v1318, %v652
      %v1352 = vsel %vm1344, %v1319, %v654
      %v1353 = vsel %vm1344, %v1320, %v656
      %v1354 = vsel %vm1344, %v1321, %v658
      %v1355 = vsel %vm1344, %v1322, %v660
      %v1356 = vsel %vm1344, %v1323, %v662
      %v1357 = vsel %vm1344, %v1324, %v664
      %v1358 = vsel %vm1344, %v1325, %v666
      %v1359 = vsel %vm1344, %v1326, %v668
      %v1360 = vsel %vm1344, %v1327, %v670
      %v1361 = vsel %vm1344, %v1328, %v672
      %v1362 = vsel %vm1344, %v1329, %v674
      %v1363 = vsel %vm1344, %v1330, %v676
      %v1364 = vsel %vm1344, %v1331, %v678
      %v1365 = vsel %vm1344, %v1332, %v680
      %v1366 = vsel %vm1344, %v1333, %v682
      %v1367 = vsel %vm1344, %v1334, %v684
      %v1368 = vsel %vm1344, %v1335, %v686
      %v1369 = vsel %vm1344, %v1336, %v688
      %v1370 = vsel %vm1344, %v1337, %v690
      %v1371 = vsel %vm1344, %v1338, %v692
      %v1372 = vsel %vm1344, %v1339, %v694
      %v1373 = vsel %vm1344, %v1340, %v696
      %v1374 = vsel %vm1344, %v1341, %v698
      %v1375 = vsel %vm1344, %v1342, %v700
      %v1376 = vsel %vm1344, %v1343, %v702
      %vm1377 = vcmask 97280
      %v1378 = vsel %vm1377, %v1345, %v736
      %v1379 = vsel %vm1377, %v1346, %v738
      %v1380 = vsel %vm1377, %v1347, %v740
      %v1381 = vsel %vm1377, %v1348, %v742
      %v1382 = vsel %vm1377, %v1349, %v744
      %v1383 = vsel %vm1377, %v1350, %v746
      %v1384 = vsel %vm1377, %v1351, %v748
      %v1385 = vsel %vm1377, %v1352, %v750
      %v1386 = vsel %vm1377, %v1353, %v752
      %v1387 = vsel %vm1377, %v1354, %v754
      %v1388 = vsel %vm1377, %v1355, %v756
      %v1389 = vsel %vm1377, %v1356, %v758
      %v1390 = vsel %vm1377, %v1357, %v760
      %v1391 = vsel %vm1377, %v1358, %v762
      %v1392 = vsel %vm1377, %v1359, %v764
      %v1393 = vsel %vm1377, %v1360, %v766
      %v1394 = vsel %vm1377, %v1361, %v768
      %v1395 = vsel %vm1377, %v1362, %v770
      %v1396 = vsel %vm1377, %v1363, %v772
      %v1397 = vsel %vm1377, %v1364, %v774
      %v1398 = vsel %vm1377, %v1365, %v776
      %v1399 = vsel %vm1377, %v1366, %v778
      %v1400 = vsel %vm1377, %v1367, %v780
      %v1401 = vsel %vm1377, %v1368, %v782
      %v1402 = vsel %vm1377, %v1369, %v784
      %v1403 = vsel %vm1377, %v1370, %v786
      %v1404 = vsel %vm1377, %v1371, %v788
      %v1405 = vsel %vm1377, %v1372, %v790
      %v1406 = vsel %vm1377, %v1373, %v792
      %v1407 = vsel %vm1377, %v1374, %v794
      %v1408 = vsel %vm1377, %v1375, %v796
      %v1409 = vsel %vm1377, %v1376, %v798
      %vm1410 = vcmask 130048
      %v1411 = vsel %vm1410, %v1378, %v832
      %v1412 = vsel %vm1410, %v1379, %v834
      %v1413 = vsel %vm1410, %v1380, %v836
      %v1414 = vsel %vm1410, %v1381, %v838
      %v1415 = vsel %vm1410, %v1382, %v840
      %v1416 = vsel %vm1410, %v1383, %v842
      %v1417 = vsel %vm1410, %v1384, %v844
      %v1418 = vsel %vm1410, %v1385, %v846
      %v1419 = vsel %vm1410, %v1386, %v848
      %v1420 = vsel %vm1410, %v1387, %v850
      %v1421 = vsel %vm1410, %v1388, %v852
      %v1422 = vsel %vm1410, %v1389, %v854
      %v1423 = vsel %vm1410, %v1390, %v856
      %v1424 = vsel %vm1410, %v1391, %v858
      %v1425 = vsel %vm1410, %v1392, %v860
      %v1426 = vsel %vm1410, %v1393, %v862
      %v1427 = vsel %vm1410, %v1394, %v864
      %v1428 = vsel %vm1410, %v1395, %v866
      %v1429 = vsel %vm1410, %v1396, %v868
      %v1430 = vsel %vm1410, %v1397, %v870
      %v1431 = vsel %vm1410, %v1398, %v872
      %v1432 = vsel %vm1410, %v1399, %v874
      %v1433 = vsel %vm1410, %v1400, %v876
      %v1434 = vsel %vm1410, %v1401, %v878
      %v1435 = vsel %vm1410, %v1402, %v880
      %v1436 = vsel %vm1410, %v1403, %v882
      %v1437 = vsel %vm1410, %v1404, %v884
      %v1438 = vsel %vm1410, %v1405, %v886
      %v1439 = vsel %vm1410, %v1406, %v888
      %v1440 = vsel %vm1410, %v1407, %v890
      %v1441 = vsel %vm1410, %v1408, %v892
      %v1442 = vsel %vm1410, %v1409, %v894
      %vm1443 = vcmask 162816
      %v1444 = vsel %vm1443, %v1411, %v928
      %v1445 = vsel %vm1443, %v1412, %v930
      %v1446 = vsel %vm1443, %v1413, %v932
      %v1447 = vsel %vm1443, %v1414, %v934
      %v1448 = vsel %vm1443, %v1415, %v936
      %v1449 = vsel %vm1443, %v1416, %v938
      %v1450 = vsel %vm1443, %v1417, %v940
      %v1451 = vsel %vm1443, %v1418, %v942
      %v1452 = vsel %vm1443, %v1419, %v944
      %v1453 = vsel %vm1443, %v1420, %v946
      %v1454 = vsel %vm1443, %v1421, %v948
      %v1455 = vsel %vm1443, %v1422, %v950
      %v1456 = vsel %vm1443, %v1423, %v952
      %v1457 = vsel %vm1443, %v1424, %v954
      %v1458 = vsel %vm1443, %v1425, %v956
      %v1459 = vsel %vm1443, %v1426, %v958
      %v1460 = vsel %vm1443, %v1427, %v960
      %v1461 = vsel %vm1443, %v1428, %v962
      %v1462 = vsel %vm1443, %v1429, %v964
      %v1463 = vsel %vm1443, %v1430, %v966
      %v1464 = vsel %vm1443, %v1431, %v968
      %v1465 = vsel %vm1443, %v1432, %v970
      %v1466 = vsel %vm1443, %v1433, %v972
      %v1467 = vsel %vm1443, %v1434, %v974
      %v1468 = vsel %vm1443, %v1435, %v976
      %v1469 = vsel %vm1443, %v1436, %v978
      %v1470 = vsel %vm1443, %v1437, %v980
      %v1471 = vsel %vm1443, %v1438, %v982
      %v1472 = vsel %vm1443, %v1439, %v984
      %v1473 = vsel %vm1443, %v1440, %v986
      %v1474 = vsel %vm1443, %v1441, %v988
      %v1475 = vsel %vm1443, %v1442, %v990
      %vm1476 = vcmask 195584
      %v1477 = vsel %vm1476, %v1444, %v1024
      %v1478 = vsel %vm1476, %v1445, %v1026
      %v1479 = vsel %vm1476, %v1446, %v1028
      %v1480 = vsel %vm1476, %v1447, %v1030
      %v1481 = vsel %vm1476, %v1448, %v1032
      %v1482 = vsel %vm1476, %v1449, %v1034
      %v1483 = vsel %vm1476, %v1450, %v1036
      %v1484 = vsel %vm1476, %v1451, %v1038
      %v1485 = vsel %vm1476, %v1452, %v1040
      %v1486 = vsel %vm1476, %v1453, %v1042
      %v1487 = vsel %vm1476, %v1454, %v1044
      %v1488 = vsel %vm1476, %v1455, %v1046
      %v1489 = vsel %vm1476, %v1456, %v1048
      %v1490 = vsel %vm1476, %v1457, %v1050
      %v1491 = vsel %vm1476, %v1458, %v1052
      %v1492 = vsel %vm1476, %v1459, %v1054
      %v1493 = vsel %vm1476, %v1460, %v1056
      %v1494 = vsel %vm1476, %v1461, %v1058
      %v1495 = vsel %vm1476, %v1462, %v1060
      %v1496 = vsel %vm1476, %v1463, %v1062
      %v1497 = vsel %vm1476, %v1464, %v1064
      %v1498 = vsel %vm1476, %v1465, %v1066
      %v1499 = vsel %vm1476, %v1466, %v1068
      %v1500 = vsel %vm1476, %v1467, %v1070
      %v1501 = vsel %vm1476, %v1468, %v1072
      %v1502 = vsel %vm1476, %v1469, %v1074
      %v1503 = vsel %vm1476, %v1470, %v1076
      %v1504 = vsel %vm1476, %v1471, %v1078
      %v1505 = vsel %vm1476, %v1472, %v1080
      %v1506 = vsel %vm1476, %v1473, %v1082
      %v1507 = vsel %vm1476, %v1474, %v1084
      %v1508 = vsel %vm1476, %v1475, %v1086
      %vm1509 = vcmask 228352
      %v1510 = vsel %vm1509, %v1477, %v1120
      %v1511 = vsel %vm1509, %v1478, %v1122
      %v1512 = vsel %vm1509, %v1479, %v1124
      %v1513 = vsel %vm1509, %v1480, %v1126
      %v1514 = vsel %vm1509, %v1481, %v1128
      %v1515 = vsel %vm1509, %v1482, %v1130
      %v1516 = vsel %vm1509, %v1483, %v1132
      %v1517 = vsel %vm1509, %v1484, %v1134
      %v1518 = vsel %vm1509, %v1485, %v1136
      %v1519 = vsel %vm1509, %v1486, %v1138
      %v1520 = vsel %vm1509, %v1487, %v1140
      %v1521 = vsel %vm1509, %v1488, %v1142
      %v1522 = vsel %vm1509, %v1489, %v1144
      %v1523 = vsel %vm1509, %v1490, %v1146
      %v1524 = vsel %vm1509, %v1491, %v1148
      %v1525 = vsel %vm1509, %v1492, %v1150
      %v1526 = vsel %vm1509, %v1493, %v1152
      %v1527 = vsel %vm1509, %v1494, %v1154
      %v1528 = vsel %vm1509, %v1495, %v1156
      %v1529 = vsel %vm1509, %v1496, %v1158
      %v1530 = vsel %vm1509, %v1497, %v1160
      %v1531 = vsel %vm1509, %v1498, %v1162
      %v1532 = vsel %vm1509, %v1499, %v1164
      %v1533 = vsel %vm1509, %v1500, %v1166
      %v1534 = vsel %vm1509, %v1501, %v1168
      %v1535 = vsel %vm1509, %v1502, %v1170
      %v1536 = vsel %vm1509, %v1503, %v1172
      %v1537 = vsel %vm1509, %v1504, %v1174
      %v1538 = vsel %vm1509, %v1505, %v1176
      %v1539 = vsel %vm1509, %v1506, %v1178
      %v1540 = vsel %vm1509, %v1507, %v1180
      %v1541 = vsel %vm1509, %v1508, %v1182
      %vm1542 = vcmask 261120
      %v1543 = vsel %vm1542, %v1510, %v1216
      %v1544 = vsel %vm1542, %v1511, %v1218
      %v1545 = vsel %vm1542, %v1512, %v1220
      %v1546 = vsel %vm1542, %v1513, %v1222
      %v1547 = vsel %vm1542, %v1514, %v1224
      %v1548 = vsel %vm1542, %v1515, %v1226
      %v1549 = vsel %vm1542, %v1516, %v1228
      %v1550 = vsel %vm1542, %v1517, %v1230
      %v1551 = vsel %vm1542, %v1518, %v1232
      %v1552 = vsel %vm1542, %v1519, %v1234
      %v1553 = vsel %vm1542, %v1520, %v1236
      %v1554 = vsel %vm1542, %v1521, %v1238
      %v1555 = vsel %vm1542, %v1522, %v1240
      %v1556 = vsel %vm1542, %v1523, %v1242
      %v1557 = vsel %vm1542, %v1524, %v1244
      %v1558 = vsel %vm1542, %v1525, %v1246
      %v1559 = vsel %vm1542, %v1526, %v1248
      %v1560 = vsel %vm1542, %v1527, %v1250
      %v1561 = vsel %vm1542, %v1528, %v1252
      %v1562 = vsel %vm1542, %v1529, %v1254
      %v1563 = vsel %vm1542, %v1530, %v1256
      %v1564 = vsel %vm1542, %v1531, %v1258
      %v1565 = vsel %vm1542, %v1532, %v1260
      %v1566 = vsel %vm1542, %v1533, %v1262
      %v1567 = vsel %vm1542, %v1534, %v1264
      %v1568 = vsel %vm1542, %v1535, %v1266
      %v1569 = vsel %vm1542, %v1536, %v1268
      %v1570 = vsel %vm1542, %v1537, %v1270
      %v1571 = vsel %vm1542, %v1538, %v1272
      %v1572 = vsel %vm1542, %v1539, %v1274
      %v1573 = vsel %vm1542, %v1540, %v1276
      %v1574 = vsel %vm1542, %v1541, %v1278
      %v1575 = vld [vmem:[%s1] sm:$0xff]
      %v1576 = vld [vmem:[%s1 + $0x8] sm:$0xff]
      %v1577 = vld [vmem:[%s1 + $0x10] sm:$0xff]
      %v1578 = vld [vmem:[%s1 + $0x18] sm:$0xff]
      %v1579 = vld [vmem:[%s1 + $0x20] sm:$0xf]
      %v1580 = vld [vmem:[%s2] sm:$0x1]
      %v1582 = vlaneseq
      %v1583 = vshrl.u32 %v1582, 7
      %v1584 = vsub.s32 0, %v1583
      %v1585 = vrot.slane %v1580, %v1584
      %vm1587 = vcmask 293888
      %v1589 = vsel %vm1587, %v1543, 0
      %v1592 = vsel %vm1587, %v1544, 0
      %v1595 = vsel %vm1587, %v1545, 0
      %v1598 = vsel %vm1587, %v1546, 0
      %v1601 = vsel %vm1587, %v1547, 0
      %v1604 = vsel %vm1587, %v1548, 0
      %v1607 = vsel %vm1587, %v1549, 0
      %v1610 = vsel %vm1587, %v1550, 0
      %v1613 = vsel %vm1587, %v1551, 0
      %v1616 = vsel %vm1587, %v1552, 0
      %v1619 = vsel %vm1587, %v1553, 0
      %v1622 = vsel %vm1587, %v1554, 0
      %v1625 = vsel %vm1587, %v1555, 0
      %v1628 = vsel %vm1587, %v1556, 0
      %v1631 = vsel %vm1587, %v1557, 0
      %v1634 = vsel %vm1587, %v1558, 0
      %v1637 = vsel %vm1587, %v1559, 0
      %v1640 = vsel %vm1587, %v1560, 0
      %v1643 = vsel %vm1587, %v1561, 0
      %v1646 = vsel %vm1587, %v1562, 0
      %v1649 = vsel %vm1587, %v1563, 0
      %v1652 = vsel %vm1587, %v1564, 0
      %v1655 = vsel %vm1587, %v1565, 0
      %v1658 = vsel %vm1587, %v1566, 0
      %v1661 = vsel %vm1587, %v1567, 0
      %v1664 = vsel %vm1587, %v1568, 0
      %v1667 = vsel %vm1587, %v1569, 0
      %v1670 = vsel %vm1587, %v1570, 0
      %v1673 = vsel %vm1587, %v1571, 0
      %v1676 = vsel %vm1587, %v1572, 0
      %v1679 = vsel %vm1587, %v1573, 0
      %v1682 = vsel %vm1587, %v1574, 0
      %vm1684 = vcmask 1043456
      %v1686 = vsel %vm1684, %v1579, 0
      %1688 = vmatprep.subr.mxu0 0.0
      %1689 = vmatpush1.msra.mxu0 0.0
      %1690 = vmatprep.subr.mxu0 0.0
      %1691 = vmatpush1.msra.mxu0 0.0
      %1692 = vmatprep.subr.mxu0 0.0
      %1693 = vmatpush1.msra.mxu0 0.0
      %1694 = vmatprep.subr.mxu0 0.0
      %1695 = vmatpush1.msra.mxu0 0.0
      %1696 = vmatprep.subr.mxu0 0.0
      %1697 = vmatpush1.msra.mxu0 0.0
      %1698 = vmatprep.subr.mxu0 0.0
      %1699 = vmatpush1.msra.mxu0 0.0
      %1700 = vmatprep.subr.mxu0 0.0
      %1701 = vmatpush1.msra.mxu0 0.0
      %1702 = vmatprep.subr.mxu0 0.0
      %1703 = vmatpush1.msra.mxu0 0.0
      %1704 = vmatprep.subr.mxu0 0.0
      %1705 = vmatpush1.msra.mxu0 0.0
      %1706 = vmatprep.subr.mxu0 0.0
      %1707 = vmatpush1.msra.mxu0 0.0
      %1708 = vmatprep.subr.mxu0 0.0
      %1709 = vmatpush1.msra.mxu0 0.0
      %1710 = vmatprep.subr.mxu0 0.0
      %1711 = vmatpush1.msra.mxu0 %v1686
      %1712 = vmatprep.subr.mxu0 0.0
      %1713 = vmatpush1.msra.mxu0 %v1578
      %1714 = vmatprep.subr.mxu0 0.0
      %1715 = vmatpush1.msra.mxu0 %v1577
      %1716 = vmatprep.subr.mxu0 0.0
      %1717 = vmatpush1.msra.mxu0 %v1576
      %1718 = vmatprep.subr.mxu0 0.0
      %1719 = vmatpush1.msra.mxu0 %v1575
      %1720 = vmatprep.subr.mxu0 0.0
      %1721 = vmatpush2.msra.mxu0 0.0
      %1722 = vmatprep.subr.mxu0 0.0
      %1723 = vmatpush2.msra.mxu0 0.0
      %1724 = vmatprep.subr.mxu0 0.0
      %1725 = vmatpush2.msra.mxu0 0.0
      %1726 = vmatprep.subr.mxu0 0.0
      %1727 = vmatpush2.msra.mxu0 0.0
      %1728 = vmatprep.subr.mxu0 0.0
      %1729 = vmatpush2.msra.mxu0 0.0
      %1730 = vmatprep.subr.mxu0 0.0
      %1731 = vmatpush2.msra.mxu0 0.0
      %1732 = vmatprep.subr.mxu0 0.0
      %1733 = vmatpush2.msra.mxu0 0.0
      %1734 = vmatprep.subr.mxu0 0.0
      %1735 = vmatpush2.msra.mxu0 0.0
      %1736 = vmatprep.subr.mxu0 0.0
      %1737 = vmatpush2.msra.mxu0 0.0
      %1738 = vmatprep.subr.mxu0 0.0
      %1739 = vmatpush2.msra.mxu0 0.0
      %1740 = vmatprep.subr.mxu0 0.0
      %1741 = vmatpush2.msra.mxu0 0.0
      %1742 = vmatprep.subr.mxu0 0.0
      %1743 = vmatpush2.msra.mxu0 0.0
      %1744 = vmatprep.subr.mxu0 0.0
      %1745 = vmatpush2.msra.mxu0 0.0
      %1746 = vmatprep.subr.mxu0 0.0
      %1747 = vmatpush2.msra.mxu0 0.0
      %1748 = vmatprep.subr.mxu0 0.0
      %1749 = vmatpush2.msra.mxu0 0.0
      %1750 = vmatprep.subr.mxu0 0.0
      %1751 = vmatpush2.msra.mxu0 0.0
      %1752 = vmatprep.mubr.f32.mxu0 0.0
      %1753 = vmatmul.mubr.f32.gmra.mxu0 %v1589
      %v1754 = vpop.f32.mrf.mxu0
      %v1755 = vadd.f32 %v1585, %v1754
      %v1756 = vpop.f32.mrf.mxu0
      %1757 = vmatprep.mubr.f32.mxu0 0.0
      %1758 = vmatmul.mubr.f32.gmra.mxu0 %v1592
      %v1759 = vpop.f32.mrf.mxu0
      %v1760 = vadd.f32 %v1585, %v1759
      %v1761 = vpop.f32.mrf.mxu0
      %1762 = vmatprep.mubr.f32.mxu0 0.0
      %1763 = vmatmul.mubr.f32.gmra.mxu0 %v1595
      %v1764 = vpop.f32.mrf.mxu0
      %v1765 = vadd.f32 %v1585, %v1764
      %v1766 = vpop.f32.mrf.mxu0
      %1767 = vmatprep.mubr.f32.mxu0 0.0
      %1768 = vmatmul.mubr.f32.gmra.mxu0 %v1598
      %v1769 = vpop.f32.mrf.mxu0
      %v1770 = vadd.f32 %v1585, %v1769
      %v1771 = vpop.f32.mrf.mxu0
      %1772 = vmatprep.mubr.f32.mxu0 0.0
      %1773 = vmatmul.mubr.f32.gmra.mxu0 %v1601
      %v1774 = vpop.f32.mrf.mxu0
      %v1775 = vadd.f32 %v1585, %v1774
      %v1776 = vpop.f32.mrf.mxu0
      %1777 = vmatprep.mubr.f32.mxu0 0.0
      %1778 = vmatmul.mubr.f32.gmra.mxu0 %v1604
      %v1779 = vpop.f32.mrf.mxu0
      %v1780 = vadd.f32 %v1585, %v1779
      %v1781 = vpop.f32.mrf.mxu0
      %1782 = vmatprep.mubr.f32.mxu0 0.0
      %1783 = vmatmul.mubr.f32.gmra.mxu0 %v1607
      %v1784 = vpop.f32.mrf.mxu0
      %v1785 = vadd.f32 %v1585, %v1784
      %v1786 = vpop.f32.mrf.mxu0
      %1787 = vmatprep.mubr.f32.mxu0 0.0
      %1788 = vmatmul.mubr.f32.gmra.mxu0 %v1610
      %v1789 = vpop.f32.mrf.mxu0
      %v1790 = vadd.f32 %v1585, %v1789
      %v1791 = vpop.f32.mrf.mxu0
      %1792 = vmatprep.mubr.f32.mxu0 0.0
      %1793 = vmatmul.mubr.f32.gmra.mxu0 %v1613
      %v1794 = vpop.f32.mrf.mxu0
      %v1795 = vadd.f32 %v1585, %v1794
      %v1796 = vpop.f32.mrf.mxu0
      %1797 = vmatprep.mubr.f32.mxu0 0.0
      %1798 = vmatmul.mubr.f32.gmra.mxu0 %v1616
      %v1799 = vpop.f32.mrf.mxu0
      %v1800 = vadd.f32 %v1585, %v1799
      %v1801 = vpop.f32.mrf.mxu0
      %1802 = vmatprep.mubr.f32.mxu0 0.0
      %1803 = vmatmul.mubr.f32.gmra.mxu0 %v1619
      %v1804 = vpop.f32.mrf.mxu0
      %v1805 = vadd.f32 %v1585, %v1804
      %v1806 = vpop.f32.mrf.mxu0
      %1807 = vmatprep.mubr.f32.mxu0 0.0
      %1808 = vmatmul.mubr.f32.gmra.mxu0 %v1622
      %v1809 = vpop.f32.mrf.mxu0
      %v1810 = vadd.f32 %v1585, %v1809
      %v1811 = vpop.f32.mrf.mxu0
      %1812 = vmatprep.mubr.f32.mxu0 0.0
      %1813 = vmatmul.mubr.f32.gmra.mxu0 %v1625
      %v1814 = vpop.f32.mrf.mxu0
      %v1815 = vadd.f32 %v1585, %v1814
      %v1816 = vpop.f32.mrf.mxu0
      %1817 = vmatprep.mubr.f32.mxu0 0.0
      %1818 = vmatmul.mubr.f32.gmra.mxu0 %v1628
      %v1819 = vpop.f32.mrf.mxu0
      %v1820 = vadd.f32 %v1585, %v1819
      %v1821 = vpop.f32.mrf.mxu0
      %1822 = vmatprep.mubr.f32.mxu0 0.0
      %1823 = vmatmul.mubr.f32.gmra.mxu0 %v1631
      %v1824 = vpop.f32.mrf.mxu0
      %v1825 = vadd.f32 %v1585, %v1824
      %v1826 = vpop.f32.mrf.mxu0
      %1827 = vmatprep.mubr.f32.mxu0 0.0
      %1828 = vmatmul.mubr.f32.gmra.mxu0 %v1634
      %v1829 = vpop.f32.mrf.mxu0
      %v1830 = vadd.f32 %v1585, %v1829
      %v1831 = vpop.f32.mrf.mxu0
      %1832 = vmatprep.mubr.f32.mxu0 0.0
      %1833 = vmatmul.mubr.f32.gmra.mxu0 %v1637
      %v1834 = vpop.f32.mrf.mxu0
      %v1835 = vadd.f32 %v1585, %v1834
      %v1836 = vpop.f32.mrf.mxu0
      %1837 = vmatprep.mubr.f32.mxu0 0.0
      %1838 = vmatmul.mubr.f32.gmra.mxu0 %v1640
      %v1839 = vpop.f32.mrf.mxu0
      %v1840 = vadd.f32 %v1585, %v1839
      %v1841 = vpop.f32.mrf.mxu0
      %1842 = vmatprep.mubr.f32.mxu0 0.0
      %1843 = vmatmul.mubr.f32.gmra.mxu0 %v1643
      %v1844 = vpop.f32.mrf.mxu0
      %v1845 = vadd.f32 %v1585, %v1844
      %v1846 = vpop.f32.mrf.mxu0
      %1847 = vmatprep.mubr.f32.mxu0 0.0
      %1848 = vmatmul.mubr.f32.gmra.mxu0 %v1646
      %v1849 = vpop.f32.mrf.mxu0
      %v1850 = vadd.f32 %v1585, %v1849
      %v1851 = vpop.f32.mrf.mxu0
      %1852 = vmatprep.mubr.f32.mxu0 0.0
      %1853 = vmatmul.mubr.f32.gmra.mxu0 %v1649
      %v1854 = vpop.f32.mrf.mxu0
      %v1855 = vadd.f32 %v1585, %v1854
      %v1856 = vpop.f32.mrf.mxu0
      %1857 = vmatprep.mubr.f32.mxu0 0.0
      %1858 = vmatmul.mubr.f32.gmra.mxu0 %v1652
      %v1859 = vpop.f32.mrf.mxu0
      %v1860 = vadd.f32 %v1585, %v1859
      %v1861 = vpop.f32.mrf.mxu0
      %1862 = vmatprep.mubr.f32.mxu0 0.0
      %1863 = vmatmul.mubr.f32.gmra.mxu0 %v1655
      %v1864 = vpop.f32.mrf.mxu0
      %v1865 = vadd.f32 %v1585, %v1864
      %v1866 = vpop.f32.mrf.mxu0
      %1867 = vmatprep.mubr.f32.mxu0 0.0
      %1868 = vmatmul.mubr.f32.gmra.mxu0 %v1658
      %v1869 = vpop.f32.mrf.mxu0
      %v1870 = vadd.f32 %v1585, %v1869
      %v1871 = vpop.f32.mrf.mxu0
      %1872 = vmatprep.mubr.f32.mxu0 0.0
      %1873 = vmatmul.mubr.f32.gmra.mxu0 %v1661
      %v1874 = vpop.f32.mrf.mxu0
      %v1875 = vadd.f32 %v1585, %v1874
      %v1876 = vpop.f32.mrf.mxu0
      %1877 = vmatprep.mubr.f32.mxu0 0.0
      %1878 = vmatmul.mubr.f32.gmra.mxu0 %v1664
      %v1879 = vpop.f32.mrf.mxu0
      %v1880 = vadd.f32 %v1585, %v1879
      %v1881 = vpop.f32.mrf.mxu0
      %1882 = vmatprep.mubr.f32.mxu0 0.0
      %1883 = vmatmul.mubr.f32.gmra.mxu0 %v1667
      %v1884 = vpop.f32.mrf.mxu0
      %v1885 = vadd.f32 %v1585, %v1884
      %v1886 = vpop.f32.mrf.mxu0
      %1887 = vmatprep.mubr.f32.mxu0 0.0
      %1888 = vmatmul.mubr.f32.gmra.mxu0 %v1670
      %v1889 = vpop.f32.mrf.mxu0
      %v1890 = vadd.f32 %v1585, %v1889
      %v1891 = vpop.f32.mrf.mxu0
      %1892 = vmatprep.mubr.f32.mxu0 0.0
      %1893 = vmatmul.mubr.f32.gmra.mxu0 %v1673
      %v1894 = vpop.f32.mrf.mxu0
      %v1895 = vadd.f32 %v1585, %v1894
      %v1896 = vpop.f32.mrf.mxu0
      %1897 = vmatprep.mubr.f32.mxu0 0.0
      %1898 = vmatmul.mubr.f32.gmra.mxu0 %v1676
      %v1899 = vpop.f32.mrf.mxu0
      %v1900 = vadd.f32 %v1585, %v1899
      %v1901 = vpop.f32.mrf.mxu0
      %1902 = vmatprep.mubr.f32.mxu0 0.0
      %1903 = vmatmul.mubr.f32.gmra.mxu0 %v1679
      %v1904 = vpop.f32.mrf.mxu0
      %v1905 = vadd.f32 %v1585, %v1904
      %v1906 = vpop.f32.mrf.mxu0
      %1907 = vmatprep.mubr.f32.mxu0 0.0
      %1908 = vmatmul.mubr.f32.gmra.mxu0 %v1682
      %v1909 = vpop.f32.mrf.mxu0
      %v1910 = vadd.f32 %v1585, %v1909
      %v1911 = vpop.f32.mrf.mxu0
      %1912 = vdwg.mxu0
      %1913 = vst [vmem:[%s245] sm:$0xff] %v1755
      %1914 = vst [vmem:[%s245 + $0x8] sm:$0xff] %v1760
      %1915 = vst [vmem:[%s245 + $0x10] sm:$0xff] %v1765
      %1916 = vst [vmem:[%s245 + $0x18] sm:$0xff] %v1770
      %1917 = vst [vmem:[%s245 + $0x20] sm:$0xff] %v1775
      %1918 = vst [vmem:[%s245 + $0x28] sm:$0xff] %v1780
      %1919 = vst [vmem:[%s245 + $0x30] sm:$0xff] %v1785
      %1920 = vst [vmem:[%s245 + $0x38] sm:$0xff] %v1790
      %1921 = vst [vmem:[%s245 + $0x40] sm:$0xff] %v1795
      %1922 = vst [vmem:[%s245 + $0x48] sm:$0xff] %v1800
      %1923 = vst [vmem:[%s245 + $0x50] sm:$0xff] %v1805
      %1924 = vst [vmem:[%s245 + $0x58] sm:$0xff] %v1810
      %1925 = vst [vmem:[%s245 + $0x60] sm:$0xff] %v1815
      %1926 = vst [vmem:[%s245 + $0x68] sm:$0xff] %v1820
      %1927 = vst [vmem:[%s245 + $0x70] sm:$0xff] %v1825
      %1928 = vst [vmem:[%s245 + $0x78] sm:$0xff] %v1830
      %1929 = vst [vmem:[%s245 + $0x80] sm:$0xff] %v1835
      %1930 = vst [vmem:[%s245 + $0x88] sm:$0xff] %v1840
      %1931 = vst [vmem:[%s245 + $0x90] sm:$0xff] %v1845
      %1932 = vst [vmem:[%s245 + $0x98] sm:$0xff] %v1850
      %1933 = vst [vmem:[%s245 + $0xa0] sm:$0xff] %v1855
      %1934 = vst [vmem:[%s245 + $0xa8] sm:$0xff] %v1860
      %1935 = vst [vmem:[%s245 + $0xb0] sm:$0xff] %v1865
      %1936 = vst [vmem:[%s245 + $0xb8] sm:$0xff] %v1870
      %1937 = vst [vmem:[%s245 + $0xc0] sm:$0xff] %v1875
      %1938 = vst [vmem:[%s245 + $0xc8] sm:$0xff] %v1880
      %1939 = vst [vmem:[%s245 + $0xd0] sm:$0xff] %v1885
      %1940 = vst [vmem:[%s245 + $0xd8] sm:$0xff] %v1890
      %1941 = vst [vmem:[%s245 + $0xe0] sm:$0xff] %v1895
      %1942 = vst [vmem:[%s245 + $0xe8] sm:$0xff] %v1900
      %1943 = vst [vmem:[%s245 + $0xf0] sm:$0xff] %v1905
      %1944 = vst [vmem:[%s245 + $0xf8] sm:$0xff] %v1910
      %v1945 = vadd.f32 %v1755, %v1760
      %v1946 = vadd.f32 %v1945, %v1765
      %v1947 = vadd.f32 %v1946, %v1770
      %v1948 = vadd.f32 %v1947, %v1775
      %v1949 = vadd.f32 %v1948, %v1780
      %v1950 = vadd.f32 %v1949, %v1785
      %v1951 = vadd.f32 %v1950, %v1790
      %v1952 = vadd.f32 %v1951, %v1795
      %v1953 = vadd.f32 %v1952, %v1800
      %v1954 = vadd.f32 %v1953, %v1805
      %v1955 = vadd.f32 %v1954, %v1810
      %v1956 = vadd.f32 %v1955, %v1815
      %v1957 = vadd.f32 %v1956, %v1820
      %v1958 = vadd.f32 %v1957, %v1825
      %v1959 = vadd.f32 %v1958, %v1830
      %v1960 = vadd.f32 %v1959, %v1835
      %v1961 = vadd.f32 %v1960, %v1840
      %v1962 = vadd.f32 %v1961, %v1845
      %v1963 = vadd.f32 %v1962, %v1850
      %v1964 = vadd.f32 %v1963, %v1855
      %v1965 = vadd.f32 %v1964, %v1860
      %v1966 = vadd.f32 %v1965, %v1865
      %v1967 = vadd.f32 %v1966, %v1870
      %v1968 = vadd.f32 %v1967, %v1875
      %v1969 = vadd.f32 %v1968, %v1880
      %v1970 = vadd.f32 %v1969, %v1885
      %v1971 = vadd.f32 %v1970, %v1890
      %v1972 = vadd.f32 %v1971, %v1895
      %v1973 = vadd.f32 %v1972, %v1900
      %v1974 = vadd.f32 %v1973, %v1905
      %v1975 = vadd.f32 %v1974, %v1910
      %v1976 = vrot.slane %v1975, 4
      %v1977 = vadd.f32 %v1975, %v1976
      %v1978 = vrot.slane %v1977, 2
      %v1979 = vadd.f32 %v1977, %v1978
      %v1980 = vrot.slane %v1979, 1
      %v1981 = vadd.f32 %v1979, %v1980
      %v1982 = vmul.f32 %v1755, %v1755
      %v1983 = vmul.f32 %v1760, %v1760
      %v1984 = vmul.f32 %v1765, %v1765
      %v1985 = vmul.f32 %v1770, %v1770
      %v1986 = vmul.f32 %v1775, %v1775
      %v1987 = vmul.f32 %v1780, %v1780
      %v1988 = vmul.f32 %v1785, %v1785
      %v1989 = vmul.f32 %v1790, %v1790
      %v1990 = vmul.f32 %v1795, %v1795
      %v1991 = vmul.f32 %v1800, %v1800
      %v1992 = vmul.f32 %v1805, %v1805
      %v1993 = vmul.f32 %v1810, %v1810
      %v1994 = vmul.f32 %v1815, %v1815
      %v1995 = vmul.f32 %v1820, %v1820
      %v1996 = vmul.f32 %v1825, %v1825
      %v1997 = vmul.f32 %v1830, %v1830
      %v1998 = vmul.f32 %v1835, %v1835
      %v1999 = vmul.f32 %v1840, %v1840
      %v2000 = vmul.f32 %v1845, %v1845
      %v2001 = vmul.f32 %v1850, %v1850
      %v2002 = vmul.f32 %v1855, %v1855
      %v2003 = vmul.f32 %v1860, %v1860
      %v2004 = vmul.f32 %v1865, %v1865
      %v2005 = vmul.f32 %v1870, %v1870
      %v2006 = vmul.f32 %v1875, %v1875
      %v2007 = vmul.f32 %v1880, %v1880
      %v2008 = vmul.f32 %v1885, %v1885
      %v2009 = vmul.f32 %v1890, %v1890
      %v2010 = vmul.f32 %v1895, %v1895
      %v2011 = vmul.f32 %v1900, %v1900
      %v2012 = vmul.f32 %v1905, %v1905
      %v2013 = vmul.f32 %v1910, %v1910
      %v2014 = vadd.f32 %v1982, %v1983
      %v2015 = vadd.f32 %v2014, %v1984
      %v2016 = vadd.f32 %v2015, %v1985
      %v2017 = vadd.f32 %v2016, %v1986
      %v2018 = vadd.f32 %v2017, %v1987
      %v2019 = vadd.f32 %v2018, %v1988
      %v2020 = vadd.f32 %v2019, %v1989
      %v2021 = vadd.f32 %v2020, %v1990
      %v2022 = vadd.f32 %v2021, %v1991
      %v2023 = vadd.f32 %v2022, %v1992
      %v2024 = vadd.f32 %v2023, %v1993
      %v2025 = vadd.f32 %v2024, %v1994
      %v2026 = vadd.f32 %v2025, %v1995
      %v2027 = vadd.f32 %v2026, %v1996
      %v2028 = vadd.f32 %v2027, %v1997
      %v2029 = vadd.f32 %v2028, %v1998
      %v2030 = vadd.f32 %v2029, %v1999
      %v2031 = vadd.f32 %v2030, %v2000
      %v2032 = vadd.f32 %v2031, %v2001
      %v2033 = vadd.f32 %v2032, %v2002
      %v2034 = vadd.f32 %v2033, %v2003
      %v2035 = vadd.f32 %v2034, %v2004
      %v2036 = vadd.f32 %v2035, %v2005
      %v2037 = vadd.f32 %v2036, %v2006
      %v2038 = vadd.f32 %v2037, %v2007
      %v2039 = vadd.f32 %v2038, %v2008
      %v2040 = vadd.f32 %v2039, %v2009
      %v2041 = vadd.f32 %v2040, %v2010
      %v2042 = vadd.f32 %v2041, %v2011
      %v2043 = vadd.f32 %v2042, %v2012
      %v2044 = vadd.f32 %v2043, %v2013
      %v2045 = vrot.slane %v2044, 4
      %v2046 = vadd.f32 %v2044, %v2045
      %v2047 = vrot.slane %v2046, 2
      %v2048 = vadd.f32 %v2046, %v2047
      %v2049 = vrot.slane %v2048, 1
      %v2050 = vadd.f32 %v2048, %v2049
      %vm2051 = vcmask 1040384
      %v2052 = vsel %vm2051, %v1981, %v2050
      %2053 = vst [vmem:[%s252] sm:$0x3] %v2052
      %p2054 = scmp.lt.s32.totalorder %s20, 1
      %s2055 = scalar_select %p2054, %s20, 1
      %p2056 = scmp.lt.s32.totalorder %s21, 0
      %s2057 = scalar_select %p2056, %s21, 0
      %s2058 = smul.addr %s2057, 32
      %s2059 = smul.addr %s2055, 32
      %s2060 = sadd.s32 %s2058, %s2059
      %s2061 = smul.addr %s2060, 8
      %s2062 = scalar_lea.vmem %s3, %s2061
      %p2063 = scmp.lt.s32.totalorder %s20, 1
      %s2064 = scalar_select %p2063, %s20, 1
      %p2065 = scmp.lt.s32.totalorder %s21, 0
      %s2066 = scalar_select %p2065, %s21, 0
      %s2067 = sadd.s32 %s2066, %s2064
      %s2068 = smul.addr %s2067, 2
      %s2069 = scalar_lea.vmem %s4, %s2068
      // Predicated region
      $region33: #{double_conv.4} parent=31 // pred_check
        %p2070 = pneg %p118
      $region34: #{double_conv.4} parent=31 // pred_check_branch
        %2072 = sbr.rel (%p2070) target = $region36
      $region35: #{double_conv.4} parent=31 // pred_region
        _
      $region36: #{double_conv.4} parent=31 // pred_fallthru
        _
      // Predicated region
      $region37: #{double_conv.4} parent=31 // pred_check
        %p2073 = pneg %p146
      $region38: #{double_conv.4} parent=31 // pred_check_branch
        %2075 = sbr.rel (%p2073) target = $region40
      $region39: #{double_conv.4} parent=31 // pred_region
        _
      $region40: #{double_conv.4} parent=31 // pred_fallthru
        _
    $region32: #{double_conv.4} parent=5 // pred_fallthru
      _
    %p2076 = scmp.le.s32.totalorder 2, %s11
    // Predicated region
    $region41: #{double_conv.4} parent=5 // pred_check
      %p2077 = pneg %p2076
    $region42: #{double_conv.4} parent=5 // pred_check_branch
      %2079 = sbr.rel (%p2077) target = $region44
    $region43: #{double_conv.4} parent=5 // pred_region
      %s2080 = ssub.s32 %s11, 2
      // Predicated region
      $region45: #{double_conv.4} parent=43 // pred_check
        %p2081 = pneg %p124
      $region46: #{double_conv.4} parent=43 // pred_check_branch
        %2083 = sbr.rel (%p2081) target = $region48
      $region47: #{double_conv.4} parent=43 // pred_region
        %p2084 = scmp.lt.s32.totalorder %s22, 1
        %s2085 = scalar_select %p2084, %s22, 1
        %p2086 = scmp.lt.s32.totalorder %s23, 0
        %s2087 = scalar_select %p2086, %s23, 0
        %s2088 = smul.addr %s2087, 32
        %s2089 = smul.addr %s2085, 32
        %s2090 = sadd.s32 %s2088, %s2089
        %s2091 = smul.addr %s2090, 8
        %s2092 = scalar_lea.vmem %s3, %s2091
      $region48: #{double_conv.4} parent=43 // pred_fallthru
        _
      // Predicated region
      $region49: #{double_conv.4} parent=43 // pred_check
        %p2093 = pneg %p152
      $region50: #{double_conv.4} parent=43 // pred_check_branch
        %2095 = sbr.rel (%p2093) target = $region52
      $region51: #{double_conv.4} parent=43 // pred_region
        %p2096 = scmp.lt.s32.totalorder %s22, 1
        %s2097 = scalar_select %p2096, %s22, 1
        %p2098 = scmp.lt.s32.totalorder %s23, 0
        %s2099 = scalar_select %p2098, %s23, 0
        %s2100 = sadd.s32 %s2099, %s2097
        %s2101 = smul.addr %s2100, 2
        %s2102 = scalar_lea.vmem %s4, %s2101
      $region52: #{double_conv.4} parent=43 // pred_fallthru
        _
    $region44: #{double_conv.4} parent=5 // pred_fallthru
      _
  $region6: #{double_conv.4} parent=0 // loop_footer
    %s15 = sadd.s32 1, %s11
  $region7: #{double_conv.4} parent=0 // loop_footer_branch
    %10 = sbr.rel target = $region3
  $region8: #{double_conv.4} parent=0 // loop_exit
    _

// kernel: double_conv.6
$region0: #{double_conv.6}
  #allocation0 [shape = 'u32[]', space=smem, size = 0x4, offset = 0x4, fixed_abs, tag = 'smem constant byte address 0x4 - core index']
  #allocation1 [shape = 'u32[144,128]{1,0:T(1,128)}', space=vmem, size = 0x12000, scoped, tag = 'internal scratch']
  %s0 = inlined_call_operand.vmem [shape: f32[2,1,18,18,128], index: 0, kind: input, shape index: {}]
  %s1 = inlined_call_operand.vmem [shape: f32[1152,128], index: 1, kind: input, shape index: {}]
  %s2 = inlined_call_operand.vmem [shape: f32[1,128], index: 2, kind: input, shape index: {}]
  %s3 = inlined_call_operand.vmem [shape: f32[2,1,256,128], index: 3, kind: output, shape index: {0}]
  %s4 = inlined_call_operand.vmem [shape: f32[2,1,2,128], index: 4, kind: output, shape index: {1}]
  %5 = xla_tuple %s3, %s4
  %s6 = sld [smem:[#allocation0]]
  $region53: #{double_conv.6} parent=0
    _
  %s8 = ssub.s32 1, %s6
  %s9 = scalar_select 0, %s8, %s6
  loop: start=0, step=1, limit=4
  $region2: #{double_conv.6} parent=0 // loop_pre_header
    _
  $region3: #{double_conv.6} parent=0 // loop_header
    %s11 = sphi 0, %s15
    %p12 = scmp.ge.s32.totalorder %s11, 4
    %s18 = sphi 0, %s30
    %s19 = sphi 0, %s26
    %s20 = sphi 0, %s18
    %s21 = sphi 0, %s19
    %s22 = sphi 0, %s20
    %s23 = sphi 0, %s21
    %s35 = sphi 0, %s37
    %s38 = sphi 0, %s35
    %s39 = sphi 0, %s38
    %s55 = sphi 0, %s39
    %s59 = sphi 0, %s59
    %s61 = sphi 0, %s59
    %s62 = sphi 0, %s61
    %s76 = sphi 0, %s62
    %s80 = sphi 0, %s80
    %s82 = sphi 0, %s80
    %s83 = sphi 0, %s82
    %s97 = sphi 0, %s83
    %s105 = sphi 0, %s107
    %s108 = sphi 0, %s105
    %s109 = sphi 0, %s108
    %s125 = sphi 0, %s109
    %s133 = sphi 0, %s135
    %s136 = sphi 0, %s133
    %s137 = sphi 0, %s136
    %s153 = sphi 0, %s137
  $region4: #{double_conv.6} parent=0 // loop_header_branch
    %14 = sbr.rel (%p12) target = $region8
  $region5: #{double_conv.6} parent=0 // loop_body
    %s16 = ssub.s32 %s11, 1
    %s17 = ssub.s32 %s11, 2
    %s24 = sadd.s32 1, %s19
    %p25 = scmp.ge.s32.totalorder %s24, 1
    %s26 = scalar_select %p25, 0, %s24
    %s27 = sadd.s32 1, %s18
    %s28 = scalar_select %p25, %s27, %s18
    %p29 = scmp.ge.s32.totalorder %s28, 2
    %s30 = scalar_select %p29, 0, %s28
    %s31 = ssub.s32 %s18, %s30
    %s32 = ssub.s32 %s19, %s26
    %s33 = sor.u32 %s31, %s32
    %p34 = scmp.eq.s32.totalorder %s33, 0
    %s36 = sadd.s32 %s35, 1
    %s37 = scalar_select %p34, %s35, %s36
    %p40 = pneg %p34
    %p41 = scmp.eq.s32.totalorder %s11, 1
    %p42 = por %p40, %p41
    %p43 = scmp.ne.s32.totalorder %s35, %s38
    %p44 = scmp.eq.s32.totalorder %s11, 0
    %p45 = por %p43, %p44
    %p46 = scmp.ne.s32.totalorder %s35, %s38
    %p47 = scmp.eq.s32.totalorder %s16, 1
    %p48 = por %p46, %p47
    %p49 = scmp.ne.s32.totalorder %s38, %s39
    %p50 = scmp.eq.s32.totalorder %s16, 0
    %p51 = por %p49, %p50
    %p52 = scmp.ne.s32.totalorder %s38, %s39
    %p53 = scmp.eq.s32.totalorder %s17, 1
    %p54 = por %p52, %p53
    %p56 = scmp.ne.s32.totalorder %s39, %s55
    %p57 = scmp.eq.s32.totalorder %s17, 0
    %p58 = por %p56, %p57
    %s60 = sadd.s32 %s59, 1
    %p63 = scmp.eq.s32.totalorder %s11, 1
    %p64 = scmp.ne.s32.totalorder %s59, %s61
    %p65 = scmp.eq.s32.totalorder %s11, 0
    %p66 = por %p64, %p65
    %p67 = scmp.ne.s32.totalorder %s59, %s61
    %p68 = scmp.eq.s32.totalorder %s16, 1
    %p69 = por %p67, %p68
    %p70 = scmp.ne.s32.totalorder %s61, %s62
    %p71 = scmp.eq.s32.totalorder %s16, 0
    %p72 = por %p70, %p71
    %p73 = scmp.ne.s32.totalorder %s61, %s62
    %p74 = scmp.eq.s32.totalorder %s17, 1
    %p75 = por %p73, %p74
    %p77 = scmp.ne.s32.totalorder %s62, %s76
    %p78 = scmp.eq.s32.totalorder %s17, 0
    %p79 = por %p77, %p78
    %s81 = sadd.s32 %s80, 1
    %p84 = scmp.eq.s32.totalorder %s11, 1
    %p85 = scmp.ne.s32.totalorder %s80, %s82
    %p86 = scmp.eq.s32.totalorder %s11, 0
    %p87 = por %p85, %p86
    %p88 = scmp.ne.s32.totalorder %s80, %s82
    %p89 = scmp.eq.s32.totalorder %s16, 1
    %p90 = por %p88, %p89
    %p91 = scmp.ne.s32.totalorder %s82, %s83
    %p92 = scmp.eq.s32.totalorder %s16, 0
    %p93 = por %p91, %p92
    %p94 = scmp.ne.s32.totalorder %s82, %s83
    %p95 = scmp.eq.s32.totalorder %s17, 1
    %p96 = por %p94, %p95
    %p98 = scmp.ne.s32.totalorder %s83, %s97
    %p99 = scmp.eq.s32.totalorder %s17, 0
    %p100 = por %p98, %p99
    %s101 = ssub.s32 %s18, %s30
    %s102 = ssub.s32 %s19, %s26
    %s103 = sor.u32 %s101, %s102
    %p104 = scmp.eq.s32.totalorder %s103, 0
    %s106 = sadd.s32 %s105, 1
    %s107 = scalar_select %p104, %s105, %s106
    %p110 = pneg %p104
    %p111 = scmp.eq.s32.totalorder %s11, 1
    %p112 = por %p110, %p111
    %p113 = scmp.ne.s32.totalorder %s105, %s108
    %p114 = scmp.eq.s32.totalorder %s11, 0
    %p115 = por %p113, %p114
    %p116 = scmp.ne.s32.totalorder %s105, %s108
    %p117 = scmp.eq.s32.totalorder %s16, 1
    %p118 = por %p116, %p117
    %p119 = scmp.ne.s32.totalorder %s108, %s109
    %p120 = scmp.eq.s32.totalorder %s16, 0
    %p121 = por %p119, %p120
    %p122 = scmp.ne.s32.totalorder %s108, %s109
    %p123 = scmp.eq.s32.totalorder %s17, 1
    %p124 = por %p122, %p123
    %p126 = scmp.ne.s32.totalorder %s109, %s125
    %p127 = scmp.eq.s32.totalorder %s17, 0
    %p128 = por %p126, %p127
    %s129 = ssub.s32 %s18, %s30
    %s130 = ssub.s32 %s19, %s26
    %s131 = sor.u32 %s129, %s130
    %p132 = scmp.eq.s32.totalorder %s131, 0
    %s134 = sadd.s32 %s133, 1
    %s135 = scalar_select %p132, %s133, %s134
    %p138 = pneg %p132
    %p139 = scmp.eq.s32.totalorder %s11, 1
    %p140 = por %p138, %p139
    %p141 = scmp.ne.s32.totalorder %s133, %s136
    %p142 = scmp.eq.s32.totalorder %s11, 0
    %p143 = por %p141, %p142
    %p144 = scmp.ne.s32.totalorder %s133, %s136
    %p145 = scmp.eq.s32.totalorder %s16, 1
    %p146 = por %p144, %p145
    %p147 = scmp.ne.s32.totalorder %s136, %s137
    %p148 = scmp.eq.s32.totalorder %s16, 0
    %p149 = por %p147, %p148
    %p150 = scmp.ne.s32.totalorder %s136, %s137
    %p151 = scmp.eq.s32.totalorder %s17, 1
    %p152 = por %p150, %p151
    %p154 = scmp.ne.s32.totalorder %s137, %s153
    %p155 = scmp.eq.s32.totalorder %s17, 0
    %p156 = por %p154, %p155
    %p157 = scmp.le.s32.totalorder 1, %s11
    %p158 = scmp.lt.s32.totalorder %s11, 3
    %p159 = pnand %p157, %p158
    %p160 = pneg %p159
    // Predicated region
    $region9: #{double_conv.6} parent=5 // pred_check
      _
    $region10: #{double_conv.6} parent=5 // pred_check_branch
      %162 = sbr.rel (%p159) target = $region12
    $region11: #{double_conv.6} parent=5 // pred_region
      %s163 = ssub.s32 %s11, 1
      // Predicated region
      $region13: #{double_conv.6} parent=11 // pred_check
        %p164 = pneg %p72
      $region14: #{double_conv.6} parent=11 // pred_check_branch
        %166 = sbr.rel (%p164) target = $region16
      $region15: #{double_conv.6} parent=11 // pred_region
        _
      $region16: #{double_conv.6} parent=11 // pred_fallthru
        _
      // Predicated region
      $region17: #{double_conv.6} parent=11 // pred_check
        %p167 = pneg %p93
      $region18: #{double_conv.6} parent=11 // pred_check_branch
        %169 = sbr.rel (%p167) target = $region20
      $region19: #{double_conv.6} parent=11 // pred_region
        _
      $region20: #{double_conv.6} parent=11 // pred_fallthru
        _
    $region12: #{double_conv.6} parent=5 // pred_fallthru
      _
    %p170 = scmp.lt.s32.totalorder %s11, 2
    // Predicated region
    $region21: #{double_conv.6} parent=5 // pred_check
      %p171 = pneg %p170
    $region22: #{double_conv.6} parent=5 // pred_check_branch
      %173 = sbr.rel (%p171) target = $region24
    $region23: #{double_conv.6} parent=5 // pred_region
      // Predicated region
      $region25: #{double_conv.6} parent=23 // pred_check
        %p174 = pneg %p45
      $region26: #{double_conv.6} parent=23 // pred_check_branch
        %176 = sbr.rel (%p174) target = $region28
      $region27: #{double_conv.6} parent=23 // pred_region
        %p177 = scmp.lt.s32.totalorder %s18, 1
        %s178 = scalar_select %p177, %s18, 1
        %p179 = scmp.lt.s32.totalorder %s19, 0
        %s180 = scalar_select %p179, %s19, 0
        %s181 = smul.addr %s180, 54
        %s182 = smul.addr %s178, 54
        %s183 = sadd.s32 %s181, %s182
        %s184 = smul.addr %s183, 8
        %s185 = scalar_lea.vmem %s0, %s184
      $region28: #{double_conv.6} parent=23 // pred_fallthru
        _
    $region24: #{double_conv.6} parent=5 // pred_fallthru
      _
    %p186 = scmp.le.s32.totalorder 1, %s11
    %p187 = scmp.lt.s32.totalorder %s11, 3
    %p188 = pnand %p186, %p187
    %p189 = pneg %p188
    // Predicated region
    $region29: #{double_conv.6} parent=5 // pred_check
      _
    $region30: #{double_conv.6} parent=5 // pred_check_branch
      %191 = sbr.rel (%p188) target = $region32
    $region31: #{double_conv.6} parent=5 // pred_region
      %s192 = ssub.s32 %s11, 1
      %p193 = scmp.lt.s32.totalorder %s20, 1
      %s194 = scalar_select %p193, %s20, 1
      %p195 = scmp.lt.s32.totalorder %s21, 0
      %s196 = scalar_select %p195, %s21, 0
      %s197 = smul.addr %s196, 54
      %s198 = smul.addr %s194, 54
      %s199 = sadd.s32 %s197, %s198
      %s200 = smul.addr %s199, 8
      %s201 = scalar_lea.vmem %s0, %s200
      %p202 = pneg %p51
      %p203 = pneg %p48
      %p204 = pneg %p72
      %p205 = pneg %p69
      %p206 = pneg %p93
      %p207 = pneg %p90
      %p208 = pneg %p121
      %p209 = pneg %p118
      %p210 = scmp.lt.s32.totalorder %s20, 1
      %s211 = scalar_select %p210, %s20, 1
      %p212 = scmp.lt.s32.totalorder %s21, 0
      %s213 = scalar_select %p212, %s21, 0
      %s214 = smul.addr %s213, 32
      %s215 = smul.addr %s211, 32
      %s216 = sadd.s32 %s214, %s215
      %s217 = smul.addr %s216, 8
      %s218 = scalar_lea.vmem %s3, %s217
      %p219 = pneg %p149
      %p220 = pneg %p146
      %p221 = scmp.lt.s32.totalorder %s20, 1
      %s222 = scalar_select %p221, %s20, 1
      %p223 = scmp.lt.s32.totalorder %s21, 0
      %s224 = scalar_select %p223, %s21, 0
      %s225 = sadd.s32 %s224, %s222
      %s226 = smul.addr %s225, 2
      %s227 = scalar_lea.vmem %s4, %s226
      %p228 = scmp.lt.s32.totalorder %s20, 1
      %s229 = scalar_select %p228, %s20, 1
      %p230 = scmp.lt.s32.totalorder %s21, 0
      %s231 = scalar_select %p230, %s21, 0
      %s232 = smul.addr %s231, 54
      %s233 = smul.addr %s229, 54
      %s234 = sadd.s32 %s232, %s233
      %s235 = smul.addr %s234, 8
      %s236 = scalar_lea.vmem %s0, %s235
      %p237 = scmp.lt.s32.totalorder %s20, 1
      %s238 = scalar_select %p237, %s20, 1
      %p239 = scmp.lt.s32.totalorder %s21, 0
      %s240 = scalar_select %p239, %s21, 0
      %s241 = smul.addr %s240, 32
      %s242 = smul.addr %s238, 32
      %s243 = sadd.s32 %s241, %s242
      %s244 = smul.addr %s243, 8
      %s245 = scalar_lea.vmem %s3, %s244
      %p246 = scmp.lt.s32.totalorder %s20, 1
      %s247 = scalar_select %p246, %s20, 1
      %p248 = scmp.lt.s32.totalorder %s21, 0
      %s249 = scalar_select %p248, %s21, 0
      %s250 = sadd.s32 %s249, %s247
      %s251 = smul.addr %s250, 2
      %s252 = scalar_lea.vmem %s4, %s251
      %v253 = vld [vmem:[%s236] sm:$0xff]
      %v254 = vld [vmem:[%s236 + $0x8] sm:$0xff]
      %v255 = vld [vmem:[%s236 + $0x10] sm:$0x3]
      %v256 = vld [vmem:[%s236 + $0x18] sm:$0xff]
      %v257 = vld [vmem:[%s236 + $0x20] sm:$0xff]
      %v258 = vld [vmem:[%s236 + $0x28] sm:$0x3]
      %v259 = vld [vmem:[%s236 + $0x30] sm:$0xff]
      %v260 = vld [vmem:[%s236 + $0x38] sm:$0xff]
      %v261 = vld [vmem:[%s236 + $0x40] sm:$0x3]
      %v262 = vld [vmem:[%s236 + $0x48] sm:$0xff]
      %v263 = vld [vmem:[%s236 + $0x50] sm:$0xff]
      %v264 = vld [vmem:[%s236 + $0x58] sm:$0x3]
      %v265 = vld [vmem:[%s236 + $0x60] sm:$0xff]
      %v266 = vld [vmem:[%s236 + $0x68] sm:$0xff]
      %v267 = vld [vmem:[%s236 + $0x70] sm:$0x3]
      %v268 = vld [vmem:[%s236 + $0x78] sm:$0xff]
      %v269 = vld [vmem:[%s236 + $0x80] sm:$0xff]
      %v270 = vld [vmem:[%s236 + $0x88] sm:$0x3]
      %v271 = vld [vmem:[%s236 + $0x90] sm:$0xff]
      %v272 = vld [vmem:[%s236 + $0x98] sm:$0xff]
      %v273 = vld [vmem:[%s236 + $0xa0] sm:$0x3]
      %v274 = vld [vmem:[%s236 + $0xa8] sm:$0xff]
      %v275 = vld [vmem:[%s236 + $0xb0] sm:$0xff]
      %v276 = vld [vmem:[%s236 + $0xb8] sm:$0x3]
      %v277 = vld [vmem:[%s236 + $0xc0] sm:$0xff]
      %v278 = vld [vmem:[%s236 + $0xc8] sm:$0xff]
      %v279 = vld [vmem:[%s236 + $0xd0] sm:$0x3]
      %v280 = vld [vmem:[%s236 + $0xd8] sm:$0xff]
      %v281 = vld [vmem:[%s236 + $0xe0] sm:$0xff]
      %v282 = vld [vmem:[%s236 + $0xe8] sm:$0x3]
      %v283 = vld [vmem:[%s236 + $0xf0] sm:$0xff]
      %v284 = vld [vmem:[%s236 + $0xf8] sm:$0xff]
      %v285 = vld [vmem:[%s236 + $0x100] sm:$0x3]
      %v286 = vld [vmem:[%s236 + $0x108] sm:$0xff]
      %v287 = vld [vmem:[%s236 + $0x110] sm:$0xff]
      %v288 = vld [vmem:[%s236 + $0x118] sm:$0x3]
      %v289 = vld [vmem:[%s236 + $0x120] sm:$0xff]
      %v290 = vld [vmem:[%s236 + $0x128] sm:$0xff]
      %v291 = vld [vmem:[%s236 + $0x130] sm:$0x3]
      %v292 = vld [vmem:[%s236 + $0x138] sm:$0xff]
      %v293 = vld [vmem:[%s236 + $0x140] sm:$0xff]
      %v294 = vld [vmem:[%s236 + $0x148] sm:$0x3]
      %v295 = vld [vmem:[%s236 + $0x150] sm:$0xff]
      %v296 = vld [vmem:[%s236 + $0x158] sm:$0xff]
      %v297 = vld [vmem:[%s236 + $0x160] sm:$0x3]
      %v298 = vld [vmem:[%s236 + $0x168] sm:$0xff]
      %v299 = vld [vmem:[%s236 + $0x170] sm:$0xff]
      %v300 = vld [vmem:[%s236 + $0x178] sm:$0x3]
      %v301 = vld [vmem:[%s236 + $0x180] sm:$0xff]
      %v302 = vld [vmem:[%s236 + $0x188] sm:$0xff]
      %v303 = vld [vmem:[%s236 + $0x190] sm:$0x3]
      %v304 = vld [vmem:[%s236 + $0x198] sm:$0xff]
      %v305 = vld [vmem:[%s236 + $0x1a0] sm:$0xff]
      %v306 = vld [vmem:[%s236 + $0x1a8] sm:$0x3]
      %vm355 = vcmask 1046528
      %v356 = vrot.slane %v253, 1
      %v357 = vrot.slane %v254, 1
      %v358 = vsel %vm355, %v356, %v357
      %v359 = vrot.slane %v255, 1
      %v360 = vsel %vm355, %v357, %v359
      %v361 = vrot.slane %v256, 1
      %v362 = vrot.slane %v257, 1
      %v363 = vsel %vm355, %v361, %v362
      %v364 = vrot.slane %v258, 1
      %v365 = vsel %vm355, %v362, %v364
      %v366 = vrot.slane %v259, 1
      %v367 = vrot.slane %v260, 1
      %v368 = vsel %vm355, %v366, %v367
      %v369 = vrot.slane %v261, 1
      %v370 = vsel %vm355, %v367, %v369
      %v371 = vrot.slane %v262, 1
      %v372 = vrot.slane %v263, 1
      %v373 = vsel %vm355, %v371, %v372
      %v374 = vrot.slane %v264, 1
      %v375 = vsel %vm355, %v372, %v374
      %v376 = vrot.slane %v265, 1
      %v377 = vrot.slane %v266, 1
      %v378 = vsel %vm355, %v376, %v377
      %v379 = vrot.slane %v267, 1
      %v380 = vsel %vm355, %v377, %v379
      %v381 = vrot.slane %v268, 1
      %v382 = vrot.slane %v269, 1
      %v383 = vsel %vm355, %v381, %v382
      %v384 = vrot.slane %v270, 1
      %v385 = vsel %vm355, %v382, %v384
      %v386 = vrot.slane %v271, 1
      %v387 = vrot.slane %v272, 1
      %v388 = vsel %vm355, %v386, %v387
      %v389 = vrot.slane %v273, 1
      %v390 = vsel %vm355, %v387, %v389
      %v391 = vrot.slane %v274, 1
      %v392 = vrot.slane %v275, 1
      %v393 = vsel %vm355, %v391, %v392
      %v394 = vrot.slane %v276, 1
      %v395 = vsel %vm355, %v392, %v394
      %v396 = vrot.slane %v277, 1
      %v397 = vrot.slane %v278, 1
      %v398 = vsel %vm355, %v396, %v397
      %v399 = vrot.slane %v279, 1
      %v400 = vsel %vm355, %v397, %v399
      %v401 = vrot.slane %v280, 1
      %v402 = vrot.slane %v281, 1
      %v403 = vsel %vm355, %v401, %v402
      %v404 = vrot.slane %v282, 1
      %v405 = vsel %vm355, %v402, %v404
      %v406 = vrot.slane %v283, 1
      %v407 = vrot.slane %v284, 1
      %v408 = vsel %vm355, %v406, %v407
      %v409 = vrot.slane %v285, 1
      %v410 = vsel %vm355, %v407, %v409
      %v411 = vrot.slane %v286, 1
      %v412 = vrot.slane %v287, 1
      %v413 = vsel %vm355, %v411, %v412
      %v414 = vrot.slane %v288, 1
      %v415 = vsel %vm355, %v412, %v414
      %v416 = vrot.slane %v289, 1
      %v417 = vrot.slane %v290, 1
      %v418 = vsel %vm355, %v416, %v417
      %v419 = vrot.slane %v291, 1
      %v420 = vsel %vm355, %v417, %v419
      %v421 = vrot.slane %v292, 1
      %v422 = vrot.slane %v293, 1
      %v423 = vsel %vm355, %v421, %v422
      %v424 = vrot.slane %v294, 1
      %v425 = vsel %vm355, %v422, %v424
      %v426 = vrot.slane %v295, 1
      %v427 = vrot.slane %v296, 1
      %v428 = vsel %vm355, %v426, %v427
      %v429 = vrot.slane %v297, 1
      %v430 = vsel %vm355, %v427, %v429
      %v431 = vrot.slane %v298, 1
      %v432 = vrot.slane %v299, 1
      %v433 = vsel %vm355, %v431, %v432
      %v434 = vrot.slane %v300, 1
      %v435 = vsel %vm355, %v432, %v434
      %vm468 = vcmask 1045504
      %v469 = vrot.slane %v253, 2
      %v470 = vrot.slane %v254, 2
      %v471 = vsel %vm468, %v469, %v470
      %v472 = vrot.slane %v255, 2
      %v473 = vsel %vm468, %v470, %v472
      %v474 = vrot.slane %v256, 2
      %v475 = vrot.slane %v257, 2
      %v476 = vsel %vm468, %v474, %v475
      %v477 = vrot.slane %v258, 2
      %v478 = vsel %vm468, %v475, %v477
      %v479 = vrot.slane %v259, 2
      %v480 = vrot.slane %v260, 2
      %v481 = vsel %vm468, %v479, %v480
      %v482 = vrot.slane %v261, 2
      %v483 = vsel %vm468, %v480, %v482
      %v484 = vrot.slane %v262, 2
      %v485 = vrot.slane %v263, 2
      %v486 = vsel %vm468, %v484, %v485
      %v487 = vrot.slane %v264, 2
      %v488 = vsel %vm468, %v485, %v487
      %v489 = vrot.slane %v265, 2
      %v490 = vrot.slane %v266, 2
      %v491 = vsel %vm468, %v489, %v490
      %v492 = vrot.slane %v267, 2
      %v493 = vsel %vm468, %v490, %v492
      %v494 = vrot.slane %v268, 2
      %v495 = vrot.slane %v269, 2
      %v496 = vsel %vm468, %v494, %v495
      %v497 = vrot.slane %v270, 2
      %v498 = vsel %vm468, %v495, %v497
      %v499 = vrot.slane %v271, 2
      %v500 = vrot.slane %v272, 2
      %v501 = vsel %vm468, %v499, %v500
      %v502 = vrot.slane %v273, 2
      %v503 = vsel %vm468, %v500, %v502
      %v504 = vrot.slane %v274, 2
      %v505 = vrot.slane %v275, 2
      %v506 = vsel %vm468, %v504, %v505
      %v507 = vrot.slane %v276, 2
      %v508 = vsel %vm468, %v505, %v507
      %v509 = vrot.slane %v277, 2
      %v510 = vrot.slane %v278, 2
      %v511 = vsel %vm468, %v509, %v510
      %v512 = vrot.slane %v279, 2
      %v513 = vsel %vm468, %v510, %v512
      %v514 = vrot.slane %v280, 2
      %v515 = vrot.slane %v281, 2
      %v516 = vsel %vm468, %v514, %v515
      %v517 = vrot.slane %v282, 2
      %v518 = vsel %vm468, %v515, %v517
      %v519 = vrot.slane %v283, 2
      %v520 = vrot.slane %v284, 2
      %v521 = vsel %vm468, %v519, %v520
      %v522 = vrot.slane %v285, 2
      %v523 = vsel %vm468, %v520, %v522
      %v524 = vrot.slane %v286, 2
      %v525 = vrot.slane %v287, 2
      %v526 = vsel %vm468, %v524, %v525
      %v527 = vrot.slane %v288, 2
      %v528 = vsel %vm468, %v525, %v527
      %v529 = vrot.slane %v289, 2
      %v530 = vrot.slane %v290, 2
      %v531 = vsel %vm468, %v529, %v530
      %v532 = vrot.slane %v291, 2
      %v533 = vsel %vm468, %v530, %v532
      %v534 = vrot.slane %v292, 2
      %v535 = vrot.slane %v293, 2
      %v536 = vsel %vm468, %v534, %v535
      %v537 = vrot.slane %v294, 2
      %v538 = vsel %vm468, %v535, %v537
      %v539 = vrot.slane %v295, 2
      %v540 = vrot.slane %v296, 2
      %v541 = vsel %vm468, %v539, %v540
      %v542 = vrot.slane %v297, 2
      %v543 = vsel %vm468, %v540, %v542
      %v544 = vrot.slane %v298, 2
      %v545 = vrot.slane %v299, 2
      %v546 = vsel %vm468, %v544, %v545
      %v547 = vrot.slane %v300, 2
      %v548 = vsel %vm468, %v545, %v547
      %v584 = vrot.slane %v301, 1
      %v585 = vrot.slane %v302, 1
      %v586 = vsel %vm355, %v584, %v585
      %v587 = vrot.slane %v303, 1
      %v588 = vsel %vm355, %v585, %v587
      %v591 = vrot.slane %v301, 2
      %v592 = vrot.slane %v302, 2
      %v593 = vsel %vm468, %v591, %v592
      %v594 = vrot.slane %v303, 2
      %v595 = vsel %vm468, %v592, %v594
      %v601 = vrot.slane %v304, 1
      %v602 = vrot.slane %v305, 1
      %v603 = vsel %vm355, %v601, %v602
      %v604 = vrot.slane %v306, 1
      %v605 = vsel %vm355, %v602, %v604
      %v608 = vrot.slane %v304, 2
      %v609 = vrot.slane %v305, 2
      %v610 = vsel %vm468, %v608, %v609
      %v611 = vrot.slane %v306, 2
      %v612 = vsel %vm468, %v609, %v611
      %v615 = vld [vmem:[%s1] sm:$0xff]
      %v616 = vld [vmem:[%s1 + $0x8] sm:$0xff]
      %v617 = vld [vmem:[%s1 + $0x10] sm:$0xff]
      %v618 = vld [vmem:[%s1 + $0x18] sm:$0xff]
      %v619 = vld [vmem:[%s1 + $0x20] sm:$0xff]
      %v620 = vld [vmem:[%s1 + $0x28] sm:$0xff]
      %v621 = vld [vmem:[%s1 + $0x30] sm:$0xff]
      %v622 = vld [vmem:[%s1 + $0x38] sm:$0xff]
      %v623 = vld [vmem:[%s1 + $0x40] sm:$0xff]
      %v624 = vld [vmem:[%s1 + $0x48] sm:$0xff]
      %v625 = vld [vmem:[%s1 + $0x50] sm:$0xff]
      %v626 = vld [vmem:[%s1 + $0x58] sm:$0xff]
      %v627 = vld [vmem:[%s1 + $0x60] sm:$0xff]
      %v628 = vld [vmem:[%s1 + $0x68] sm:$0xff]
      %v629 = vld [vmem:[%s1 + $0x70] sm:$0xff]
      %v630 = vld [vmem:[%s1 + $0x78] sm:$0xff]
      %v631 = vld [vmem:[%s1 + $0x80] sm:$0xff]
      %v632 = vld [vmem:[%s1 + $0x88] sm:$0xff]
      %v633 = vld [vmem:[%s1 + $0x90] sm:$0xff]
      %v634 = vld [vmem:[%s1 + $0x98] sm:$0xff]
      %v635 = vld [vmem:[%s1 + $0xa0] sm:$0xff]
      %v636 = vld [vmem:[%s1 + $0xa8] sm:$0xff]
      %v637 = vld [vmem:[%s1 + $0xb0] sm:$0xff]
      %v638 = vld [vmem:[%s1 + $0xb8] sm:$0xff]
      %v639 = vld [vmem:[%s1 + $0xc0] sm:$0xff]
      %v640 = vld [vmem:[%s1 + $0xc8] sm:$0xff]
      %v641 = vld [vmem:[%s1 + $0xd0] sm:$0xff]
      %v642 = vld [vmem:[%s1 + $0xd8] sm:$0xff]
      %v643 = vld [vmem:[%s1 + $0xe0] sm:$0xff]
      %v644 = vld [vmem:[%s1 + $0xe8] sm:$0xff]
      %v645 = vld [vmem:[%s1 + $0xf0] sm:$0xff]
      %v646 = vld [vmem:[%s1 + $0xf8] sm:$0xff]
      %v647 = vld [vmem:[%s1 + $0x100] sm:$0xff]
      %v648 = vld [vmem:[%s1 + $0x108] sm:$0xff]
      %v649 = vld [vmem:[%s1 + $0x110] sm:$0xff]
      %v650 = vld [vmem:[%s1 + $0x118] sm:$0xff]
      %v651 = vld [vmem:[%s1 + $0x120] sm:$0xff]
      %v652 = vld [vmem:[%s1 + $0x128] sm:$0xff]
      %v653 = vld [vmem:[%s1 + $0x130] sm:$0xff]
      %v654 = vld [vmem:[%s1 + $0x138] sm:$0xff]
      %v655 = vld [vmem:[%s1 + $0x140] sm:$0xff]
      %v656 = vld [vmem:[%s1 + $0x148] sm:$0xff]
      %v657 = vld [vmem:[%s1 + $0x150] sm:$0xff]
      %v658 = vld [vmem:[%s1 + $0x158] sm:$0xff]
      %v659 = vld [vmem:[%s1 + $0x160] sm:$0xff]
      %v660 = vld [vmem:[%s1 + $0x168] sm:$0xff]
      %v661 = vld [vmem:[%s1 + $0x170] sm:$0xff]
      %v662 = vld [vmem:[%s1 + $0x178] sm:$0xff]
      %v663 = vld [vmem:[%s1 + $0x180] sm:$0xff]
      %v664 = vld [vmem:[%s1 + $0x188] sm:$0xff]
      %v665 = vld [vmem:[%s1 + $0x190] sm:$0xff]
      %v666 = vld [vmem:[%s1 + $0x198] sm:$0xff]
      %v667 = vld [vmem:[%s1 + $0x1a0] sm:$0xff]
      %v668 = vld [vmem:[%s1 + $0x1a8] sm:$0xff]
      %v669 = vld [vmem:[%s1 + $0x1b0] sm:$0xff]
      %v670 = vld [vmem:[%s1 + $0x1b8] sm:$0xff]
      %v671 = vld [vmem:[%s1 + $0x1c0] sm:$0xff]
      %v672 = vld [vmem:[%s1 + $0x1c8] sm:$0xff]
      %v673 = vld [vmem:[%s1 + $0x1d0] sm:$0xff]
      %v674 = vld [vmem:[%s1 + $0x1d8] sm:$0xff]
      %v675 = vld [vmem:[%s1 + $0x1e0] sm:$0xff]
      %v676 = vld [vmem:[%s1 + $0x1e8] sm:$0xff]
      %v677 = vld [vmem:[%s1 + $0x1f0] sm:$0xff]
      %v678 = vld [vmem:[%s1 + $0x1f8] sm:$0xff]
      %v679 = vld [vmem:[%s1 + $0x200] sm:$0xff]
      %v680 = vld [vmem:[%s1 + $0x208] sm:$0xff]
      %v681 = vld [vmem:[%s1 + $0x210] sm:$0xff]
      %v682 = vld [vmem:[%s1 + $0x218] sm:$0xff]
      %v683 = vld [vmem:[%s1 + $0x220] sm:$0xff]
      %v684 = vld [vmem:[%s1 + $0x228] sm:$0xff]
      %v685 = vld [vmem:[%s1 + $0x230] sm:$0xff]
      %v686 = vld [vmem:[%s1 + $0x238] sm:$0xff]
      %v687 = vld [vmem:[%s1 + $0x240] sm:$0xff]
      %v688 = vld [vmem:[%s1 + $0x248] sm:$0xff]
      %v689 = vld [vmem:[%s1 + $0x250] sm:$0xff]
      %v690 = vld [vmem:[%s1 + $0x258] sm:$0xff]
      %v691 = vld [vmem:[%s1 + $0x260] sm:$0xff]
      %v692 = vld [vmem:[%s1 + $0x268] sm:$0xff]
      %v693 = vld [vmem:[%s1 + $0x270] sm:$0xff]
      %v694 = vld [vmem:[%s1 + $0x278] sm:$0xff]
      %v695 = vld [vmem:[%s1 + $0x280] sm:$0xff]
      %v696 = vld [vmem:[%s1 + $0x288] sm:$0xff]
      %v697 = vld [vmem:[%s1 + $0x290] sm:$0xff]
      %v698 = vld [vmem:[%s1 + $0x298] sm:$0xff]
      %v699 = vld [vmem:[%s1 + $0x2a0] sm:$0xff]
      %v700 = vld [vmem:[%s1 + $0x2a8] sm:$0xff]
      %v701 = vld [vmem:[%s1 + $0x2b0] sm:$0xff]
      %v702 = vld [vmem:[%s1 + $0x2b8] sm:$0xff]
      %v703 = vld [vmem:[%s1 + $0x2c0] sm:$0xff]
      %v704 = vld [vmem:[%s1 + $0x2c8] sm:$0xff]
      %v705 = vld [vmem:[%s1 + $0x2d0] sm:$0xff]
      %v706 = vld [vmem:[%s1 + $0x2d8] sm:$0xff]
      %v707 = vld [vmem:[%s1 + $0x2e0] sm:$0xff]
      %v708 = vld [vmem:[%s1 + $0x2e8] sm:$0xff]
      %v709 = vld [vmem:[%s1 + $0x2f0] sm:$0xff]
      %v710 = vld [vmem:[%s1 + $0x2f8] sm:$0xff]
      %v711 = vld [vmem:[%s1 + $0x300] sm:$0xff]
      %v712 = vld [vmem:[%s1 + $0x308] sm:$0xff]
      %v713 = vld [vmem:[%s1 + $0x310] sm:$0xff]
      %v714 = vld [vmem:[%s1 + $0x318] sm:$0xff]
      %v715 = vld [vmem:[%s1 + $0x320] sm:$0xff]
      %v716 = vld [vmem:[%s1 + $0x328] sm:$0xff]
      %v717 = vld [vmem:[%s1 + $0x330] sm:$0xff]
      %v718 = vld [vmem:[%s1 + $0x338] sm:$0xff]
      %v719 = vld [vmem:[%s1 + $0x340] sm:$0xff]
      %v720 = vld [vmem:[%s1 + $0x348] sm:$0xff]
      %v721 = vld [vmem:[%s1 + $0x350] sm:$0xff]
      %v722 = vld [vmem:[%s1 + $0x358] sm:$0xff]
      %v723 = vld [vmem:[%s1 + $0x360] sm:$0xff]
      %v724 = vld [vmem:[%s1 + $0x368] sm:$0xff]
      %v725 = vld [vmem:[%s1 + $0x370] sm:$0xff]
      %v726 = vld [vmem:[%s1 + $0x378] sm:$0xff]
      %v727 = vld [vmem:[%s1 + $0x380] sm:$0xff]
      %v728 = vld [vmem:[%s1 + $0x388] sm:$0xff]
      %v729 = vld [vmem:[%s1 + $0x390] sm:$0xff]
      %v730 = vld [vmem:[%s1 + $0x398] sm:$0xff]
      %v731 = vld [vmem:[%s1 + $0x3a0] sm:$0xff]
      %v732 = vld [vmem:[%s1 + $0x3a8] sm:$0xff]
      %v733 = vld [vmem:[%s1 + $0x3b0] sm:$0xff]
      %v734 = vld [vmem:[%s1 + $0x3b8] sm:$0xff]
      %v735 = vld [vmem:[%s1 + $0x3c0] sm:$0xff]
      %v736 = vld [vmem:[%s1 + $0x3c8] sm:$0xff]
      %v737 = vld [vmem:[%s1 + $0x3d0] sm:$0xff]
      %v738 = vld [vmem:[%s1 + $0x3d8] sm:$0xff]
      %v739 = vld [vmem:[%s1 + $0x3e0] sm:$0xff]
      %v740 = vld [vmem:[%s1 + $0x3e8] sm:$0xff]
      %v741 = vld [vmem:[%s1 + $0x3f0] sm:$0xff]
      %v742 = vld [vmem:[%s1 + $0x3f8] sm:$0xff]
      %v743 = vld [vmem:[%s1 + $0x400] sm:$0xff]
      %v744 = vld [vmem:[%s1 + $0x408] sm:$0xff]
      %v745 = vld [vmem:[%s1 + $0x410] sm:$0xff]
      %v746 = vld [vmem:[%s1 + $0x418] sm:$0xff]
      %v747 = vld [vmem:[%s1 + $0x420] sm:$0xff]
      %v748 = vld [vmem:[%s1 + $0x428] sm:$0xff]
      %v749 = vld [vmem:[%s1 + $0x430] sm:$0xff]
      %v750 = vld [vmem:[%s1 + $0x438] sm:$0xff]
      %v751 = vld [vmem:[%s1 + $0x440] sm:$0xff]
      %v752 = vld [vmem:[%s1 + $0x448] sm:$0xff]
      %v753 = vld [vmem:[%s1 + $0x450] sm:$0xff]
      %v754 = vld [vmem:[%s1 + $0x458] sm:$0xff]
      %v755 = vld [vmem:[%s1 + $0x460] sm:$0xff]
      %v756 = vld [vmem:[%s1 + $0x468] sm:$0xff]
      %v757 = vld [vmem:[%s1 + $0x470] sm:$0xff]
      %v758 = vld [vmem:[%s1 + $0x478] sm:$0xff]
      %v759 = vld [vmem:[%s2] sm:$0x1]
      %v761 = vlaneseq
      %v762 = vshrl.u32 %v761, 7
      %v763 = vsub.s32 0, %v762
      %v764 = vrot.slane %v759, %v763
      %766 = vmatprep.subr.mxu0 0.0
      %767 = vmatpush1.msra.mxu0 %v630
      %768 = vmatprep.subr.mxu0 0.0
      %769 = vmatpush1.msra.mxu0 %v629
      %770 = vmatprep.subr.mxu0 0.0
      %771 = vmatpush1.msra.mxu0 %v628
      %772 = vmatprep.subr.mxu0 0.0
      %773 = vmatpush1.msra.mxu0 %v627
      %774 = vmatprep.subr.mxu0 0.0
      %775 = vmatpush1.msra.mxu0 %v626
      %776 = vmatprep.subr.mxu0 0.0
      %777 = vmatpush1.msra.mxu0 %v625
      %778 = vmatprep.subr.mxu0 0.0
      %779 = vmatpush1.msra.mxu0 %v624
      %780 = vmatprep.subr.mxu0 0.0
      %781 = vmatpush1.msra.mxu0 %v623
      %782 = vmatprep.subr.mxu0 0.0
      %783 = vmatpush1.msra.mxu0 %v622
      %784 = vmatprep.subr.mxu0 0.0
      %785 = vmatpush1.msra.mxu0 %v621
      %786 = vmatprep.subr.mxu0 0.0
      %787 = vmatpush1.msra.mxu0 %v620
      %788 = vmatprep.subr.mxu0 0.0
      %789 = vmatpush1.msra.mxu0 %v619
      %790 = vmatprep.subr.mxu0 0.0
      %791 = vmatpush1.msra.mxu0 %v618
      %792 = vmatprep.subr.mxu0 0.0
      %793 = vmatpush1.msra.mxu0 %v617
      %794 = vmatprep.subr.mxu0 0.0
      %795 = vmatpush1.msra.mxu0 %v616
      %796 = vmatprep.subr.mxu0 0.0
      %797 = vmatpush1.msra.mxu0 %v615
      %798 = vmatprep.subr.mxu0 0.0
      %799 = vmatpush2.msra.mxu0 %v646
      %800 = vmatprep.subr.mxu0 0.0
      %801 = vmatpush2.msra.mxu0 %v645
      %802 = vmatprep.subr.mxu0 0.0
      %803 = vmatpush2.msra.mxu0 %v644
      %804 = vmatprep.subr.mxu0 0.0
      %805 = vmatpush2.msra.mxu0 %v643
      %806 = vmatprep.subr.mxu0 0.0
      %807 = vmatpush2.msra.mxu0 %v642
      %808 = vmatprep.subr.mxu0 0.0
      %809 = vmatpush2.msra.mxu0 %v641
      %810 = vmatprep.subr.mxu0 0.0
      %811 = vmatpush2.msra.mxu0 %v640
      %812 = vmatprep.subr.mxu0 0.0
      %813 = vmatpush2.msra.mxu0 %v639
      %814 = vmatprep.subr.mxu0 0.0
      %815 = vmatpush2.msra.mxu0 %v638
      %816 = vmatprep.subr.mxu0 0.0
      %817 = vmatpush2.msra.mxu0 %v637
      %818 = vmatprep.subr.mxu0 0.0
      %819 = vmatpush2.msra.mxu0 %v636
      %820 = vmatprep.subr.mxu0 0.0
      %821 = vmatpush2.msra.mxu0 %v635
      %822 = vmatprep.subr.mxu0 0.0
      %823 = vmatpush2.msra.mxu0 %v634
      %824 = vmatprep.subr.mxu0 0.0
      %825 = vmatpush2.msra.mxu0 %v633
      %826 = vmatprep.subr.mxu0 0.0
      %827 = vmatpush2.msra.mxu0 %v632
      %828 = vmatprep.subr.mxu0 0.0
      %829 = vmatpush2.msra.mxu0 %v631
      %830 = vmatprep.mubr.f32.mxu0 %v358
      %831 = vmatmul.mubr.f32.gmra.mxu0 %v253
      %v832 = vpop.f32.mrf.mxu0
      %v833 = vadd.f32 %v764, %v832
      %v834 = vpop.f32.mrf.mxu0
      %835 = vmatprep.mubr.f32.mxu0 %v360
      %836 = vmatmul.mubr.f32.gmra.mxu0 %v254
      %v837 = vpop.f32.mrf.mxu0
      %v838 = vadd.f32 %v764, %v837
      %v839 = vpop.f32.mrf.mxu0
      %840 = vmatprep.mubr.f32.mxu0 %v363
      %841 = vmatmul.mubr.f32.gmra.mxu0 %v256
      %v842 = vpop.f32.mrf.mxu0
      %v843 = vadd.f32 %v764, %v842
      %v844 = vpop.f32.mrf.mxu0
      %845 = vmatprep.mubr.f32.mxu0 %v365
      %846 = vmatmul.mubr.f32.gmra.mxu0 %v257
      %v847 = vpop.f32.mrf.mxu0
      %v848 = vadd.f32 %v764, %v847
      %v849 = vpop.f32.mrf.mxu0
      %850 = vmatprep.mubr.f32.mxu0 %v368
      %851 = vmatmul.mubr.f32.gmra.mxu0 %v259
      %v852 = vpop.f32.mrf.mxu0
      %v853 = vadd.f32 %v764, %v852
      %v854 = vpop.f32.mrf.mxu0
      %855 = vmatprep.mubr.f32.mxu0 %v370
      %856 = vmatmul.mubr.f32.gmra.mxu0 %v260
      %v857 = vpop.f32.mrf.mxu0
      %v858 = vadd.f32 %v764, %v857
      %v859 = vpop.f32.mrf.mxu0
      %860 = vmatprep.mubr.f32.mxu0 %v373
      %861 = vmatmul.mubr.f32.gmra.mxu0 %v262
      %v862 = vpop.f32.mrf.mxu0
      %v863 = vadd.f32 %v764, %v862
      %v864 = vpop.f32.mrf.mxu0
      %865 = vmatprep.mubr.f32.mxu0 %v375
      %866 = vmatmul.mubr.f32.gmra.mxu0 %v263
      %v867 = vpop.f32.mrf.mxu0
      %v868 = vadd.f32 %v764, %v867
      %v869 = vpop.f32.mrf.mxu0
      %870 = vmatprep.mubr.f32.mxu0 %v378
      %871 = vmatmul.mubr.f32.gmra.mxu0 %v265
      %v872 = vpop.f32.mrf.mxu0
      %v873 = vadd.f32 %v764, %v872
      %v874 = vpop.f32.mrf.mxu0
      %875 = vmatprep.mubr.f32.mxu0 %v380
      %876 = vmatmul.mubr.f32.gmra.mxu0 %v266
      %v877 = vpop.f32.mrf.mxu0
      %v878 = vadd.f32 %v764, %v877
      %v879 = vpop.f32.mrf.mxu0
      %880 = vmatprep.mubr.f32.mxu0 %v383
      %881 = vmatmul.mubr.f32.gmra.mxu0 %v268
      %v882 = vpop.f32.mrf.mxu0
      %v883 = vadd.f32 %v764, %v882
      %v884 = vpop.f32.mrf.mxu0
      %885 = vmatprep.mubr.f32.mxu0 %v385
      %886 = vmatmul.mubr.f32.gmra.mxu0 %v269
      %v887 = vpop.f32.mrf.mxu0
      %v888 = vadd.f32 %v764, %v887
      %v889 = vpop.f32.mrf.mxu0
      %890 = vmatprep.mubr.f32.mxu0 %v388
      %891 = vmatmul.mubr.f32.gmra.mxu0 %v271
      %v892 = vpop.f32.mrf.mxu0
      %v893 = vadd.f32 %v764, %v892
      %v894 = vpop.f32.mrf.mxu0
      %895 = vmatprep.mubr.f32.mxu0 %v390
      %896 = vmatmul.mubr.f32.gmra.mxu0 %v272
      %v897 = vpop.f32.mrf.mxu0
      %v898 = vadd.f32 %v764, %v897
      %v899 = vpop.f32.mrf.mxu0
      %900 = vmatprep.mubr.f32.mxu0 %v393
      %901 = vmatmul.mubr.f32.gmra.mxu0 %v274
      %v902 = vpop.f32.mrf.mxu0
      %v903 = vadd.f32 %v764, %v902
      %v904 = vpop.f32.mrf.mxu0
      %905 = vmatprep.mubr.f32.mxu0 %v395
      %906 = vmatmul.mubr.f32.gmra.mxu0 %v275
      %v907 = vpop.f32.mrf.mxu0
      %v908 = vadd.f32 %v764, %v907
      %v909 = vpop.f32.mrf.mxu0
      %910 = vmatprep.mubr.f32.mxu0 %v398
      %911 = vmatmul.mubr.f32.gmra.mxu0 %v277
      %v912 = vpop.f32.mrf.mxu0
      %v913 = vadd.f32 %v764, %v912
      %v914 = vpop.f32.mrf.mxu0
      %915 = vmatprep.mubr.f32.mxu0 %v400
      %916 = vmatmul.mubr.f32.gmra.mxu0 %v278
      %v917 = vpop.f32.mrf.mxu0
      %v918 = vadd.f32 %v764, %v917
      %v919 = vpop.f32.mrf.mxu0
      %920 = vmatprep.mubr.f32.mxu0 %v403
      %921 = vmatmul.mubr.f32.gmra.mxu0 %v280
      %v922 = vpop.f32.mrf.mxu0
      %v923 = vadd.f32 %v764, %v922
      %v924 = vpop.f32.mrf.mxu0
      %925 = vmatprep.mubr.f32.mxu0 %v405
      %926 = vmatmul.mubr.f32.gmra.mxu0 %v281
      %v927 = vpop.f32.mrf.mxu0
      %v928 = vadd.f32 %v764, %v927
      %v929 = vpop.f32.mrf.mxu0
      %930 = vmatprep.mubr.f32.mxu0 %v408
      %931 = vmatmul.mubr.f32.gmra.mxu0 %v283
      %v932 = vpop.f32.mrf.mxu0
      %v933 = vadd.f32 %v764, %v932
      %v934 = vpop.f32.mrf.mxu0
      %935 = vmatprep.mubr.f32.mxu0 %v410
      %936 = vmatmul.mubr.f32.gmra.mxu0 %v284
      %v937 = vpop.f32.mrf.mxu0
      %v938 = vadd.f32 %v764, %v937
      %v939 = vpop.f32.mrf.mxu0
      %940 = vmatprep.mubr.f32.mxu0 %v413
      %941 = vmatmul.mubr.f32.gmra.mxu0 %v286
      %v942 = vpop.f32.mrf.mxu0
      %v943 = vadd.f32 %v764, %v942
      %v944 = vpop.f32.mrf.mxu0
      %945 = vmatprep.mubr.f32.mxu0 %v415
      %946 = vmatmul.mubr.f32.gmra.mxu0 %v287
      %v947 = vpop.f32.mrf.mxu0
      %v948 = vadd.f32 %v764, %v947
      %v949 = vpop.f32.mrf.mxu0
      %950 = vmatprep.mubr.f32.mxu0 %v418
      %951 = vmatmul.mubr.f32.gmra.mxu0 %v289
      %v952 = vpop.f32.mrf.mxu0
      %v953 = vadd.f32 %v764, %v952
      %v954 = vpop.f32.mrf.mxu0
      %955 = vmatprep.mubr.f32.mxu0 %v420
      %956 = vmatmul.mubr.f32.gmra.mxu0 %v290
      %v957 = vpop.f32.mrf.mxu0
      %v958 = vadd.f32 %v764, %v957
      %v959 = vpop.f32.mrf.mxu0
      %960 = vmatprep.mubr.f32.mxu0 %v423
      %961 = vmatmul.mubr.f32.gmra.mxu0 %v292
      %v962 = vpop.f32.mrf.mxu0
      %v963 = vadd.f32 %v764, %v962
      %v964 = vpop.f32.mrf.mxu0
      %965 = vmatprep.mubr.f32.mxu0 %v425
      %966 = vmatmul.mubr.f32.gmra.mxu0 %v293
      %v967 = vpop.f32.mrf.mxu0
      %v968 = vadd.f32 %v764, %v967
      %v969 = vpop.f32.mrf.mxu0
      %970 = vmatprep.mubr.f32.mxu0 %v428
      %971 = vmatmul.mubr.f32.gmra.mxu0 %v295
      %v972 = vpop.f32.mrf.mxu0
      %v973 = vadd.f32 %v764, %v972
      %v974 = vpop.f32.mrf.mxu0
      %975 = vmatprep.mubr.f32.mxu0 %v430
      %976 = vmatmul.mubr.f32.gmra.mxu0 %v296
      %v977 = vpop.f32.mrf.mxu0
      %v978 = vadd.f32 %v764, %v977
      %v979 = vpop.f32.mrf.mxu0
      %980 = vmatprep.mubr.f32.mxu0 %v433
      %981 = vmatmul.mubr.f32.gmra.mxu0 %v298
      %v982 = vpop.f32.mrf.mxu0
      %v983 = vadd.f32 %v764, %v982
      %v984 = vpop.f32.mrf.mxu0
      %985 = vmatprep.mubr.f32.mxu0 %v435
      %986 = vmatmul.mubr.f32.gmra.mxu0 %v299
      %v987 = vpop.f32.mrf.mxu0
      %v988 = vadd.f32 %v764, %v987
      %v989 = vpop.f32.mrf.mxu0
      %990 = vdwg.mxu0
      %991 = vmatprep.subr.mxu0 0.0
      %992 = vmatpush1.msra.mxu0 %v662
      %993 = vmatprep.subr.mxu0 0.0
      %994 = vmatpush1.msra.mxu0 %v661
      %995 = vmatprep.subr.mxu0 0.0
      %996 = vmatpush1.msra.mxu0 %v660
      %997 = vmatprep.subr.mxu0 0.0
      %998 = vmatpush1.msra.mxu0 %v659
      %999 = vmatprep.subr.mxu0 0.0
      %1000 = vmatpush1.msra.mxu0 %v658
      %1001 = vmatprep.subr.mxu0 0.0
      %1002 = vmatpush1.msra.mxu0 %v657
      %1003 = vmatprep.subr.mxu0 0.0
      %1004 = vmatpush1.msra.mxu0 %v656
      %1005 = vmatprep.subr.mxu0 0.0
      %1006 = vmatpush1.msra.mxu0 %v655
      %1007 = vmatprep.subr.mxu0 0.0
      %1008 = vmatpush1.msra.mxu0 %v654
      %1009 = vmatprep.subr.mxu0 0.0
      %1010 = vmatpush1.msra.mxu0 %v653
      %1011 = vmatprep.subr.mxu0 0.0
      %1012 = vmatpush1.msra.mxu0 %v652
      %1013 = vmatprep.subr.mxu0 0.0
      %1014 = vmatpush1.msra.mxu0 %v651
      %1015 = vmatprep.subr.mxu0 0.0
      %1016 = vmatpush1.msra.mxu0 %v650
      %1017 = vmatprep.subr.mxu0 0.0
      %1018 = vmatpush1.msra.mxu0 %v649
      %1019 = vmatprep.subr.mxu0 0.0
      %1020 = vmatpush1.msra.mxu0 %v648
      %1021 = vmatprep.subr.mxu0 0.0
      %1022 = vmatpush1.msra.mxu0 %v647
      %1023 = vmatprep.subr.mxu0 0.0
      %1024 = vmatpush2.msra.mxu0 %v678
      %1025 = vmatprep.subr.mxu0 0.0
      %1026 = vmatpush2.msra.mxu0 %v677
      %1027 = vmatprep.subr.mxu0 0.0
      %1028 = vmatpush2.msra.mxu0 %v676
      %1029 = vmatprep.subr.mxu0 0.0
      %1030 = vmatpush2.msra.mxu0 %v675
      %1031 = vmatprep.subr.mxu0 0.0
      %1032 = vmatpush2.msra.mxu0 %v674
      %1033 = vmatprep.subr.mxu0 0.0
      %1034 = vmatpush2.msra.mxu0 %v673
      %1035 = vmatprep.subr.mxu0 0.0
      %1036 = vmatpush2.msra.mxu0 %v672
      %1037 = vmatprep.subr.mxu0 0.0
      %1038 = vmatpush2.msra.mxu0 %v671
      %1039 = vmatprep.subr.mxu0 0.0
      %1040 = vmatpush2.msra.mxu0 %v670
      %1041 = vmatprep.subr.mxu0 0.0
      %1042 = vmatpush2.msra.mxu0 %v669
      %1043 = vmatprep.subr.mxu0 0.0
      %1044 = vmatpush2.msra.mxu0 %v668
      %1045 = vmatprep.subr.mxu0 0.0
      %1046 = vmatpush2.msra.mxu0 %v667
      %1047 = vmatprep.subr.mxu0 0.0
      %1048 = vmatpush2.msra.mxu0 %v666
      %1049 = vmatprep.subr.mxu0 0.0
      %1050 = vmatpush2.msra.mxu0 %v665
      %1051 = vmatprep.subr.mxu0 0.0
      %1052 = vmatpush2.msra.mxu0 %v664
      %1053 = vmatprep.subr.mxu0 0.0
      %1054 = vmatpush2.msra.mxu0 %v663
      %1055 = vmatprep.mubr.f32.mxu0 %v256
      %1056 = vmatmul.mubr.f32.gmra.mxu0 %v471
      %v1057 = vpop.f32.mrf.mxu0
      %v1058 = vadd.f32 %v833, %v1057
      %v1059 = vpop.f32.mrf.mxu0
      %1060 = vmatprep.mubr.f32.mxu0 %v257
      %1061 = vmatmul.mubr.f32.gmra.mxu0 %v473
      %v1062 = vpop.f32.mrf.mxu0
      %v1063 = vadd.f32 %v838, %v1062
      %v1064 = vpop.f32.mrf.mxu0
      %1065 = vmatprep.mubr.f32.mxu0 %v259
      %1066 = vmatmul.mubr.f32.gmra.mxu0 %v476
      %v1067 = vpop.f32.mrf.mxu0
      %v1068 = vadd.f32 %v843, %v1067
      %v1069 = vpop.f32.mrf.mxu0
      %1070 = vmatprep.mubr.f32.mxu0 %v260
      %1071 = vmatmul.mubr.f32.gmra.mxu0 %v478
      %v1072 = vpop.f32.mrf.mxu0
      %v1073 = vadd.f32 %v848, %v1072
      %v1074 = vpop.f32.mrf.mxu0
      %1075 = vmatprep.mubr.f32.mxu0 %v262
      %1076 = vmatmul.mubr.f32.gmra.mxu0 %v481
      %v1077 = vpop.f32.mrf.mxu0
      %v1078 = vadd.f32 %v853, %v1077
      %v1079 = vpop.f32.mrf.mxu0
      %1080 = vmatprep.mubr.f32.mxu0 %v263
      %1081 = vmatmul.mubr.f32.gmra.mxu0 %v483
      %v1082 = vpop.f32.mrf.mxu0
      %v1083 = vadd.f32 %v858, %v1082
      %v1084 = vpop.f32.mrf.mxu0
      %1085 = vmatprep.mubr.f32.mxu0 %v265
      %1086 = vmatmul.mubr.f32.gmra.mxu0 %v486
      %v1087 = vpop.f32.mrf.mxu0
      %v1088 = vadd.f32 %v863, %v1087
      %v1089 = vpop.f32.mrf.mxu0
      %1090 = vmatprep.mubr.f32.mxu0 %v266
      %1091 = vmatmul.mubr.f32.gmra.mxu0 %v488
      %v1092 = vpop.f32.mrf.mxu0
      %v1093 = vadd.f32 %v868, %v1092
      %v1094 = vpop.f32.mrf.mxu0
      %1095 = vmatprep.mubr.f32.mxu0 %v268
      %1096 = vmatmul.mubr.f32.gmra.mxu0 %v491
      %v1097 = vpop.f32.mrf.mxu0
      %v1098 = vadd.f32 %v873, %v1097
      %v1099 = vpop.f32.mrf.mxu0
      %1100 = vmatprep.mubr.f32.mxu0 %v269
      %1101 = vmatmul.mubr.f32.gmra.mxu0 %v493
      %v1102 = vpop.f32.mrf.mxu0
      %v1103 = vadd.f32 %v878, %v1102
      %v1104 = vpop.f32.mrf.mxu0
      %1105 = vmatprep.mubr.f32.mxu0 %v271
      %1106 = vmatmul.mubr.f32.gmra.mxu0 %v496
      %v1107 = vpop.f32.mrf.mxu0
      %v1108 = vadd.f32 %v883, %v1107
      %v1109 = vpop.f32.mrf.mxu0
      %1110 = vmatprep.mubr.f32.mxu0 %v272
      %1111 = vmatmul.mubr.f32.gmra.mxu0 %v498
      %v1112 = vpop.f32.mrf.mxu0
      %v1113 = vadd.f32 %v888, %v1112
      %v1114 = vpop.f32.mrf.mxu0
      %1115 = vmatprep.mubr.f32.mxu0 %v274
      %1116 = vmatmul.mubr.f32.gmra.mxu0 %v501
      %v1117 = vpop.f32.mrf.mxu0
      %v1118 = vadd.f32 %v893, %v1117
      %v1119 = vpop.f32.mrf.mxu0
      %1120 = vmatprep.mubr.f32.mxu0 %v275
      %1121 = vmatmul.mubr.f32.gmra.mxu0 %v503
      %v1122 = vpop.f32.mrf.mxu0
      %v1123 = vadd.f32 %v898, %v1122
      %v1124 = vpop.f32.mrf.mxu0
      %1125 = vmatprep.mubr.f32.mxu0 %v277
      %1126 = vmatmul.mubr.f32.gmra.mxu0 %v506
      %v1127 = vpop.f32.mrf.mxu0
      %v1128 = vadd.f32 %v903, %v1127
      %v1129 = vpop.f32.mrf.mxu0
      %1130 = vmatprep.mubr.f32.mxu0 %v278
      %1131 = vmatmul.mubr.f32.gmra.mxu0 %v508
      %v1132 = vpop.f32.mrf.mxu0
      %v1133 = vadd.f32 %v908, %v1132
      %v1134 = vpop.f32.mrf.mxu0
      %1135 = vmatprep.mubr.f32.mxu0 %v280
      %1136 = vmatmul.mubr.f32.gmra.mxu0 %v511
      %v1137 = vpop.f32.mrf.mxu0
      %v1138 = vadd.f32 %v913, %v1137
      %v1139 = vpop.f32.mrf.mxu0
      %1140 = vmatprep.mubr.f32.mxu0 %v281
      %1141 = vmatmul.mubr.f32.gmra.mxu0 %v513
      %v1142 = vpop.f32.mrf.mxu0
      %v1143 = vadd.f32 %v918, %v1142
      %v1144 = vpop.f32.mrf.mxu0
      %1145 = vmatprep.mubr.f32.mxu0 %v283
      %1146 = vmatmul.mubr.f32.gmra.mxu0 %v516
      %v1147 = vpop.f32.mrf.mxu0
      %v1148 = vadd.f32 %v923, %v1147
      %v1149 = vpop.f32.mrf.mxu0
      %1150 = vmatprep.mubr.f32.mxu0 %v284
      %1151 = vmatmul.mubr.f32.gmra.mxu0 %v518
      %v1152 = vpop.f32.mrf.mxu0
      %v1153 = vadd.f32 %v928, %v1152
      %v1154 = vpop.f32.mrf.mxu0
      %1155 = vmatprep.mubr.f32.mxu0 %v286
      %1156 = vmatmul.mubr.f32.gmra.mxu0 %v521
      %v1157 = vpop.f32.mrf.mxu0
      %v1158 = vadd.f32 %v933, %v1157
      %v1159 = vpop.f32.mrf.mxu0
      %1160 = vmatprep.mubr.f32.mxu0 %v287
      %1161 = vmatmul.mubr.f32.gmra.mxu0 %v523
      %v1162 = vpop.f32.mrf.mxu0
      %v1163 = vadd.f32 %v938, %v1162
      %v1164 = vpop.f32.mrf.mxu0
      %1165 = vmatprep.mubr.f32.mxu0 %v289
      %1166 = vmatmul.mubr.f32.gmra.mxu0 %v526
      %v1167 = vpop.f32.mrf.mxu0
      %v1168 = vadd.f32 %v943, %v1167
      %v1169 = vpop.f32.mrf.mxu0
      %1170 = vmatprep.mubr.f32.mxu0 %v290
      %1171 = vmatmul.mubr.f32.gmra.mxu0 %v528
      %v1172 = vpop.f32.mrf.mxu0
      %v1173 = vadd.f32 %v948, %v1172
      %v1174 = vpop.f32.mrf.mxu0
      %1175 = vmatprep.mubr.f32.mxu0 %v292
      %1176 = vmatmul.mubr.f32.gmra.mxu0 %v531
      %v1177 = vpop.f32.mrf.mxu0
      %v1178 = vadd.f32 %v953, %v1177
      %v1179 = vpop.f32.mrf.mxu0
      %1180 = vmatprep.mubr.f32.mxu0 %v293
      %1181 = vmatmul.mubr.f32.gmra.mxu0 %v533
      %v1182 = vpop.f32.mrf.mxu0
      %v1183 = vadd.f32 %v958, %v1182
      %v1184 = vpop.f32.mrf.mxu0
      %1185 = vmatprep.mubr.f32.mxu0 %v295
      %1186 = vmatmul.mubr.f32.gmra.mxu0 %v536
      %v1187 = vpop.f32.mrf.mxu0
      %v1188 = vadd.f32 %v963, %v1187
      %v1189 = vpop.f32.mrf.mxu0
      %1190 = vmatprep.mubr.f32.mxu0 %v296
      %1191 = vmatmul.mubr.f32.gmra.mxu0 %v538
      %v1192 = vpop.f32.mrf.mxu0
      %v1193 = vadd.f32 %v968, %v1192
      %v1194 = vpop.f32.mrf.mxu0
      %1195 = vmatprep.mubr.f32.mxu0 %v298
      %1196 = vmatmul.mubr.f32.gmra.mxu0 %v541
      %v1197 = vpop.f32.mrf.mxu0
      %v1198 = vadd.f32 %v973, %v1197
      %v1199 = vpop.f32.mrf.mxu0
      %1200 = vmatprep.mubr.f32.mxu0 %v299
      %1201 = vmatmul.mubr.f32.gmra.mxu0 %v543
      %v1202 = vpop.f32.mrf.mxu0
      %v1203 = vadd.f32 %v978, %v1202
      %v1204 = vpop.f32.mrf.mxu0
      %1205 = vmatprep.mubr.f32.mxu0 %v301
      %1206 = vmatmul.mubr.f32.gmra.mxu0 %v546
      %v1207 = vpop.f32.mrf.mxu0
      %v1208 = vadd.f32 %v983, %v1207
      %v1209 = vpop.f32.mrf.mxu0
      %1210 = vmatprep.mubr.f32.mxu0 %v302
      %1211 = vmatmul.mubr.f32.gmra.mxu0 %v548
      %v1212 = vpop.f32.mrf.mxu0
      %v1213 = vadd.f32 %v988, %v1212
      %v1214 = vpop.f32.mrf.mxu0
      %1215 = vdwg.mxu0
      %1216 = vmatprep.subr.mxu0 0.0
      %1217 = vmatpush1.msra.mxu0 %v694
      %1218 = vmatprep.subr.mxu0 0.0
      %1219 = vmatpush1.msra.mxu0 %v693
      %1220 = vmatprep.subr.mxu0 0.0
      %1221 = vmatpush1.msra.mxu0 %v692
      %1222 = vmatprep.subr.mxu0 0.0
      %1223 = vmatpush1.msra.mxu0 %v691
      %1224 = vmatprep.subr.mxu0 0.0
      %1225 = vmatpush1.msra.mxu0 %v690
      %1226 = vmatprep.subr.mxu0 0.0
      %1227 = vmatpush1.msra.mxu0 %v689
      %1228 = vmatprep.subr.mxu0 0.0
      %1229 = vmatpush1.msra.mxu0 %v688
      %1230 = vmatprep.subr.mxu0 0.0
      %1231 = vmatpush1.msra.mxu0 %v687
      %1232 = vmatprep.subr.mxu0 0.0
      %1233 = vmatpush1.msra.mxu0 %v686
      %1234 = vmatprep.subr.mxu0 0.0
      %1235 = vmatpush1.msra.mxu0 %v685
      %1236 = vmatprep.subr.mxu0 0.0
      %1237 = vmatpush1.msra.mxu0 %v684
      %1238 = vmatprep.subr.mxu0 0.0
      %1239 = vmatpush1.msra.mxu0 %v683
      %1240 = vmatprep.subr.mxu0 0.0
      %1241 = vmatpush1.msra.mxu0 %v682
      %1242 = vmatprep.subr.mxu0 0.0
      %1243 = vmatpush1.msra.mxu0 %v681
      %1244 = vmatprep.subr.mxu0 0.0
      %1245 = vmatpush1.msra.mxu0 %v680
      %1246 = vmatprep.subr.mxu0 0.0
      %1247 = vmatpush1.msra.mxu0 %v679
      %1248 = vmatprep.subr.mxu0 0.0
      %1249 = vmatpush2.msra.mxu0 %v710
      %1250 = vmatprep.subr.mxu0 0.0
      %1251 = vmatpush2.msra.mxu0 %v709
      %1252 = vmatprep.subr.mxu0 0.0
      %1253 = vmatpush2.msra.mxu0 %v708
      %1254 = vmatprep.subr.mxu0 0.0
      %1255 = vmatpush2.msra.mxu0 %v707
      %1256 = vmatprep.subr.mxu0 0.0
      %1257 = vmatpush2.msra.mxu0 %v706
      %1258 = vmatprep.subr.mxu0 0.0
      %1259 = vmatpush2.msra.mxu0 %v705
      %1260 = vmatprep.subr.mxu0 0.0
      %1261 = vmatpush2.msra.mxu0 %v704
      %1262 = vmatprep.subr.mxu0 0.0
      %1263 = vmatpush2.msra.mxu0 %v703
      %1264 = vmatprep.subr.mxu0 0.0
      %1265 = vmatpush2.msra.mxu0 %v702
      %1266 = vmatprep.subr.mxu0 0.0
      %1267 = vmatpush2.msra.mxu0 %v701
      %1268 = vmatprep.subr.mxu0 0.0
      %1269 = vmatpush2.msra.mxu0 %v700
      %1270 = vmatprep.subr.mxu0 0.0
      %1271 = vmatpush2.msra.mxu0 %v699
      %1272 = vmatprep.subr.mxu0 0.0
      %1273 = vmatpush2.msra.mxu0 %v698
      %1274 = vmatprep.subr.mxu0 0.0
      %1275 = vmatpush2.msra.mxu0 %v697
      %1276 = vmatprep.subr.mxu0 0.0
      %1277 = vmatpush2.msra.mxu0 %v696
      %1278 = vmatprep.subr.mxu0 0.0
      %1279 = vmatpush2.msra.mxu0 %v695
      %1280 = vmatprep.mubr.f32.mxu0 %v476
      %1281 = vmatmul.mubr.f32.gmra.mxu0 %v363
      %v1282 = vpop.f32.mrf.mxu0
      %v1283 = vadd.f32 %v1058, %v1282
      %v1284 = vpop.f32.mrf.mxu0
      %1285 = vmatprep.mubr.f32.mxu0 %v478
      %1286 = vmatmul.mubr.f32.gmra.mxu0 %v365
      %v1287 = vpop.f32.mrf.mxu0
      %v1288 = vadd.f32 %v1063, %v1287
      %v1289 = vpop.f32.mrf.mxu0
      %1290 = vmatprep.mubr.f32.mxu0 %v481
      %1291 = vmatmul.mubr.f32.gmra.mxu0 %v368
      %v1292 = vpop.f32.mrf.mxu0
      %v1293 = vadd.f32 %v1068, %v1292
      %v1294 = vpop.f32.mrf.mxu0
      %1295 = vmatprep.mubr.f32.mxu0 %v483
      %1296 = vmatmul.mubr.f32.gmra.mxu0 %v370
      %v1297 = vpop.f32.mrf.mxu0
      %v1298 = vadd.f32 %v1073, %v1297
      %v1299 = vpop.f32.mrf.mxu0
      %1300 = vmatprep.mubr.f32.mxu0 %v486
      %1301 = vmatmul.mubr.f32.gmra.mxu0 %v373
      %v1302 = vpop.f32.mrf.mxu0
      %v1303 = vadd.f32 %v1078, %v1302
      %v1304 = vpop.f32.mrf.mxu0
      %1305 = vmatprep.mubr.f32.mxu0 %v488
      %1306 = vmatmul.mubr.f32.gmra.mxu0 %v375
      %v1307 = vpop.f32.mrf.mxu0
      %v1308 = vadd.f32 %v1083, %v1307
      %v1309 = vpop.f32.mrf.mxu0
      %1310 = vmatprep.mubr.f32.mxu0 %v491
      %1311 = vmatmul.mubr.f32.gmra.mxu0 %v378
      %v1312 = vpop.f32.mrf.mxu0
      %v1313 = vadd.f32 %v1088, %v1312
      %v1314 = vpop.f32.mrf.mxu0
      %1315 = vmatprep.mubr.f32.mxu0 %v493
      %1316 = vmatmul.mubr.f32.gmra.mxu0 %v380
      %v1317 = vpop.f32.mrf.mxu0
      %v1318 = vadd.f32 %v1093, %v1317
      %v1319 = vpop.f32.mrf.mxu0
      %1320 = vmatprep.mubr.f32.mxu0 %v496
      %1321 = vmatmul.mubr.f32.gmra.mxu0 %v383
      %v1322 = vpop.f32.mrf.mxu0
      %v1323 = vadd.f32 %v1098, %v1322
      %v1324 = vpop.f32.mrf.mxu0
      %1325 = vmatprep.mubr.f32.mxu0 %v498
      %1326 = vmatmul.mubr.f32.gmra.mxu0 %v385
      %v1327 = vpop.f32.mrf.mxu0
      %v1328 = vadd.f32 %v1103, %v1327
      %v1329 = vpop.f32.mrf.mxu0
      %1330 = vmatprep.mubr.f32.mxu0 %v501
      %1331 = vmatmul.mubr.f32.gmra.mxu0 %v388
      %v1332 = vpop.f32.mrf.mxu0
      %v1333 = vadd.f32 %v1108, %v1332
      %v1334 = vpop.f32.mrf.mxu0
      %1335 = vmatprep.mubr.f32.mxu0 %v503
      %1336 = vmatmul.mubr.f32.gmra.mxu0 %v390
      %v1337 = vpop.f32.mrf.mxu0
      %v1338 = vadd.f32 %v1113, %v1337
      %v1339 = vpop.f32.mrf.mxu0
      %1340 = vmatprep.mubr.f32.mxu0 %v506
      %1341 = vmatmul.mubr.f32.gmra.mxu0 %v393
      %v1342 = vpop.f32.mrf.mxu0
      %v1343 = vadd.f32 %v1118, %v1342
      %v1344 = vpop.f32.mrf.mxu0
      %1345 = vmatprep.mubr.f32.mxu0 %v508
      %1346 = vmatmul.mubr.f32.gmra.mxu0 %v395
      %v1347 = vpop.f32.mrf.mxu0
      %v1348 = vadd.f32 %v1123, %v1347
      %v1349 = vpop.f32.mrf.mxu0
      %1350 = vmatprep.mubr.f32.mxu0 %v511
      %1351 = vmatmul.mubr.f32.gmra.mxu0 %v398
      %v1352 = vpop.f32.mrf.mxu0
      %v1353 = vadd.f32 %v1128, %v1352
      %v1354 = vpop.f32.mrf.mxu0
      %1355 = vmatprep.mubr.f32.mxu0 %v513
      %1356 = vmatmul.mubr.f32.gmra.mxu0 %v400
      %v1357 = vpop.f32.mrf.mxu0
      %v1358 = vadd.f32 %v1133, %v1357
      %v1359 = vpop.f32.mrf.mxu0
      %1360 = vmatprep.mubr.f32.mxu0 %v516
      %1361 = vmatmul.mubr.f32.gmra.mxu0 %v403
      %v1362 = vpop.f32.mrf.mxu0
      %v1363 = vadd.f32 %v1138, %v1362
      %v1364 = vpop.f32.mrf.mxu0
      %1365 = vmatprep.mubr.f32.mxu0 %v518
      %1366 = vmatmul.mubr.f32.gmra.mxu0 %v405
      %v1367 = vpop.f32.mrf.mxu0
      %v1368 = vadd.f32 %v1143, %v1367
      %v1369 = vpop.f32.mrf.mxu0
      %1370 = vmatprep.mubr.f32.mxu0 %v521
      %1371 = vmatmul.mubr.f32.gmra.mxu0 %v408
      %v1372 = vpop.f32.mrf.mxu0
      %v1373 = vadd.f32 %v1148, %v1372
      %v1374 = vpop.f32.mrf.mxu0
      %1375 = vmatprep.mubr.f32.mxu0 %v523
      %1376 = vmatmul.mubr.f32.gmra.mxu0 %v410
      %v1377 = vpop.f32.mrf.mxu0
      %v1378 = vadd.f32 %v1153, %v1377
      %v1379 = vpop.f32.mrf.mxu0
      %1380 = vmatprep.mubr.f32.mxu0 %v526
      %1381 = vmatmul.mubr.f32.gmra.mxu0 %v413
      %v1382 = vpop.f32.mrf.mxu0
      %v1383 = vadd.f32 %v1158, %v1382
      %v1384 = vpop.f32.mrf.mxu0
      %1385 = vmatprep.mubr.f32.mxu0 %v528
      %1386 = vmatmul.mubr.f32.gmra.mxu0 %v415
      %v1387 = vpop.f32.mrf.mxu0
      %v1388 = vadd.f32 %v1163, %v1387
      %v1389 = vpop.f32.mrf.mxu0
      %1390 = vmatprep.mubr.f32.mxu0 %v531
      %1391 = vmatmul.mubr.f32.gmra.mxu0 %v418
      %v1392 = vpop.f32.mrf.mxu0
      %v1393 = vadd.f32 %v1168, %v1392
      %v1394 = vpop.f32.mrf.mxu0
      %1395 = vmatprep.mubr.f32.mxu0 %v533
      %1396 = vmatmul.mubr.f32.gmra.mxu0 %v420
      %v1397 = vpop.f32.mrf.mxu0
      %v1398 = vadd.f32 %v1173, %v1397
      %v1399 = vpop.f32.mrf.mxu0
      %1400 = vmatprep.mubr.f32.mxu0 %v536
      %1401 = vmatmul.mubr.f32.gmra.mxu0 %v423
      %v1402 = vpop.f32.mrf.mxu0
      %v1403 = vadd.f32 %v1178, %v1402
      %v1404 = vpop.f32.mrf.mxu0
      %1405 = vmatprep.mubr.f32.mxu0 %v538
      %1406 = vmatmul.mubr.f32.gmra.mxu0 %v425
      %v1407 = vpop.f32.mrf.mxu0
      %v1408 = vadd.f32 %v1183, %v1407
      %v1409 = vpop.f32.mrf.mxu0
      %1410 = vmatprep.mubr.f32.mxu0 %v541
      %1411 = vmatmul.mubr.f32.gmra.mxu0 %v428
      %v1412 = vpop.f32.mrf.mxu0
      %v1413 = vadd.f32 %v1188, %v1412
      %v1414 = vpop.f32.mrf.mxu0
      %1415 = vmatprep.mubr.f32.mxu0 %v543
      %1416 = vmatmul.mubr.f32.gmra.mxu0 %v430
      %v1417 = vpop.f32.mrf.mxu0
      %v1418 = vadd.f32 %v1193, %v1417
      %v1419 = vpop.f32.mrf.mxu0
      %1420 = vmatprep.mubr.f32.mxu0 %v546
      %1421 = vmatmul.mubr.f32.gmra.mxu0 %v433
      %v1422 = vpop.f32.mrf.mxu0
      %v1423 = vadd.f32 %v1198, %v1422
      %v1424 = vpop.f32.mrf.mxu0
      %1425 = vmatprep.mubr.f32.mxu0 %v548
      %1426 = vmatmul.mubr.f32.gmra.mxu0 %v435
      %v1427 = vpop.f32.mrf.mxu0
      %v1428 = vadd.f32 %v1203, %v1427
      %v1429 = vpop.f32.mrf.mxu0
      %1430 = vmatprep.mubr.f32.mxu0 %v593
      %1431 = vmatmul.mubr.f32.gmra.mxu0 %v586
      %v1432 = vpop.f32.mrf.mxu0
      %v1433 = vadd.f32 %v1208, %v1432
      %v1434 = vpop.f32.mrf.mxu0
      %1435 = vmatprep.mubr.f32.mxu0 %v595
      %1436 = vmatmul.mubr.f32.gmra.mxu0 %v588
      %v1437 = vpop.f32.mrf.mxu0
      %v1438 = vadd.f32 %v1213, %v1437
      %v1439 = vpop.f32.mrf.mxu0
      %1440 = vdwg.mxu0
      %1441 = vmatprep.subr.mxu0 0.0
      %1442 = vmatpush1.msra.mxu0 %v726
      %1443 = vmatprep.subr.mxu0 0.0
      %1444 = vmatpush1.msra.mxu0 %v725
      %1445 = vmatprep.subr.mxu0 0.0
      %1446 = vmatpush1.msra.mxu0 %v724
      %1447 = vmatprep.subr.mxu0 0.0
      %1448 = vmatpush1.msra.mxu0 %v723
      %1449 = vmatprep.subr.mxu0 0.0
      %1450 = vmatpush1.msra.mxu0 %v722
      %1451 = vmatprep.subr.mxu0 0.0
      %1452 = vmatpush1.msra.mxu0 %v721
      %1453 = vmatprep.subr.mxu0 0.0
      %1454 = vmatpush1.msra.mxu0 %v720
      %1455 = vmatprep.subr.mxu0 0.0
      %1456 = vmatpush1.msra.mxu0 %v719
      %1457 = vmatprep.subr.mxu0 0.0
      %1458 = vmatpush1.msra.mxu0 %v718
      %1459 = vmatprep.subr.mxu0 0.0
      %1460 = vmatpush1.msra.mxu0 %v717
      %1461 = vmatprep.subr.mxu0 0.0
      %1462 = vmatpush1.msra.mxu0 %v716
      %1463 = vmatprep.subr.mxu0 0.0
      %1464 = vmatpush1.msra.mxu0 %v715
      %1465 = vmatprep.subr.mxu0 0.0
      %1466 = vmatpush1.msra.mxu0 %v714
      %1467 = vmatprep.subr.mxu0 0.0
      %1468 = vmatpush1.msra.mxu0 %v713
      %1469 = vmatprep.subr.mxu0 0.0
      %1470 = vmatpush1.msra.mxu0 %v712
      %1471 = vmatprep.subr.mxu0 0.0
      %1472 = vmatpush1.msra.mxu0 %v711
      %1473 = vmatprep.subr.mxu0 0.0
      %1474 = vmatpush2.msra.mxu0 %v742
      %1475 = vmatprep.subr.mxu0 0.0
      %1476 = vmatpush2.msra.mxu0 %v741
      %1477 = vmatprep.subr.mxu0 0.0
      %1478 = vmatpush2.msra.mxu0 %v740
      %1479 = vmatprep.subr.mxu0 0.0
      %1480 = vmatpush2.msra.mxu0 %v739
      %1481 = vmatprep.subr.mxu0 0.0
      %1482 = vmatpush2.msra.mxu0 %v738
      %1483 = vmatprep.subr.mxu0 0.0
      %1484 = vmatpush2.msra.mxu0 %v737
      %1485 = vmatprep.subr.mxu0 0.0
      %1486 = vmatpush2.msra.mxu0 %v736
      %1487 = vmatprep.subr.mxu0 0.0
      %1488 = vmatpush2.msra.mxu0 %v735
      %1489 = vmatprep.subr.mxu0 0.0
      %1490 = vmatpush2.msra.mxu0 %v734
      %1491 = vmatprep.subr.mxu0 0.0
      %1492 = vmatpush2.msra.mxu0 %v733
      %1493 = vmatprep.subr.mxu0 0.0
      %1494 = vmatpush2.msra.mxu0 %v732
      %1495 = vmatprep.subr.mxu0 0.0
      %1496 = vmatpush2.msra.mxu0 %v731
      %1497 = vmatprep.subr.mxu0 0.0
      %1498 = vmatpush2.msra.mxu0 %v730
      %1499 = vmatprep.subr.mxu0 0.0
      %1500 = vmatpush2.msra.mxu0 %v729
      %1501 = vmatprep.subr.mxu0 0.0
      %1502 = vmatpush2.msra.mxu0 %v728
      %1503 = vmatprep.subr.mxu0 0.0
      %1504 = vmatpush2.msra.mxu0 %v727
      %1505 = vmatprep.mubr.f32.mxu0 %v368
      %1506 = vmatmul.mubr.f32.gmra.mxu0 %v259
      %v1507 = vpop.f32.mrf.mxu0
      %v1508 = vadd.f32 %v1283, %v1507
      %v1509 = vpop.f32.mrf.mxu0
      %1510 = vmatprep.mubr.f32.mxu0 %v370
      %1511 = vmatmul.mubr.f32.gmra.mxu0 %v260
      %v1512 = vpop.f32.mrf.mxu0
      %v1513 = vadd.f32 %v1288, %v1512
      %v1514 = vpop.f32.mrf.mxu0
      %1515 = vmatprep.mubr.f32.mxu0 %v373
      %1516 = vmatmul.mubr.f32.gmra.mxu0 %v262
      %v1517 = vpop.f32.mrf.mxu0
      %v1518 = vadd.f32 %v1293, %v1517
      %v1519 = vpop.f32.mrf.mxu0
      %1520 = vmatprep.mubr.f32.mxu0 %v375
      %1521 = vmatmul.mubr.f32.gmra.mxu0 %v263
      %v1522 = vpop.f32.mrf.mxu0
      %v1523 = vadd.f32 %v1298, %v1522
      %v1524 = vpop.f32.mrf.mxu0
      %1525 = vmatprep.mubr.f32.mxu0 %v378
      %1526 = vmatmul.mubr.f32.gmra.mxu0 %v265
      %v1527 = vpop.f32.mrf.mxu0
      %v1528 = vadd.f32 %v1303, %v1527
      %v1529 = vpop.f32.mrf.mxu0
      %1530 = vmatprep.mubr.f32.mxu0 %v380
      %1531 = vmatmul.mubr.f32.gmra.mxu0 %v266
      %v1532 = vpop.f32.mrf.mxu0
      %v1533 = vadd.f32 %v1308, %v1532
      %v1534 = vpop.f32.mrf.mxu0
      %1535 = vmatprep.mubr.f32.mxu0 %v383
      %1536 = vmatmul.mubr.f32.gmra.mxu0 %v268
      %v1537 = vpop.f32.mrf.mxu0
      %v1538 = vadd.f32 %v1313, %v1537
      %v1539 = vpop.f32.mrf.mxu0
      %1540 = vmatprep.mubr.f32.mxu0 %v385
      %1541 = vmatmul.mubr.f32.gmra.mxu0 %v269
      %v1542 = vpop.f32.mrf.mxu0
      %v1543 = vadd.f32 %v1318, %v1542
      %v1544 = vpop.f32.mrf.mxu0
      %1545 = vmatprep.mubr.f32.mxu0 %v388
      %1546 = vmatmul.mubr.f32.gmra.mxu0 %v271
      %v1547 = vpop.f32.mrf.mxu0
      %v1548 = vadd.f32 %v1323, %v1547
      %v1549 = vpop.f32.mrf.mxu0
      %1550 = vmatprep.mubr.f32.mxu0 %v390
      %1551 = vmatmul.mubr.f32.gmra.mxu0 %v272
      %v1552 = vpop.f32.mrf.mxu0
      %v1553 = vadd.f32 %v1328, %v1552
      %v1554 = vpop.f32.mrf.mxu0
      %1555 = vmatprep.mubr.f32.mxu0 %v393
      %1556 = vmatmul.mubr.f32.gmra.mxu0 %v274
      %v1557 = vpop.f32.mrf.mxu0
      %v1558 = vadd.f32 %v1333, %v1557
      %v1559 = vpop.f32.mrf.mxu0
      %1560 = vmatprep.mubr.f32.mxu0 %v395
      %1561 = vmatmul.mubr.f32.gmra.mxu0 %v275
      %v1562 = vpop.f32.mrf.mxu0
      %v1563 = vadd.f32 %v1338, %v1562
      %v1564 = vpop.f32.mrf.mxu0
      %1565 = vmatprep.mubr.f32.mxu0 %v398
      %1566 = vmatmul.mubr.f32.gmra.mxu0 %v277
      %v1567 = vpop.f32.mrf.mxu0
      %v1568 = vadd.f32 %v1343, %v1567
      %v1569 = vpop.f32.mrf.mxu0
      %1570 = vmatprep.mubr.f32.mxu0 %v400
      %1571 = vmatmul.mubr.f32.gmra.mxu0 %v278
      %v1572 = vpop.f32.mrf.mxu0
      %v1573 = vadd.f32 %v1348, %v1572
      %v1574 = vpop.f32.mrf.mxu0
      %1575 = vmatprep.mubr.f32.mxu0 %v403
      %1576 = vmatmul.mubr.f32.gmra.mxu0 %v280
      %v1577 = vpop.f32.mrf.mxu0
      %v1578 = vadd.f32 %v1353, %v1577
      %v1579 = vpop.f32.mrf.mxu0
      %1580 = vmatprep.mubr.f32.mxu0 %v405
      %1581 = vmatmul.mubr.f32.gmra.mxu0 %v281
      %v1582 = vpop.f32.mrf.mxu0
      %v1583 = vadd.f32 %v1358, %v1582
      %v1584 = vpop.f32.mrf.mxu0
      %1585 = vmatprep.mubr.f32.mxu0 %v408
      %1586 = vmatmul.mubr.f32.gmra.mxu0 %v283
      %v1587 = vpop.f32.mrf.mxu0
      %v1588 = vadd.f32 %v1363, %v1587
      %v1589 = vpop.f32.mrf.mxu0
      %1590 = vmatprep.mubr.f32.mxu0 %v410
      %1591 = vmatmul.mubr.f32.gmra.mxu0 %v284
      %v1592 = vpop.f32.mrf.mxu0
      %v1593 = vadd.f32 %v1368, %v1592
      %v1594 = vpop.f32.mrf.mxu0
      %1595 = vmatprep.mubr.f32.mxu0 %v413
      %1596 = vmatmul.mubr.f32.gmra.mxu0 %v286
      %v1597 = vpop.f32.mrf.mxu0
      %v1598 = vadd.f32 %v1373, %v1597
      %v1599 = vpop.f32.mrf.mxu0
      %1600 = vmatprep.mubr.f32.mxu0 %v415
      %1601 = vmatmul.mubr.f32.gmra.mxu0 %v287
      %v1602 = vpop.f32.mrf.mxu0
      %v1603 = vadd.f32 %v1378, %v1602
      %v1604 = vpop.f32.mrf.mxu0
      %1605 = vmatprep.mubr.f32.mxu0 %v418
      %1606 = vmatmul.mubr.f32.gmra.mxu0 %v289
      %v1607 = vpop.f32.mrf.mxu0
      %v1608 = vadd.f32 %v1383, %v1607
      %v1609 = vpop.f32.mrf.mxu0
      %1610 = vmatprep.mubr.f32.mxu0 %v420
      %1611 = vmatmul.mubr.f32.gmra.mxu0 %v290
      %v1612 = vpop.f32.mrf.mxu0
      %v1613 = vadd.f32 %v1388, %v1612
      %v1614 = vpop.f32.mrf.mxu0
      %1615 = vmatprep.mubr.f32.mxu0 %v423
      %1616 = vmatmul.mubr.f32.gmra.mxu0 %v292
      %v1617 = vpop.f32.mrf.mxu0
      %v1618 = vadd.f32 %v1393, %v1617
      %v1619 = vpop.f32.mrf.mxu0
      %1620 = vmatprep.mubr.f32.mxu0 %v425
      %1621 = vmatmul.mubr.f32.gmra.mxu0 %v293
      %v1622 = vpop.f32.mrf.mxu0
      %v1623 = vadd.f32 %v1398, %v1622
      %v1624 = vpop.f32.mrf.mxu0
      %1625 = vmatprep.mubr.f32.mxu0 %v428
      %1626 = vmatmul.mubr.f32.gmra.mxu0 %v295
      %v1627 = vpop.f32.mrf.mxu0
      %v1628 = vadd.f32 %v1403, %v1627
      %v1629 = vpop.f32.mrf.mxu0
      %1630 = vmatprep.mubr.f32.mxu0 %v430
      %1631 = vmatmul.mubr.f32.gmra.mxu0 %v296
      %v1632 = vpop.f32.mrf.mxu0
      %v1633 = vadd.f32 %v1408, %v1632
      %v1634 = vpop.f32.mrf.mxu0
      %1635 = vmatprep.mubr.f32.mxu0 %v433
      %1636 = vmatmul.mubr.f32.gmra.mxu0 %v298
      %v1637 = vpop.f32.mrf.mxu0
      %v1638 = vadd.f32 %v1413, %v1637
      %v1639 = vpop.f32.mrf.mxu0
      %1640 = vmatprep.mubr.f32.mxu0 %v435
      %1641 = vmatmul.mubr.f32.gmra.mxu0 %v299
      %v1642 = vpop.f32.mrf.mxu0
      %v1643 = vadd.f32 %v1418, %v1642
      %v1644 = vpop.f32.mrf.mxu0
      %1645 = vmatprep.mubr.f32.mxu0 %v586
      %1646 = vmatmul.mubr.f32.gmra.mxu0 %v301
      %v1647 = vpop.f32.mrf.mxu0
      %v1648 = vadd.f32 %v1423, %v1647
      %v1649 = vpop.f32.mrf.mxu0
      %1650 = vmatprep.mubr.f32.mxu0 %v588
      %1651 = vmatmul.mubr.f32.gmra.mxu0 %v302
      %v1652 = vpop.f32.mrf.mxu0
      %v1653 = vadd.f32 %v1428, %v1652
      %v1654 = vpop.f32.mrf.mxu0
      %1655 = vmatprep.mubr.f32.mxu0 %v603
      %1656 = vmatmul.mubr.f32.gmra.mxu0 %v304
      %v1657 = vpop.f32.mrf.mxu0
      %v1658 = vadd.f32 %v1433, %v1657
      %v1659 = vpop.f32.mrf.mxu0
      %1660 = vmatprep.mubr.f32.mxu0 %v605
      %1661 = vmatmul.mubr.f32.gmra.mxu0 %v305
      %v1662 = vpop.f32.mrf.mxu0
      %v1663 = vadd.f32 %v1438, %v1662
      %v1664 = vpop.f32.mrf.mxu0
      %1665 = vdwg.mxu0
      %1666 = vmatprep.subr.mxu0 0.0
      %1667 = vmatpush1.msra.mxu0 %v758
      %1668 = vmatprep.subr.mxu0 0.0
      %1669 = vmatpush1.msra.mxu0 %v757
      %1670 = vmatprep.subr.mxu0 0.0
      %1671 = vmatpush1.msra.mxu0 %v756
      %1672 = vmatprep.subr.mxu0 0.0
      %1673 = vmatpush1.msra.mxu0 %v755
      %1674 = vmatprep.subr.mxu0 0.0
      %1675 = vmatpush1.msra.mxu0 %v754
      %1676 = vmatprep.subr.mxu0 0.0
      %1677 = vmatpush1.msra.mxu0 %v753
      %1678 = vmatprep.subr.mxu0 0.0
      %1679 = vmatpush1.msra.mxu0 %v752
      %1680 = vmatprep.subr.mxu0 0.0
      %1681 = vmatpush1.msra.mxu0 %v751
      %1682 = vmatprep.subr.mxu0 0.0
      %1683 = vmatpush1.msra.mxu0 %v750
      %1684 = vmatprep.subr.mxu0 0.0
      %1685 = vmatpush1.msra.mxu0 %v749
      %1686 = vmatprep.subr.mxu0 0.0
      %1687 = vmatpush1.msra.mxu0 %v748
      %1688 = vmatprep.subr.mxu0 0.0
      %1689 = vmatpush1.msra.mxu0 %v747
      %1690 = vmatprep.subr.mxu0 0.0
      %1691 = vmatpush1.msra.mxu0 %v746
      %1692 = vmatprep.subr.mxu0 0.0
      %1693 = vmatpush1.msra.mxu0 %v745
      %1694 = vmatprep.subr.mxu0 0.0
      %1695 = vmatpush1.msra.mxu0 %v744
      %1696 = vmatprep.subr.mxu0 0.0
      %1697 = vmatpush1.msra.mxu0 %v743
      %1698 = vmatprep.subr.mxu0 0.0
      %1699 = vmatpush2.msra.mxu0 0.0
      %1700 = vmatprep.subr.mxu0 0.0
      %1701 = vmatpush2.msra.mxu0 0.0
      %1702 = vmatprep.subr.mxu0 0.0
      %1703 = vmatpush2.msra.mxu0 0.0
      %1704 = vmatprep.subr.mxu0 0.0
      %1705 = vmatpush2.msra.mxu0 0.0
      %1706 = vmatprep.subr.mxu0 0.0
      %1707 = vmatpush2.msra.mxu0 0.0
      %1708 = vmatprep.subr.mxu0 0.0
      %1709 = vmatpush2.msra.mxu0 0.0
      %1710 = vmatprep.subr.mxu0 0.0
      %1711 = vmatpush2.msra.mxu0 0.0
      %1712 = vmatprep.subr.mxu0 0.0
      %1713 = vmatpush2.msra.mxu0 0.0
      %1714 = vmatprep.subr.mxu0 0.0
      %1715 = vmatpush2.msra.mxu0 0.0
      %1716 = vmatprep.subr.mxu0 0.0
      %1717 = vmatpush2.msra.mxu0 0.0
      %1718 = vmatprep.subr.mxu0 0.0
      %1719 = vmatpush2.msra.mxu0 0.0
      %1720 = vmatprep.subr.mxu0 0.0
      %1721 = vmatpush2.msra.mxu0 0.0
      %1722 = vmatprep.subr.mxu0 0.0
      %1723 = vmatpush2.msra.mxu0 0.0
      %1724 = vmatprep.subr.mxu0 0.0
      %1725 = vmatpush2.msra.mxu0 0.0
      %1726 = vmatprep.subr.mxu0 0.0
      %1727 = vmatpush2.msra.mxu0 0.0
      %1728 = vmatprep.subr.mxu0 0.0
      %1729 = vmatpush2.msra.mxu0 0.0
      %1730 = vmatprep.mubr.f32.mxu0 0.0
      %1731 = vmatmul.mubr.f32.gmra.mxu0 %v481
      %v1732 = vpop.f32.mrf.mxu0
      %v1733 = vadd.f32 %v1508, %v1732
      %v1734 = vpop.f32.mrf.mxu0
      %1735 = vmatprep.mubr.f32.mxu0 0.0
      %1736 = vmatmul.mubr.f32.gmra.mxu0 %v483
      %v1737 = vpop.f32.mrf.mxu0
      %v1738 = vadd.f32 %v1513, %v1737
      %v1739 = vpop.f32.mrf.mxu0
      %1740 = vmatprep.mubr.f32.mxu0 0.0
      %1741 = vmatmul.mubr.f32.gmra.mxu0 %v486
      %v1742 = vpop.f32.mrf.mxu0
      %v1743 = vadd.f32 %v1518, %v1742
      %v1744 = vpop.f32.mrf.mxu0
      %1745 = vmatprep.mubr.f32.mxu0 0.0
      %1746 = vmatmul.mubr.f32.gmra.mxu0 %v488
      %v1747 = vpop.f32.mrf.mxu0
      %v1748 = vadd.f32 %v1523, %v1747
      %v1749 = vpop.f32.mrf.mxu0
      %1750 = vmatprep.mubr.f32.mxu0 0.0
      %1751 = vmatmul.mubr.f32.gmra.mxu0 %v491
      %v1752 = vpop.f32.mrf.mxu0
      %v1753 = vadd.f32 %v1528, %v1752
      %v1754 = vpop.f32.mrf.mxu0
      %1755 = vmatprep.mubr.f32.mxu0 0.0
      %1756 = vmatmul.mubr.f32.gmra.mxu0 %v493
      %v1757 = vpop.f32.mrf.mxu0
      %v1758 = vadd.f32 %v1533, %v1757
      %v1759 = vpop.f32.mrf.mxu0
      %1760 = vmatprep.mubr.f32.mxu0 0.0
      %1761 = vmatmul.mubr.f32.gmra.mxu0 %v496
      %v1762 = vpop.f32.mrf.mxu0
      %v1763 = vadd.f32 %v1538, %v1762
      %v1764 = vpop.f32.mrf.mxu0
      %1765 = vmatprep.mubr.f32.mxu0 0.0
      %1766 = vmatmul.mubr.f32.gmra.mxu0 %v498
      %v1767 = vpop.f32.mrf.mxu0
      %v1768 = vadd.f32 %v1543, %v1767
      %v1769 = vpop.f32.mrf.mxu0
      %1770 = vmatprep.mubr.f32.mxu0 0.0
      %1771 = vmatmul.mubr.f32.gmra.mxu0 %v501
      %v1772 = vpop.f32.mrf.mxu0
      %v1773 = vadd.f32 %v1548, %v1772
      %v1774 = vpop.f32.mrf.mxu0
      %1775 = vmatprep.mubr.f32.mxu0 0.0
      %1776 = vmatmul.mubr.f32.gmra.mxu0 %v503
      %v1777 = vpop.f32.mrf.mxu0
      %v1778 = vadd.f32 %v1553, %v1777
      %v1779 = vpop.f32.mrf.mxu0
      %1780 = vmatprep.mubr.f32.mxu0 0.0
      %1781 = vmatmul.mubr.f32.gmra.mxu0 %v506
      %v1782 = vpop.f32.mrf.mxu0
      %v1783 = vadd.f32 %v1558, %v1782
      %v1784 = vpop.f32.mrf.mxu0
      %1785 = vmatprep.mubr.f32.mxu0 0.0
      %1786 = vmatmul.mubr.f32.gmra.mxu0 %v508
      %v1787 = vpop.f32.mrf.mxu0
      %v1788 = vadd.f32 %v1563, %v1787
      %v1789 = vpop.f32.mrf.mxu0
      %1790 = vmatprep.mubr.f32.mxu0 0.0
      %1791 = vmatmul.mubr.f32.gmra.mxu0 %v511
      %v1792 = vpop.f32.mrf.mxu0
      %v1793 = vadd.f32 %v1568, %v1792
      %v1794 = vpop.f32.mrf.mxu0
      %1795 = vmatprep.mubr.f32.mxu0 0.0
      %1796 = vmatmul.mubr.f32.gmra.mxu0 %v513
      %v1797 = vpop.f32.mrf.mxu0
      %v1798 = vadd.f32 %v1573, %v1797
      %v1799 = vpop.f32.mrf.mxu0
      %1800 = vmatprep.mubr.f32.mxu0 0.0
      %1801 = vmatmul.mubr.f32.gmra.mxu0 %v516
      %v1802 = vpop.f32.mrf.mxu0
      %v1803 = vadd.f32 %v1578, %v1802
      %v1804 = vpop.f32.mrf.mxu0
      %1805 = vmatprep.mubr.f32.mxu0 0.0
      %1806 = vmatmul.mubr.f32.gmra.mxu0 %v518
      %v1807 = vpop.f32.mrf.mxu0
      %v1808 = vadd.f32 %v1583, %v1807
      %v1809 = vpop.f32.mrf.mxu0
      %1810 = vmatprep.mubr.f32.mxu0 0.0
      %1811 = vmatmul.mubr.f32.gmra.mxu0 %v521
      %v1812 = vpop.f32.mrf.mxu0
      %v1813 = vadd.f32 %v1588, %v1812
      %v1814 = vpop.f32.mrf.mxu0
      %1815 = vmatprep.mubr.f32.mxu0 0.0
      %1816 = vmatmul.mubr.f32.gmra.mxu0 %v523
      %v1817 = vpop.f32.mrf.mxu0
      %v1818 = vadd.f32 %v1593, %v1817
      %v1819 = vpop.f32.mrf.mxu0
      %1820 = vmatprep.mubr.f32.mxu0 0.0
      %1821 = vmatmul.mubr.f32.gmra.mxu0 %v526
      %v1822 = vpop.f32.mrf.mxu0
      %v1823 = vadd.f32 %v1598, %v1822
      %v1824 = vpop.f32.mrf.mxu0
      %1825 = vmatprep.mubr.f32.mxu0 0.0
      %1826 = vmatmul.mubr.f32.gmra.mxu0 %v528
      %v1827 = vpop.f32.mrf.mxu0
      %v1828 = vadd.f32 %v1603, %v1827
      %v1829 = vpop.f32.mrf.mxu0
      %1830 = vmatprep.mubr.f32.mxu0 0.0
      %1831 = vmatmul.mubr.f32.gmra.mxu0 %v531
      %v1832 = vpop.f32.mrf.mxu0
      %v1833 = vadd.f32 %v1608, %v1832
      %v1834 = vpop.f32.mrf.mxu0
      %1835 = vmatprep.mubr.f32.mxu0 0.0
      %1836 = vmatmul.mubr.f32.gmra.mxu0 %v533
      %v1837 = vpop.f32.mrf.mxu0
      %v1838 = vadd.f32 %v1613, %v1837
      %v1839 = vpop.f32.mrf.mxu0
      %1840 = vmatprep.mubr.f32.mxu0 0.0
      %1841 = vmatmul.mubr.f32.gmra.mxu0 %v536
      %v1842 = vpop.f32.mrf.mxu0
      %v1843 = vadd.f32 %v1618, %v1842
      %v1844 = vpop.f32.mrf.mxu0
      %1845 = vmatprep.mubr.f32.mxu0 0.0
      %1846 = vmatmul.mubr.f32.gmra.mxu0 %v538
      %v1847 = vpop.f32.mrf.mxu0
      %v1848 = vadd.f32 %v1623, %v1847
      %v1849 = vpop.f32.mrf.mxu0
      %1850 = vmatprep.mubr.f32.mxu0 0.0
      %1851 = vmatmul.mubr.f32.gmra.mxu0 %v541
      %v1852 = vpop.f32.mrf.mxu0
      %v1853 = vadd.f32 %v1628, %v1852
      %v1854 = vpop.f32.mrf.mxu0
      %1855 = vmatprep.mubr.f32.mxu0 0.0
      %1856 = vmatmul.mubr.f32.gmra.mxu0 %v543
      %v1857 = vpop.f32.mrf.mxu0
      %v1858 = vadd.f32 %v1633, %v1857
      %v1859 = vpop.f32.mrf.mxu0
      %1860 = vmatprep.mubr.f32.mxu0 0.0
      %1861 = vmatmul.mubr.f32.gmra.mxu0 %v546
      %v1862 = vpop.f32.mrf.mxu0
      %v1863 = vadd.f32 %v1638, %v1862
      %v1864 = vpop.f32.mrf.mxu0
      %1865 = vmatprep.mubr.f32.mxu0 0.0
      %1866 = vmatmul.mubr.f32.gmra.mxu0 %v548
      %v1867 = vpop.f32.mrf.mxu0
      %v1868 = vadd.f32 %v1643, %v1867
      %v1869 = vpop.f32.mrf.mxu0
      %1870 = vmatprep.mubr.f32.mxu0 0.0
      %1871 = vmatmul.mubr.f32.gmra.mxu0 %v593
      %v1872 = vpop.f32.mrf.mxu0
      %v1873 = vadd.f32 %v1648, %v1872
      %v1874 = vpop.f32.mrf.mxu0
      %1875 = vmatprep.mubr.f32.mxu0 0.0
      %1876 = vmatmul.mubr.f32.gmra.mxu0 %v595
      %v1877 = vpop.f32.mrf.mxu0
      %v1878 = vadd.f32 %v1653, %v1877
      %v1879 = vpop.f32.mrf.mxu0
      %1880 = vmatprep.mubr.f32.mxu0 0.0
      %1881 = vmatmul.mubr.f32.gmra.mxu0 %v610
      %v1882 = vpop.f32.mrf.mxu0
      %v1883 = vadd.f32 %v1658, %v1882
      %v1884 = vpop.f32.mrf.mxu0
      %1885 = vmatprep.mubr.f32.mxu0 0.0
      %1886 = vmatmul.mubr.f32.gmra.mxu0 %v612
      %v1887 = vpop.f32.mrf.mxu0
      %v1888 = vadd.f32 %v1663, %v1887
      %v1889 = vpop.f32.mrf.mxu0
      %1890 = vdwg.mxu0
      %1891 = vst [vmem:[%s245] sm:$0xff] %v1733
      %1892 = vst [vmem:[%s245 + $0x8] sm:$0xff] %v1738
      %1893 = vst [vmem:[%s245 + $0x10] sm:$0xff] %v1743
      %1894 = vst [vmem:[%s245 + $0x18] sm:$0xff] %v1748
      %1895 = vst [vmem:[%s245 + $0x20] sm:$0xff] %v1753
      %1896 = vst [vmem:[%s245 + $0x28] sm:$0xff] %v1758
      %1897 = vst [vmem:[%s245 + $0x30] sm:$0xff] %v1763
      %1898 = vst [vmem:[%s245 + $0x38] sm:$0xff] %v1768
      %1899 = vst [vmem:[%s245 + $0x40] sm:$0xff] %v1773
      %1900 = vst [vmem:[%s245 + $0x48] sm:$0xff] %v1778
      %1901 = vst [vmem:[%s245 + $0x50] sm:$0xff] %v1783
      %1902 = vst [vmem:[%s245 + $0x58] sm:$0xff] %v1788
      %1903 = vst [vmem:[%s245 + $0x60] sm:$0xff] %v1793
      %1904 = vst [vmem:[%s245 + $0x68] sm:$0xff] %v1798
      %1905 = vst [vmem:[%s245 + $0x70] sm:$0xff] %v1803
      %1906 = vst [vmem:[%s245 + $0x78] sm:$0xff] %v1808
      %1907 = vst [vmem:[%s245 + $0x80] sm:$0xff] %v1813
      %1908 = vst [vmem:[%s245 + $0x88] sm:$0xff] %v1818
      %1909 = vst [vmem:[%s245 + $0x90] sm:$0xff] %v1823
      %1910 = vst [vmem:[%s245 + $0x98] sm:$0xff] %v1828
      %1911 = vst [vmem:[%s245 + $0xa0] sm:$0xff] %v1833
      %1912 = vst [vmem:[%s245 + $0xa8] sm:$0xff] %v1838
      %1913 = vst [vmem:[%s245 + $0xb0] sm:$0xff] %v1843
      %1914 = vst [vmem:[%s245 + $0xb8] sm:$0xff] %v1848
      %1915 = vst [vmem:[%s245 + $0xc0] sm:$0xff] %v1853
      %1916 = vst [vmem:[%s245 + $0xc8] sm:$0xff] %v1858
      %1917 = vst [vmem:[%s245 + $0xd0] sm:$0xff] %v1863
      %1918 = vst [vmem:[%s245 + $0xd8] sm:$0xff] %v1868
      %1919 = vst [vmem:[%s245 + $0xe0] sm:$0xff] %v1873
      %1920 = vst [vmem:[%s245 + $0xe8] sm:$0xff] %v1878
      %1921 = vst [vmem:[%s245 + $0xf0] sm:$0xff] %v1883
      %1922 = vst [vmem:[%s245 + $0xf8] sm:$0xff] %v1888
      %v1923 = vadd.f32 %v1733, %v1738
      %v1924 = vadd.f32 %v1923, %v1743
      %v1925 = vadd.f32 %v1924, %v1748
      %v1926 = vadd.f32 %v1925, %v1753
      %v1927 = vadd.f32 %v1926, %v1758
      %v1928 = vadd.f32 %v1927, %v1763
      %v1929 = vadd.f32 %v1928, %v1768
      %v1930 = vadd.f32 %v1929, %v1773
      %v1931 = vadd.f32 %v1930, %v1778
      %v1932 = vadd.f32 %v1931, %v1783
      %v1933 = vadd.f32 %v1932, %v1788
      %v1934 = vadd.f32 %v1933, %v1793
      %v1935 = vadd.f32 %v1934, %v1798
      %v1936 = vadd.f32 %v1935, %v1803
      %v1937 = vadd.f32 %v1936, %v1808
      %v1938 = vadd.f32 %v1937, %v1813
      %v1939 = vadd.f32 %v1938, %v1818
      %v1940 = vadd.f32 %v1939, %v1823
      %v1941 = vadd.f32 %v1940, %v1828
      %v1942 = vadd.f32 %v1941, %v1833
      %v1943 = vadd.f32 %v1942, %v1838
      %v1944 = vadd.f32 %v1943, %v1843
      %v1945 = vadd.f32 %v1944, %v1848
      %v1946 = vadd.f32 %v1945, %v1853
      %v1947 = vadd.f32 %v1946, %v1858
      %v1948 = vadd.f32 %v1947, %v1863
      %v1949 = vadd.f32 %v1948, %v1868
      %v1950 = vadd.f32 %v1949, %v1873
      %v1951 = vadd.f32 %v1950, %v1878
      %v1952 = vadd.f32 %v1951, %v1883
      %v1953 = vadd.f32 %v1952, %v1888
      %v1954 = vrot.slane %v1953, 4
      %v1955 = vadd.f32 %v1953, %v1954
      %v1956 = vrot.slane %v1955, 2
      %v1957 = vadd.f32 %v1955, %v1956
      %v1958 = vrot.slane %v1957, 1
      %v1959 = vadd.f32 %v1957, %v1958
      %v1960 = vmul.f32 %v1733, %v1733
      %v1961 = vmul.f32 %v1738, %v1738
      %v1962 = vmul.f32 %v1743, %v1743
      %v1963 = vmul.f32 %v1748, %v1748
      %v1964 = vmul.f32 %v1753, %v1753
      %v1965 = vmul.f32 %v1758, %v1758
      %v1966 = vmul.f32 %v1763, %v1763
      %v1967 = vmul.f32 %v1768, %v1768
      %v1968 = vmul.f32 %v1773, %v1773
      %v1969 = vmul.f32 %v1778, %v1778
      %v1970 = vmul.f32 %v1783, %v1783
      %v1971 = vmul.f32 %v1788, %v1788
      %v1972 = vmul.f32 %v1793, %v1793
      %v1973 = vmul.f32 %v1798, %v1798
      %v1974 = vmul.f32 %v1803, %v1803
      %v1975 = vmul.f32 %v1808, %v1808
      %v1976 = vmul.f32 %v1813, %v1813
      %v1977 = vmul.f32 %v1818, %v1818
      %v1978 = vmul.f32 %v1823, %v1823
      %v1979 = vmul.f32 %v1828, %v1828
      %v1980 = vmul.f32 %v1833, %v1833
      %v1981 = vmul.f32 %v1838, %v1838
      %v1982 = vmul.f32 %v1843, %v1843
      %v1983 = vmul.f32 %v1848, %v1848
      %v1984 = vmul.f32 %v1853, %v1853
      %v1985 = vmul.f32 %v1858, %v1858
      %v1986 = vmul.f32 %v1863, %v1863
      %v1987 = vmul.f32 %v1868, %v1868
      %v1988 = vmul.f32 %v1873, %v1873
      %v1989 = vmul.f32 %v1878, %v1878
      %v1990 = vmul.f32 %v1883, %v1883
      %v1991 = vmul.f32 %v1888, %v1888
      %v1992 = vadd.f32 %v1960, %v1961
      %v1993 = vadd.f32 %v1992, %v1962
      %v1994 = vadd.f32 %v1993, %v1963
      %v1995 = vadd.f32 %v1994, %v1964
      %v1996 = vadd.f32 %v1995, %v1965
      %v1997 = vadd.f32 %v1996, %v1966
      %v1998 = vadd.f32 %v1997, %v1967
      %v1999 = vadd.f32 %v1998, %v1968
      %v2000 = vadd.f32 %v1999, %v1969
      %v2001 = vadd.f32 %v2000, %v1970
      %v2002 = vadd.f32 %v2001, %v1971
      %v2003 = vadd.f32 %v2002, %v1972
      %v2004 = vadd.f32 %v2003, %v1973
      %v2005 = vadd.f32 %v2004, %v1974
      %v2006 = vadd.f32 %v2005, %v1975
      %v2007 = vadd.f32 %v2006, %v1976
      %v2008 = vadd.f32 %v2007, %v1977
      %v2009 = vadd.f32 %v2008, %v1978
      %v2010 = vadd.f32 %v2009, %v1979
      %v2011 = vadd.f32 %v2010, %v1980
      %v2012 = vadd.f32 %v2011, %v1981
      %v2013 = vadd.f32 %v2012, %v1982
      %v2014 = vadd.f32 %v2013, %v1983
      %v2015 = vadd.f32 %v2014, %v1984
      %v2016 = vadd.f32 %v2015, %v1985
      %v2017 = vadd.f32 %v2016, %v1986
      %v2018 = vadd.f32 %v2017, %v1987
      %v2019 = vadd.f32 %v2018, %v1988
      %v2020 = vadd.f32 %v2019, %v1989
      %v2021 = vadd.f32 %v2020, %v1990
      %v2022 = vadd.f32 %v2021, %v1991
      %v2023 = vrot.slane %v2022, 4
      %v2024 = vadd.f32 %v2022, %v2023
      %v2025 = vrot.slane %v2024, 2
      %v2026 = vadd.f32 %v2024, %v2025
      %v2027 = vrot.slane %v2026, 1
      %v2028 = vadd.f32 %v2026, %v2027
      %vm2029 = vcmask 1040384
      %v2030 = vsel %vm2029, %v1959, %v2028
      %2031 = vst [vmem:[%s252] sm:$0x3] %v2030
      %p2032 = scmp.lt.s32.totalorder %s20, 1
      %s2033 = scalar_select %p2032, %s20, 1
      %p2034 = scmp.lt.s32.totalorder %s21, 0
      %s2035 = scalar_select %p2034, %s21, 0
      %s2036 = smul.addr %s2035, 32
      %s2037 = smul.addr %s2033, 32
      %s2038 = sadd.s32 %s2036, %s2037
      %s2039 = smul.addr %s2038, 8
      %s2040 = scalar_lea.vmem %s3, %s2039
      %p2041 = scmp.lt.s32.totalorder %s20, 1
      %s2042 = scalar_select %p2041, %s20, 1
      %p2043 = scmp.lt.s32.totalorder %s21, 0
      %s2044 = scalar_select %p2043, %s21, 0
      %s2045 = sadd.s32 %s2044, %s2042
      %s2046 = smul.addr %s2045, 2
      %s2047 = scalar_lea.vmem %s4, %s2046
      // Predicated region
      $region33: #{double_conv.6} parent=31 // pred_check
        %p2048 = pneg %p118
      $region34: #{double_conv.6} parent=31 // pred_check_branch
        %2050 = sbr.rel (%p2048) target = $region36
      $region35: #{double_conv.6} parent=31 // pred_region
        _
      $region36: #{double_conv.6} parent=31 // pred_fallthru
        _
      // Predicated region
      $region37: #{double_conv.6} parent=31 // pred_check
        %p2051 = pneg %p146
      $region38: #{double_conv.6} parent=31 // pred_check_branch
        %2053 = sbr.rel (%p2051) target = $region40
      $region39: #{double_conv.6} parent=31 // pred_region
        _
      $region40: #{double_conv.6} parent=31 // pred_fallthru
        _
    $region32: #{double_conv.6} parent=5 // pred_fallthru
      _
    %p2054 = scmp.le.s32.totalorder 2, %s11
    // Predicated region
    $region41: #{double_conv.6} parent=5 // pred_check
      %p2055 = pneg %p2054
    $region42: #{double_conv.6} parent=5 // pred_check_branch
      %2057 = sbr.rel (%p2055) target = $region44
    $region43: #{double_conv.6} parent=5 // pred_region
      %s2058 = ssub.s32 %s11, 2
      // Predicated region
      $region45: #{double_conv.6} parent=43 // pred_check
        %p2059 = pneg %p124
      $region46: #{double_conv.6} parent=43 // pred_check_branch
        %2061 = sbr.rel (%p2059) target = $region48
      $region47: #{double_conv.6} parent=43 // pred_region
        %p2062 = scmp.lt.s32.totalorder %s22, 1
        %s2063 = scalar_select %p2062, %s22, 1
        %p2064 = scmp.lt.s32.totalorder %s23, 0
        %s2065 = scalar_select %p2064, %s23, 0
        %s2066 = smul.addr %s2065, 32
        %s2067 = smul.addr %s2063, 32
        %s2068 = sadd.s32 %s2066, %s2067
        %s2069 = smul.addr %s2068, 8
        %s2070 = scalar_lea.vmem %s3, %s2069
      $region48: #{double_conv.6} parent=43 // pred_fallthru
        _
      // Predicated region
      $region49: #{double_conv.6} parent=43 // pred_check
        %p2071 = pneg %p152
      $region50: #{double_conv.6} parent=43 // pred_check_branch
        %2073 = sbr.rel (%p2071) target = $region52
      $region51: #{double_conv.6} parent=43 // pred_region
        %p2074 = scmp.lt.s32.totalorder %s22, 1
        %s2075 = scalar_select %p2074, %s22, 1
        %p2076 = scmp.lt.s32.totalorder %s23, 0
        %s2077 = scalar_select %p2076, %s23, 0
        %s2078 = sadd.s32 %s2077, %s2075
        %s2079 = smul.addr %s2078, 2
        %s2080 = scalar_lea.vmem %s4, %s2079
      $region52: #{double_conv.6} parent=43 // pred_fallthru
        _
    $region44: #{double_conv.6} parent=5 // pred_fallthru
      _
  $region6: #{double_conv.6} parent=0 // loop_footer
    %s15 = sadd.s32 1, %s11
  $region7: #{double_conv.6} parent=0 // loop_footer_branch
    %10 = sbr.rel target = $region3
  $region8: #{double_conv.6} parent=0 // loop_exit
    _

</llo_original>
